<compile_context>
chip_gen: v5e
topology: v5e:2x2
jax: 0.10.0
libtpu: 0.0.40
codegen_flags: <defaults>
</compile_context>

<pallas_src>
import math

import jax
import jax.numpy as jnp
from jax import lax
from jax.experimental import pallas as pl
from jax.experimental.pallas import tpu as pltpu

# ---------------------------------------------------------------------------
# Model hyper-parameters (small shapes consistent with the module's forward)
# ---------------------------------------------------------------------------
BATCH = 2
SEQ = 8
D_MODEL = 32
N_HEADS = 4
D_FF = 64
N_LAYERS = 2                      # N EncoderLayers and N EncoderReductionLayers
LN_EPS = 1e-5

D_HEAD = D_MODEL // N_HEADS       # 8   (encoder-layer attention d_k = d_v)
D_RED = 2 * D_MODEL               # 64  (reduction-layer attention width)
DK_RED = D_RED // N_HEADS         # 16
DV_RED = D_MODEL // N_HEADS       # 8

LANES = 5 * D_MODEL               # 160 = lane width of the packed weight slabs
ENC_ROWS = 160                    # packed weight rows per EncoderLayer
RED_ROWS = 192                    # packed weight rows per EncoderReductionLayer
VEC_ROWS = 8                      # packed bias / LayerNorm rows per layer

assert SEQ % (2 ** N_LAYERS) == 0


# ---------------------------------------------------------------------------
# Kernel
# ---------------------------------------------------------------------------
def encoder_kernel(x_ref, masks_ref, wmat_ref, vec_ref, y_ref, qkv_buf):
    f32 = jnp.float32

    def vrow(r, width):                       # one packed bias / LN vector row
        return vec_ref[r:r + 1, :width]

    def layernorm(h, g, b):
        # Custom LayerNorm of the module: (x - mean) / (unbiased_std + eps).
        mean = jnp.mean(h, axis=-1, keepdims=True)
        diff = h - mean
        var = jnp.sum(diff * diff, axis=-1, keepdims=True) / (h.shape[-1] - 1)
        std = jnp.sqrt(var)
        return g * (diff / (std + LN_EPS)) + b

    def attention(mask_bk, seq, k_off, v_off, dk, dv):
        # Reads the fused QKV activation from the VMEM scratch (qkv_buf);
        # returns (BATCH*seq, N_HEADS*dv) context, heads concatenated on lanes.
        scale = 1.0 / math.sqrt(dk)
        ctx_rows = []
        for b in range(BATCH):                         # static unroll (B = 2)
            r0 = b * seq
            keep = mask_bk[b:b + 1, :seq] > 0.0        # (1, seq) key mask
            heads = []
            for h in range(N_HEADS):                   # static unroll (H = 4)
                q = qkv_buf[r0:r0 + seq, h * dk:(h + 1) * dk]
                k = qkv_buf[r0:r0 + seq, k_off + h * dk:k_off + (h + 1) * dk]
                v = qkv_buf[r0:r0 + seq, v_off + h * dv:v_off + (h + 1) * dv]
                # scores = q @ k^T (contraction via dimension numbers, no
                # materialized transpose).
                s = lax.dot_general(q, k, (((1,), (1,)), ((), ())),
                                    preferred_element_type=f32) * scale
                s = jnp.where(keep, s, -1e9)           # masked_fill semantics
                s = s - jnp.max(s, axis=-1, keepdims=True)
                p = jnp.exp(s)
                p = p / jnp.sum(p, axis=-1, keepdims=True)   # exact softmax
                heads.append(jnp.dot(p, v, preferred_element_type=f32))
            ctx_rows.append(jnp.concatenate(heads, axis=1))  # (seq, H*dv)
        return jnp.concatenate(ctx_rows, axis=0)             # (B*seq, H*dv)

    x = x_ref[...]                                    # (BATCH*SEQ, D_MODEL)
    seq = SEQ

    # ---- N identical EncoderLayers (all use the level-0 key mask) ----------
    mask0 = masks_ref[0]                              # (BATCH, SEQ) 1=keep 0=drop
    for l in range(N_LAYERS):
        wb = l * ENC_ROWS
        vb = l * VEC_ROWS
        wqkv = wmat_ref[wb:wb + 32, :3 * D_MODEL]     # (32, 96)  Q|K|V
        wo = wmat_ref[wb + 32:wb + 64, :D_MODEL]      # (32, 32)
        w1 = wmat_ref[wb + 64:wb + 96, :D_FF]         # (32, 64)
        w2 = wmat_ref[wb + 96:wb + 160, :D_MODEL]     # (64, 32)

        # fused QKV projection: one lane-dense (tokens, D) @ (D, 3D) matmul
        qkv = jnp.dot(x, wqkv, preferred_element_type=f32) + vrow(vb, 3 * D_MODEL)
        qkv_buf[0:BATCH * seq, 0:3 * D_MODEL] = qkv

        ctx = attention(mask0, seq, D_MODEL, 2 * D_MODEL, D_HEAD, D_HEAD)
        a = jnp.dot(ctx, wo, preferred_element_type=f32) + vrow(vb + 1, D_MODEL)

        t = layernorm(x + a, vrow(vb + 2, D_MODEL), vrow(vb + 3, D_MODEL))
        h = jnp.maximum(
            jnp.dot(t, w1, preferred_element_type=f32) + vrow(vb + 4, D_FF), 0.0)
        z = jnp.dot(h, w2, preferred_element_type=f32) + vrow(vb + 5, D_MODEL)
        x = layernorm(t + z, vrow(vb + 6, D_MODEL), vrow(vb + 7, D_MODEL))

    # ---- N EncoderReductionLayers -------------------------------------------
    for l in range(N_LAYERS):
        seq = seq // 2
        tokens = BATCH * seq
        mask_l = masks_ref[l + 1]                     # keys valid in lanes [0:seq]

        # x.view(B, seq, 2*D): merge consecutive token-row pairs onto lanes
        # (static per-row slices + concatenates; pairs never cross a batch).
        pairs = [
            jnp.concatenate([x[2 * i:2 * i + 1, :], x[2 * i + 1:2 * i + 2, :]],
                            axis=1)
            for i in range(tokens)
        ]
        x2 = jnp.concatenate(pairs, axis=0)           # (tokens, 2*D)

        wb = N_LAYERS * ENC_ROWS + l * RED_ROWS
        vb = (N_LAYERS + l) * VEC_ROWS
        wqkv = wmat_ref[wb:wb + 64, :LANES]           # (64, 160)  Q|K|V
        wo = wmat_ref[wb + 64:wb + 96, :D_MODEL]      # (32, 32)
        w1 = wmat_ref[wb + 96:wb + 128, :D_FF]        # (32, 64)
        w2 = wmat_ref[wb + 128:wb + 192, :D_MODEL]    # (64, 32)

        qkv = jnp.dot(x2, wqkv, preferred_element_type=f32) + vrow(vb, LANES)
        qkv_buf[0:tokens, 0:LANES] = qkv

        ctx = attention(mask_l, seq, D_RED, 2 * D_RED, DK_RED, DV_RED)
        a = jnp.dot(ctx, wo, preferred_element_type=f32) + vrow(vb + 1, D_MODEL)

        # NOTE: the reduction layer has NO residual on norm1 (matches module).
        t = layernorm(a, vrow(vb + 2, D_MODEL), vrow(vb + 3, D_MODEL))
        h = jnp.maximum(
            jnp.dot(t, w1, preferred_element_type=f32) + vrow(vb + 4, D_FF), 0.0)
        z = jnp.dot(h, w2, preferred_element_type=f32) + vrow(vb + 5, D_MODEL)
        x = layernorm(t + z, vrow(vb + 6, D_MODEL), vrow(vb + 7, D_MODEL))

    # ---- final LayerNorm -----------------------------------------------------
    fb = 2 * N_LAYERS * VEC_ROWS
    y_ref[...] = layernorm(x, vrow(fb, D_MODEL), vrow(fb + 1, D_MODEL)
                           ).astype(y_ref.dtype)


# ---------------------------------------------------------------------------
# Wrapper: packing (free layout plumbing) + pallas_call
# ---------------------------------------------------------------------------
def encoder_forward(x, mask, params):
    B, S, D = x.shape
    assert (B, S, D) == (BATCH, SEQ, D_MODEL)
    assert mask.shape == (B, 1, S)

    # Key masks for every level: level 0 for the EncoderLayers, level l >= 1
    # is mask[:, :, ::2**l] for the l-th reduction layer.  Packed into one ref.
    m01 = (mask[:, 0, :] != 0).astype(jnp.float32)
    levels = []
    for l in range(N_LAYERS + 1):
        m = m01[:, ::2 ** l]
        levels.append(jnp.pad(m, ((0, 0), (0, S - m.shape[1])),
                              constant_values=1.0))
    masks = jnp.stack(levels, axis=0)                 # (N_LAYERS+1, B, S)

    def padw(w):                                      # pad matrix to LANES lanes
        return jnp.pad(w, ((0, 0), (0, LANES - w.shape[1])))

    def padv(v):                                      # one (1, LANES) vector row
        v = v.reshape(1, -1)
        return jnp.pad(v, ((0, 0), (0, LANES - v.shape[1])))

    wblocks, vrows = [], []
    for p in params["enc"] + params["red"]:
        wqkv = jnp.concatenate([p["wq"], p["wk"], p["wv"]], axis=1)
        wblocks += [padw(wqkv), padw(p["wo"]), padw(p["w1"]), padw(p["w2"])]
        bqkv = jnp.concatenate([p["bq"], p["bk"], p["bv"]])
        vrows += [padv(bqkv), padv(p["bo"]), padv(p["g1"]), padv(p["beta1"]),
                  padv(p["b1"]), padv(p["b2"]), padv(p["g2"]), padv(p["beta2"])]
    vrows += [padv(params["gf"]), padv(params["bf"])]
    wmat = jnp.concatenate(wblocks, axis=0)           # (704, 160)
    vecs = jnp.concatenate(vrows, axis=0)             # (34, 160)

    vmem = pl.BlockSpec(memory_space=pltpu.MemorySpace.VMEM)
    s_out = S >> N_LAYERS
    y = pl.pallas_call(
        encoder_kernel,
        out_shape=jax.ShapeDtypeStruct((B * s_out, D), jnp.float32),
        in_specs=[vmem] * 4,
        out_specs=vmem,
        scratch_shapes=[pltpu.VMEM((BATCH * SEQ, LANES), jnp.float32)],
    )(x.reshape(B * S, D).astype(jnp.float32), masks, wmat, vecs)
    return y.reshape(B, s_out, D)


# ---------------------------------------------------------------------------
# Pure-JAX reference (exact PyTorch-module semantics, eval mode)
# ---------------------------------------------------------------------------
def encoder_reference(x, mask, params):
    def layernorm(h, g, b):
        mean = h.mean(-1, keepdims=True)
        var = ((h - mean) ** 2).sum(-1, keepdims=True) / (h.shape[-1] - 1)
        std = jnp.sqrt(var)
        return g * ((h - mean) / (std + LN_EPS)) + b

    def mha(h, mask3, p, d_k, d_v):
        B, S, _ = h.shape
        q = (h @ p["wq"] + p["bq"]).reshape(B, S, N_HEADS, d_k).transpose(0, 2, 1, 3)
        k = (h @ p["wk"] + p["bk"]).reshape(B, S, N_HEADS, d_k).transpose(0, 2, 1, 3)
        v = (h @ p["wv"] + p["bv"]).reshape(B, S, N_HEADS, d_v).transpose(0, 2, 1, 3)
        s = jnp.einsum("bhsd,bhtd->bhst", q, k) / math.sqrt(d_k)
        s = jnp.where(mask3[:, None, :, :] == 0, -1e9, s)
        attn = jax.nn.softmax(s, axis=-1)
        heads = jnp.einsum("bhst,bhtd->bhsd", attn, v)
        heads = heads.transpose(0, 2, 1, 3).reshape(B, S, N_HEADS * d_v)
        return heads @ p["wo"] + p["bo"]

    def ff(t, p):
        return jnp.maximum(t @ p["w1"] + p["b1"], 0.0) @ p["w2"] + p["b2"]

    for p in params["enc"]:
        a = mha(x, mask, p, D_HEAD, D_HEAD)
        t = layernorm(x + a, p["g1"], p["beta1"])
        x = layernorm(t + ff(t, p), p["g2"], p["beta2"])
    for p in params["red"]:
        mask = mask[:, :, ::2]
        x = x.reshape(x.shape[0], x.shape[1] // 2, -1)
        a = mha(x, mask, p, DK_RED, DV_RED)
        t = layernorm(a, p["g1"], p["beta1"])
        x = layernorm(t + ff(t, p), p["g2"], p["beta2"])
    return layernorm(x, params["gf"], params["bf"])


# ---------------------------------------------------------------------------
# Deterministic synthetic parameters (Linear stored as (in, out))
# ---------------------------------------------------------------------------
def init_params(key):
    counter = [0]

    def nk():
        counter[0] += 1
        return jax.random.fold_in(key, counter[0])

    def w(shape):
        return jax.random.normal(nk(), shape, dtype=jnp.float32) * 0.1

    def b(n):
        return jax.random.normal(nk(), (n,), dtype=jnp.float32) * 0.02

    def ln(n):
        return 1.0 + b(n), b(n)

    def enc_layer():
        g1, be1 = ln(D_MODEL)
        g2, be2 = ln(D_MODEL)
        return {
            "wq": w((D_MODEL, D_MODEL)), "bq": b(D_MODEL),
            "wk": w((D_MODEL, D_MODEL)), "bk": b(D_MODEL),
            "wv": w((D_MODEL, D_MODEL)), "bv": b(D_MODEL),
            "wo": w((D_MODEL, D_MODEL)), "bo": b(D_MODEL),
            "g1": g1, "beta1": be1,
            "w1": w((D_MODEL, D_FF)), "b1": b(D_FF),
            "w2": w((D_FF, D_MODEL)), "b2": b(D_MODEL),
            "g2": g2, "beta2": be2,
        }

    def red_layer():
        g1, be1 = ln(D_MODEL)
        g2, be2 = ln(D_MODEL)
        return {
            "wq": w((D_RED, D_RED)), "bq": b(D_RED),
            "wk": w((D_RED, D_RED)), "bk": b(D_RED),
            "wv": w((D_RED, D_MODEL)), "bv": b(D_MODEL),
            "wo": w((D_MODEL, D_MODEL)), "bo": b(D_MODEL),
            "g1": g1, "beta1": be1,
            "w1": w((D_MODEL, D_FF)), "b1": b(D_FF),
            "w2": w((D_FF, D_MODEL)), "b2": b(D_MODEL),
            "g2": g2, "beta2": be2,
        }

    return {
        "enc": [enc_layer() for _ in range(N_LAYERS)],
        "red": [red_layer() for _ in range(N_LAYERS)],
        "gf": jnp.ones((D_MODEL,), jnp.float32),
        "bf": jnp.zeros((D_MODEL,), jnp.float32),
    }


if __name__ == "__main__":
    key = jax.random.PRNGKey(0)
    k_x, k_p = jax.random.split(key)

    x = jax.random.normal(k_x, (BATCH, SEQ, D_MODEL), dtype=jnp.float32)
    # mask: [B, 1, S]. Batch 0: all keys valid; batch 1: last two keys masked.
    mask = jnp.ones((BATCH, 1, SEQ), dtype=jnp.float32)
    mask = mask.at[1, 0, SEQ - 2:].set(0.0)

    params = init_params(k_p)

    y = encoder_forward(x, mask, params)
    jax.block_until_ready(y)

    s_out = SEQ >> N_LAYERS
    assert y.shape == (BATCH, s_out, D_MODEL)
    assert bool(jnp.all(jnp.isfinite(y)))

    y_ref = encoder_reference(x, mask, params)
    max_err = float(jnp.max(jnp.abs(y - y_ref)))
    assert max_err < 1e-3, f"kernel/reference mismatch: max abs err = {max_err}"

    print("KERNEL_OK")
</pallas_src>

<mosaic_0001>
module attributes {stable_mosaic.version = 11 : i64} {
  func.func @encoder_kernel(%arg0: memref<16x32xf32, #tpu.memory_space<vmem>>, %arg1: memref<3x2x8xf32, #tpu.memory_space<vmem>>, %arg2: memref<704x160xf32, #tpu.memory_space<vmem>>, %arg3: memref<34x160xf32, #tpu.memory_space<vmem>>, %arg4: memref<4x32xf32, #tpu.memory_space<vmem>>, %arg5: memref<16x160xf32, #tpu.memory_space<vmem>>) attributes {dimension_semantics = [], scalar_prefetch = 0 : i64, scratch_operands = 1 : i64, tpu.core_type = #tpu.core_type<tc>} {
    %c0 = arith.constant 0 : index
    %c0_0 = arith.constant 0 : index
    %0 = vector.load %arg0[%c0, %c0_0] : memref<16x32xf32, #tpu.memory_space<vmem>>, vector<16x32xf32>
    %c0_1 = arith.constant 0 : index
    %c0_2 = arith.constant 0 : index
    %c0_3 = arith.constant 0 : index
    %1 = vector.load %arg1[%c0_1, %c0_2, %c0_3] : memref<3x2x8xf32, #tpu.memory_space<vmem>>, vector<1x2x8xf32>
    %2 = vector.shape_cast %1 : vector<1x2x8xf32> to vector<2x8xf32>
    %c0_4 = arith.constant 0 : index
    %c0_5 = arith.constant 0 : index
    %3 = vector.load %arg2[%c0_4, %c0_5] : memref<704x160xf32, #tpu.memory_space<vmem>>, vector<32x96xf32>
    %c32 = arith.constant 32 : index
    %c0_6 = arith.constant 0 : index
    %4 = vector.load %arg2[%c32, %c0_6] : memref<704x160xf32, #tpu.memory_space<vmem>>, vector<32x32xf32>
    %c64 = arith.constant 64 : index
    %c0_7 = arith.constant 0 : index
    %5 = vector.load %arg2[%c64, %c0_7] : memref<704x160xf32, #tpu.memory_space<vmem>>, vector<32x64xf32>
    %c96 = arith.constant 96 : index
    %c0_8 = arith.constant 0 : index
    %6 = vector.load %arg2[%c96, %c0_8] : memref<704x160xf32, #tpu.memory_space<vmem>>, vector<64x32xf32>
    %cst = arith.constant dense<0.000000e+00> : vector<16x96xf32>
    %7 = tpu.matmul %0, %3, %cst {dimension_numbers = #tpu.dot_dimension_numbers<[1], [0], [0], [1], [0, 0, 1, 1], [], []>} : vector<16x32xf32>, vector<32x96xf32>, vector<16x96xf32> -> vector<16x96xf32>
    %c0_9 = arith.constant 0 : index
    %c0_10 = arith.constant 0 : index
    %8 = vector.load %arg3[%c0_9, %c0_10] : memref<34x160xf32, #tpu.memory_space<vmem>>, vector<1x96xf32>
    %9 = vector.broadcast %8 : vector<1x96xf32> to vector<16x96xf32>
    %10 = arith.addf %7, %9 : vector<16x96xf32>
    %c0_11 = arith.constant 0 : index
    %c0_12 = arith.constant 0 : index
    %11 = vector.load %arg5[%c0_11, %c0_12] : memref<16x160xf32, #tpu.memory_space<vmem>>, vector<16x96xf32>
    tpu.vector_store %arg5[%c0_11, %c0_12], %10 {strides = array<i32>} : memref<16x160xf32, #tpu.memory_space<vmem>>, vector<16x96xf32>,
    %12 = vector.extract_strided_slice %2 {offsets = [0, 0], sizes = [1, 8], strides = [1, 1]} : vector<2x8xf32> to vector<1x8xf32>
    %cst_13 = arith.constant 0.000000e+00 : f32
    %13 = vector.broadcast %cst_13 : f32 to vector<1x8xf32>
    %14 = arith.cmpf ogt, %12, %13 : vector<1x8xf32>
    %c0_14 = arith.constant 0 : index
    %c0_15 = arith.constant 0 : index
    %15 = vector.load %arg5[%c0_14, %c0_15] : memref<16x160xf32, #tpu.memory_space<vmem>>, vector<8x8xf32>
    %c0_16 = arith.constant 0 : index
    %c32_17 = arith.constant 32 : index
    %16 = vector.load %arg5[%c0_16, %c32_17] : memref<16x160xf32, #tpu.memory_space<vmem>>, vector<8x8xf32>
    %c0_18 = arith.constant 0 : index
    %c64_19 = arith.constant 64 : index
    %17 = vector.load %arg5[%c0_18, %c64_19] : memref<16x160xf32, #tpu.memory_space<vmem>>, vector<8x8xf32>
    %cst_20 = arith.constant dense<0.000000e+00> : vector<8x8xf32>
    %18 = tpu.matmul %15, %16, %cst_20 {dimension_numbers = #tpu.dot_dimension_numbers<[1], [1], [0], [0], [0, 0, 1, 0], [], []>} : vector<8x8xf32>, vector<8x8xf32>, vector<8x8xf32> -> vector<8x8xf32>
    %cst_21 = arith.constant 0.353553385 : f32
    %19 = vector.broadcast %cst_21 : f32 to vector<8x8xf32>
    %20 = arith.mulf %18, %19 : vector<8x8xf32>
    %cst_22 = arith.constant -1.000000e+09 : f32
    %21 = vector.shape_cast %14 : vector<1x8xi1> to vector<1x8xi1>
    %22 = vector.broadcast %21 : vector<1x8xi1> to vector<8x8xi1>
    %23 = vector.broadcast %cst_22 : f32 to vector<8x8xf32>
    %24 = arith.select %22, %20, %23 : vector<8x8xi1>, vector<8x8xf32>
    %cst_23 = arith.constant dense<0xFF800000> : vector<8xf32>
    %25 = vector.multi_reduction <maximumf>, %24, %cst_23 [1] : vector<8x8xf32> to vector<8xf32>
    %26 = vector.shape_cast %25 : vector<8xf32> to vector<8x1xf32>
    %27 = vector.broadcast %26 : vector<8x1xf32> to vector<8x8xf32>
    %28 = arith.subf %24, %27 : vector<8x8xf32>
    %29 = math.exp %28 : vector<8x8xf32>
    %cst_24 = arith.constant dense<0.000000e+00> : vector<8xf32>
    %30 = vector.multi_reduction <add>, %29, %cst_24 [1] : vector<8x8xf32> to vector<8xf32>
    %31 = vector.shape_cast %30 : vector<8xf32> to vector<8x1xf32>
    %32 = vector.broadcast %31 : vector<8x1xf32> to vector<8x8xf32>
    %33 = arith.divf %29, %32 : vector<8x8xf32>
    %cst_25 = arith.constant dense<0.000000e+00> : vector<8x8xf32>
    %34 = tpu.matmul %33, %17, %cst_25 {dimension_numbers = #tpu.dot_dimension_numbers<[1], [0], [0], [1], [0, 0, 1, 1], [], []>} : vector<8x8xf32>, vector<8x8xf32>, vector<8x8xf32> -> vector<8x8xf32>
    %c0_26 = arith.constant 0 : index
    %c8 = arith.constant 8 : index
    %35 = vector.load %arg5[%c0_26, %c8] : memref<16x160xf32, #tpu.memory_space<vmem>>, vector<8x8xf32>
    %c0_27 = arith.constant 0 : index
    %c40 = arith.constant 40 : index
    %36 = vector.load %arg5[%c0_27, %c40] : memref<16x160xf32, #tpu.memory_space<vmem>>, vector<8x8xf32>
    %c0_28 = arith.constant 0 : index
    %c72 = arith.constant 72 : index
    %37 = vector.load %arg5[%c0_28, %c72] : memref<16x160xf32, #tpu.memory_space<vmem>>, vector<8x8xf32>
    %cst_29 = arith.constant dense<0.000000e+00> : vector<8x8xf32>
    %38 = tpu.matmul %35, %36, %cst_29 {dimension_numbers = #tpu.dot_dimension_numbers<[1], [1], [0], [0], [0, 0, 1, 0], [], []>} : vector<8x8xf32>, vector<8x8xf32>, vector<8x8xf32> -> vector<8x8xf32>
    %cst_30 = arith.constant 0.353553385 : f32
    %39 = vector.broadcast %cst_30 : f32 to vector<8x8xf32>
    %40 = arith.mulf %38, %39 : vector<8x8xf32>
    %cst_31 = arith.constant -1.000000e+09 : f32
    %41 = vector.shape_cast %14 : vector<1x8xi1> to vector<1x8xi1>
    %42 = vector.broadcast %41 : vector<1x8xi1> to vector<8x8xi1>
    %43 = vector.broadcast %cst_31 : f32 to vector<8x8xf32>
    %44 = arith.select %42, %40, %43 : vector<8x8xi1>, vector<8x8xf32>
    %cst_32 = arith.constant dense<0xFF800000> : vector<8xf32>
    %45 = vector.multi_reduction <maximumf>, %44, %cst_32 [1] : vector<8x8xf32> to vector<8xf32>
    %46 = vector.shape_cast %45 : vector<8xf32> to vector<8x1xf32>
    %47 = vector.broadcast %46 : vector<8x1xf32> to vector<8x8xf32>
    %48 = arith.subf %44, %47 : vector<8x8xf32>
    %49 = math.exp %48 : vector<8x8xf32>
    %cst_33 = arith.constant dense<0.000000e+00> : vector<8xf32>
    %50 = vector.multi_reduction <add>, %49, %cst_33 [1] : vector<8x8xf32> to vector<8xf32>
    %51 = vector.shape_cast %50 : vector<8xf32> to vector<8x1xf32>
    %52 = vector.broadcast %51 : vector<8x1xf32> to vector<8x8xf32>
    %53 = arith.divf %49, %52 : vector<8x8xf32>
    %cst_34 = arith.constant dense<0.000000e+00> : vector<8x8xf32>
    %54 = tpu.matmul %53, %37, %cst_34 {dimension_numbers = #tpu.dot_dimension_numbers<[1], [0], [0], [1], [0, 0, 1, 1], [], []>} : vector<8x8xf32>, vector<8x8xf32>, vector<8x8xf32> -> vector<8x8xf32>
    %c0_35 = arith.constant 0 : index
    %c16 = arith.constant 16 : index
    %55 = vector.load %arg5[%c0_35, %c16] : memref<16x160xf32, #tpu.memory_space<vmem>>, vector<8x8xf32>
    %c0_36 = arith.constant 0 : index
    %c48 = arith.constant 48 : index
    %56 = vector.load %arg5[%c0_36, %c48] : memref<16x160xf32, #tpu.memory_space<vmem>>, vector<8x8xf32>
    %c0_37 = arith.constant 0 : index
    %c80 = arith.constant 80 : index
    %57 = vector.load %arg5[%c0_37, %c80] : memref<16x160xf32, #tpu.memory_space<vmem>>, vector<8x8xf32>
    %cst_38 = arith.constant dense<0.000000e+00> : vector<8x8xf32>
    %58 = tpu.matmul %55, %56, %cst_38 {dimension_numbers = #tpu.dot_dimension_numbers<[1], [1], [0], [0], [0, 0, 1, 0], [], []>} : vector<8x8xf32>, vector<8x8xf32>, vector<8x8xf32> -> vector<8x8xf32>
    %cst_39 = arith.constant 0.353553385 : f32
    %59 = vector.broadcast %cst_39 : f32 to vector<8x8xf32>
    %60 = arith.mulf %58, %59 : vector<8x8xf32>
    %cst_40 = arith.constant -1.000000e+09 : f32
    %61 = vector.shape_cast %14 : vector<1x8xi1> to vector<1x8xi1>
    %62 = vector.broadcast %61 : vector<1x8xi1> to vector<8x8xi1>
    %63 = vector.broadcast %cst_40 : f32 to vector<8x8xf32>
    %64 = arith.select %62, %60, %63 : vector<8x8xi1>, vector<8x8xf32>
    %cst_41 = arith.constant dense<0xFF800000> : vector<8xf32>
    %65 = vector.multi_reduction <maximumf>, %64, %cst_41 [1] : vector<8x8xf32> to vector<8xf32>
    %66 = vector.shape_cast %65 : vector<8xf32> to vector<8x1xf32>
    %67 = vector.broadcast %66 : vector<8x1xf32> to vector<8x8xf32>
    %68 = arith.subf %64, %67 : vector<8x8xf32>
    %69 = math.exp %68 : vector<8x8xf32>
    %cst_42 = arith.constant dense<0.000000e+00> : vector<8xf32>
    %70 = vector.multi_reduction <add>, %69, %cst_42 [1] : vector<8x8xf32> to vector<8xf32>
    %71 = vector.shape_cast %70 : vector<8xf32> to vector<8x1xf32>
    %72 = vector.broadcast %71 : vector<8x1xf32> to vector<8x8xf32>
    %73 = arith.divf %69, %72 : vector<8x8xf32>
    %cst_43 = arith.constant dense<0.000000e+00> : vector<8x8xf32>
    %74 = tpu.matmul %73, %57, %cst_43 {dimension_numbers = #tpu.dot_dimension_numbers<[1], [0], [0], [1], [0, 0, 1, 1], [], []>} : vector<8x8xf32>, vector<8x8xf32>, vector<8x8xf32> -> vector<8x8xf32>
    %c0_44 = arith.constant 0 : index
    %c24 = arith.constant 24 : index
    %75 = vector.load %arg5[%c0_44, %c24] : memref<16x160xf32, #tpu.memory_space<vmem>>, vector<8x8xf32>
    %c0_45 = arith.constant 0 : index
    %c56 = arith.constant 56 : index
    %76 = vector.load %arg5[%c0_45, %c56] : memref<16x160xf32, #tpu.memory_space<vmem>>, vector<8x8xf32>
    %c0_46 = arith.constant 0 : index
    %c88 = arith.constant 88 : index
    %77 = vector.load %arg5[%c0_46, %c88] : memref<16x160xf32, #tpu.memory_space<vmem>>, vector<8x8xf32>
    %cst_47 = arith.constant dense<0.000000e+00> : vector<8x8xf32>
    %78 = tpu.matmul %75, %76, %cst_47 {dimension_numbers = #tpu.dot_dimension_numbers<[1], [1], [0], [0], [0, 0, 1, 0], [], []>} : vector<8x8xf32>, vector<8x8xf32>, vector<8x8xf32> -> vector<8x8xf32>
    %cst_48 = arith.constant 0.353553385 : f32
    %79 = vector.broadcast %cst_48 : f32 to vector<8x8xf32>
    %80 = arith.mulf %78, %79 : vector<8x8xf32>
    %cst_49 = arith.constant -1.000000e+09 : f32
    %81 = vector.shape_cast %14 : vector<1x8xi1> to vector<1x8xi1>
    %82 = vector.broadcast %81 : vector<1x8xi1> to vector<8x8xi1>
    %83 = vector.broadcast %cst_49 : f32 to vector<8x8xf32>
    %84 = arith.select %82, %80, %83 : vector<8x8xi1>, vector<8x8xf32>
    %cst_50 = arith.constant dense<0xFF800000> : vector<8xf32>
    %85 = vector.multi_reduction <maximumf>, %84, %cst_50 [1] : vector<8x8xf32> to vector<8xf32>
    %86 = vector.shape_cast %85 : vector<8xf32> to vector<8x1xf32>
    %87 = vector.broadcast %86 : vector<8x1xf32> to vector<8x8xf32>
    %88 = arith.subf %84, %87 : vector<8x8xf32>
    %89 = math.exp %88 : vector<8x8xf32>
    %cst_51 = arith.constant dense<0.000000e+00> : vector<8xf32>
    %90 = vector.multi_reduction <add>, %89, %cst_51 [1] : vector<8x8xf32> to vector<8xf32>
    %91 = vector.shape_cast %90 : vector<8xf32> to vector<8x1xf32>
    %92 = vector.broadcast %91 : vector<8x1xf32> to vector<8x8xf32>
    %93 = arith.divf %89, %92 : vector<8x8xf32>
    %cst_52 = arith.constant dense<0.000000e+00> : vector<8x8xf32>
    %94 = tpu.matmul %93, %77, %cst_52 {dimension_numbers = #tpu.dot_dimension_numbers<[1], [0], [0], [1], [0, 0, 1, 1], [], []>} : vector<8x8xf32>, vector<8x8xf32>, vector<8x8xf32> -> vector<8x8xf32>
    %95 = tpu.concatenate %34, %54, %74, %94 in 1 : vector<8x8xf32>, vector<8x8xf32>, vector<8x8xf32>, vector<8x8xf32> -> vector<8x32xf32>
    %96 = vector.extract_strided_slice %2 {offsets = [1, 0], sizes = [1, 8], strides = [1, 1]} : vector<2x8xf32> to vector<1x8xf32>
    %cst_53 = arith.constant 0.000000e+00 : f32
    %97 = vector.broadcast %cst_53 : f32 to vector<1x8xf32>
    %98 = arith.cmpf ogt, %96, %97 : vector<1x8xf32>
    %c8_54 = arith.constant 8 : index
    %c0_55 = arith.constant 0 : index
    %99 = vector.load %arg5[%c8_54, %c0_55] : memref<16x160xf32, #tpu.memory_space<vmem>>, vector<8x8xf32>
    %c8_56 = arith.constant 8 : index
    %c32_57 = arith.constant 32 : index
    %100 = vector.load %arg5[%c8_56, %c32_57] : memref<16x160xf32, #tpu.memory_space<vmem>>, vector<8x8xf32>
    %c8_58 = arith.constant 8 : index
    %c64_59 = arith.constant 64 : index
    %101 = vector.load %arg5[%c8_58, %c64_59] : memref<16x160xf32, #tpu.memory_space<vmem>>, vector<8x8xf32>
    %cst_60 = arith.constant dense<0.000000e+00> : vector<8x8xf32>
    %102 = tpu.matmul %99, %100, %cst_60 {dimension_numbers = #tpu.dot_dimension_numbers<[1], [1], [0], [0], [0, 0, 1, 0], [], []>} : vector<8x8xf32>, vector<8x8xf32>, vector<8x8xf32> -> vector<8x8xf32>
    %cst_61 = arith.constant 0.353553385 : f32
    %103 = vector.broadcast %cst_61 : f32 to vector<8x8xf32>
    %104 = arith.mulf %102, %103 : vector<8x8xf32>
    %cst_62 = arith.constant -1.000000e+09 : f32
    %105 = vector.shape_cast %98 : vector<1x8xi1> to vector<1x8xi1>
    %106 = vector.broadcast %105 : vector<1x8xi1> to vector<8x8xi1>
    %107 = vector.broadcast %cst_62 : f32 to vector<8x8xf32>
    %108 = arith.select %106, %104, %107 : vector<8x8xi1>, vector<8x8xf32>
    %cst_63 = arith.constant dense<0xFF800000> : vector<8xf32>
    %109 = vector.multi_reduction <maximumf>, %108, %cst_63 [1] : vector<8x8xf32> to vector<8xf32>
    %110 = vector.shape_cast %109 : vector<8xf32> to vector<8x1xf32>
    %111 = vector.broadcast %110 : vector<8x1xf32> to vector<8x8xf32>
    %112 = arith.subf %108, %111 : vector<8x8xf32>
    %113 = math.exp %112 : vector<8x8xf32>
    %cst_64 = arith.constant dense<0.000000e+00> : vector<8xf32>
    %114 = vector.multi_reduction <add>, %113, %cst_64 [1] : vector<8x8xf32> to vector<8xf32>
    %115 = vector.shape_cast %114 : vector<8xf32> to vector<8x1xf32>
    %116 = vector.broadcast %115 : vector<8x1xf32> to vector<8x8xf32>
    %117 = arith.divf %113, %116 : vector<8x8xf32>
    %cst_65 = arith.constant dense<0.000000e+00> : vector<8x8xf32>
    %118 = tpu.matmul %117, %101, %cst_65 {dimension_numbers = #tpu.dot_dimension_numbers<[1], [0], [0], [1], [0, 0, 1, 1], [], []>} : vector<8x8xf32>, vector<8x8xf32>, vector<8x8xf32> -> vector<8x8xf32>
    %c8_66 = arith.constant 8 : index
    %c8_67 = arith.constant 8 : index
    %119 = vector.load %arg5[%c8_66, %c8_67] : memref<16x160xf32, #tpu.memory_space<vmem>>, vector<8x8xf32>
    %c8_68 = arith.constant 8 : index
    %c40_69 = arith.constant 40 : index
    %120 = vector.load %arg5[%c8_68, %c40_69] : memref<16x160xf32, #tpu.memory_space<vmem>>, vector<8x8xf32>
    %c8_70 = arith.constant 8 : index
    %c72_71 = arith.constant 72 : index
    %121 = vector.load %arg5[%c8_70, %c72_71] : memref<16x160xf32, #tpu.memory_space<vmem>>, vector<8x8xf32>
    %cst_72 = arith.constant dense<0.000000e+00> : vector<8x8xf32>
    %122 = tpu.matmul %119, %120, %cst_72 {dimension_numbers = #tpu.dot_dimension_numbers<[1], [1], [0], [0], [0, 0, 1, 0], [], []>} : vector<8x8xf32>, vector<8x8xf32>, vector<8x8xf32> -> vector<8x8xf32>
    %cst_73 = arith.constant 0.353553385 : f32
    %123 = vector.broadcast %cst_73 : f32 to vector<8x8xf32>
    %124 = arith.mulf %122, %123 : vector<8x8xf32>
    %cst_74 = arith.constant -1.000000e+09 : f32
    %125 = vector.shape_cast %98 : vector<1x8xi1> to vector<1x8xi1>
    %126 = vector.broadcast %125 : vector<1x8xi1> to vector<8x8xi1>
    %127 = vector.broadcast %cst_74 : f32 to vector<8x8xf32>
    %128 = arith.select %126, %124, %127 : vector<8x8xi1>, vector<8x8xf32>
    %cst_75 = arith.constant dense<0xFF800000> : vector<8xf32>
    %129 = vector.multi_reduction <maximumf>, %128, %cst_75 [1] : vector<8x8xf32> to vector<8xf32>
    %130 = vector.shape_cast %129 : vector<8xf32> to vector<8x1xf32>
    %131 = vector.broadcast %130 : vector<8x1xf32> to vector<8x8xf32>
    %132 = arith.subf %128, %131 : vector<8x8xf32>
    %133 = math.exp %132 : vector<8x8xf32>
    %cst_76 = arith.constant dense<0.000000e+00> : vector<8xf32>
    %134 = vector.multi_reduction <add>, %133, %cst_76 [1] : vector<8x8xf32> to vector<8xf32>
    %135 = vector.shape_cast %134 : vector<8xf32> to vector<8x1xf32>
    %136 = vector.broadcast %135 : vector<8x1xf32> to vector<8x8xf32>
    %137 = arith.divf %133, %136 : vector<8x8xf32>
    %cst_77 = arith.constant dense<0.000000e+00> : vector<8x8xf32>
    %138 = tpu.matmul %137, %121, %cst_77 {dimension_numbers = #tpu.dot_dimension_numbers<[1], [0], [0], [1], [0, 0, 1, 1], [], []>} : vector<8x8xf32>, vector<8x8xf32>, vector<8x8xf32> -> vector<8x8xf32>
    %c8_78 = arith.constant 8 : index
    %c16_79 = arith.constant 16 : index
    %139 = vector.load %arg5[%c8_78, %c16_79] : memref<16x160xf32, #tpu.memory_space<vmem>>, vector<8x8xf32>
    %c8_80 = arith.constant 8 : index
    %c48_81 = arith.constant 48 : index
    %140 = vector.load %arg5[%c8_80, %c48_81] : memref<16x160xf32, #tpu.memory_space<vmem>>, vector<8x8xf32>
    %c8_82 = arith.constant 8 : index
    %c80_83 = arith.constant 80 : index
    %141 = vector.load %arg5[%c8_82, %c80_83] : memref<16x160xf32, #tpu.memory_space<vmem>>, vector<8x8xf32>
    %cst_84 = arith.constant dense<0.000000e+00> : vector<8x8xf32>
    %142 = tpu.matmul %139, %140, %cst_84 {dimension_numbers = #tpu.dot_dimension_numbers<[1], [1], [0], [0], [0, 0, 1, 0], [], []>} : vector<8x8xf32>, vector<8x8xf32>, vector<8x8xf32> -> vector<8x8xf32>
    %cst_85 = arith.constant 0.353553385 : f32
    %143 = vector.broadcast %cst_85 : f32 to vector<8x8xf32>
    %144 = arith.mulf %142, %143 : vector<8x8xf32>
    %cst_86 = arith.constant -1.000000e+09 : f32
    %145 = vector.shape_cast %98 : vector<1x8xi1> to vector<1x8xi1>
    %146 = vector.broadcast %145 : vector<1x8xi1> to vector<8x8xi1>
    %147 = vector.broadcast %cst_86 : f32 to vector<8x8xf32>
    %148 = arith.select %146, %144, %147 : vector<8x8xi1>, vector<8x8xf32>
    %cst_87 = arith.constant dense<0xFF800000> : vector<8xf32>
    %149 = vector.multi_reduction <maximumf>, %148, %cst_87 [1] : vector<8x8xf32> to vector<8xf32>
    %150 = vector.shape_cast %149 : vector<8xf32> to vector<8x1xf32>
    %151 = vector.broadcast %150 : vector<8x1xf32> to vector<8x8xf32>
    %152 = arith.subf %148, %151 : vector<8x8xf32>
    %153 = math.exp %152 : vector<8x8xf32>
    %cst_88 = arith.constant dense<0.000000e+00> : vector<8xf32>
    %154 = vector.multi_reduction <add>, %153, %cst_88 [1] : vector<8x8xf32> to vector<8xf32>
    %155 = vector.shape_cast %154 : vector<8xf32> to vector<8x1xf32>
    %156 = vector.broadcast %155 : vector<8x1xf32> to vector<8x8xf32>
    %157 = arith.divf %153, %156 : vector<8x8xf32>
    %cst_89 = arith.constant dense<0.000000e+00> : vector<8x8xf32>
    %158 = tpu.matmul %157, %141, %cst_89 {dimension_numbers = #tpu.dot_dimension_numbers<[1], [0], [0], [1], [0, 0, 1, 1], [], []>} : vector<8x8xf32>, vector<8x8xf32>, vector<8x8xf32> -> vector<8x8xf32>
    %c8_90 = arith.constant 8 : index
    %c24_91 = arith.constant 24 : index
    %159 = vector.load %arg5[%c8_90, %c24_91] : memref<16x160xf32, #tpu.memory_space<vmem>>, vector<8x8xf32>
    %c8_92 = arith.constant 8 : index
    %c56_93 = arith.constant 56 : index
    %160 = vector.load %arg5[%c8_92, %c56_93] : memref<16x160xf32, #tpu.memory_space<vmem>>, vector<8x8xf32>
    %c8_94 = arith.constant 8 : index
    %c88_95 = arith.constant 88 : index
    %161 = vector.load %arg5[%c8_94, %c88_95] : memref<16x160xf32, #tpu.memory_space<vmem>>, vector<8x8xf32>
    %cst_96 = arith.constant dense<0.000000e+00> : vector<8x8xf32>
    %162 = tpu.matmul %159, %160, %cst_96 {dimension_numbers = #tpu.dot_dimension_numbers<[1], [1], [0], [0], [0, 0, 1, 0], [], []>} : vector<8x8xf32>, vector<8x8xf32>, vector<8x8xf32> -> vector<8x8xf32>
    %cst_97 = arith.constant 0.353553385 : f32
    %163 = vector.broadcast %cst_97 : f32 to vector<8x8xf32>
    %164 = arith.mulf %162, %163 : vector<8x8xf32>
    %cst_98 = arith.constant -1.000000e+09 : f32
    %165 = vector.shape_cast %98 : vector<1x8xi1> to vector<1x8xi1>
    %166 = vector.broadcast %165 : vector<1x8xi1> to vector<8x8xi1>
    %167 = vector.broadcast %cst_98 : f32 to vector<8x8xf32>
    %168 = arith.select %166, %164, %167 : vector<8x8xi1>, vector<8x8xf32>
    %cst_99 = arith.constant dense<0xFF800000> : vector<8xf32>
    %169 = vector.multi_reduction <maximumf>, %168, %cst_99 [1] : vector<8x8xf32> to vector<8xf32>
    %170 = vector.shape_cast %169 : vector<8xf32> to vector<8x1xf32>
    %171 = vector.broadcast %170 : vector<8x1xf32> to vector<8x8xf32>
    %172 = arith.subf %168, %171 : vector<8x8xf32>
    %173 = math.exp %172 : vector<8x8xf32>
    %cst_100 = arith.constant dense<0.000000e+00> : vector<8xf32>
    %174 = vector.multi_reduction <add>, %173, %cst_100 [1] : vector<8x8xf32> to vector<8xf32>
    %175 = vector.shape_cast %174 : vector<8xf32> to vector<8x1xf32>
    %176 = vector.broadcast %175 : vector<8x1xf32> to vector<8x8xf32>
    %177 = arith.divf %173, %176 : vector<8x8xf32>
    %cst_101 = arith.constant dense<0.000000e+00> : vector<8x8xf32>
    %178 = tpu.matmul %177, %161, %cst_101 {dimension_numbers = #tpu.dot_dimension_numbers<[1], [0], [0], [1], [0, 0, 1, 1], [], []>} : vector<8x8xf32>, vector<8x8xf32>, vector<8x8xf32> -> vector<8x8xf32>
    %179 = tpu.concatenate %118, %138, %158, %178 in 1 : vector<8x8xf32>, vector<8x8xf32>, vector<8x8xf32>, vector<8x8xf32> -> vector<8x32xf32>
    %180 = tpu.concatenate %95, %179 in 0 : vector<8x32xf32>, vector<8x32xf32> -> vector<16x32xf32>
    %cst_102 = arith.constant dense<0.000000e+00> : vector<16x32xf32>
    %181 = tpu.matmul %180, %4, %cst_102 {dimension_numbers = #tpu.dot_dimension_numbers<[1], [0], [0], [1], [0, 0, 1, 1], [], []>} : vector<16x32xf32>, vector<32x32xf32>, vector<16x32xf32> -> vector<16x32xf32>
    %c1 = arith.constant 1 : index
    %c0_103 = arith.constant 0 : index
    %182 = vector.load %arg3[%c1, %c0_103] : memref<34x160xf32, #tpu.memory_space<vmem>>, vector<1x32xf32>
    %183 = vector.broadcast %182 : vector<1x32xf32> to vector<16x32xf32>
    %184 = arith.addf %181, %183 : vector<16x32xf32>
    %185 = arith.addf %0, %184 : vector<16x32xf32>
    %c2 = arith.constant 2 : index
    %c0_104 = arith.constant 0 : index
    %186 = vector.load %arg3[%c2, %c0_104] : memref<34x160xf32, #tpu.memory_space<vmem>>, vector<1x32xf32>
    %c3 = arith.constant 3 : index
    %c0_105 = arith.constant 0 : index
    %187 = vector.load %arg3[%c3, %c0_105] : memref<34x160xf32, #tpu.memory_space<vmem>>, vector<1x32xf32>
    %cst_106 = arith.constant dense<0.000000e+00> : vector<16xf32>
    %188 = vector.multi_reduction <add>, %185, %cst_106 [1] : vector<16x32xf32> to vector<16xf32>
    %189 = vector.shape_cast %188 : vector<16xf32> to vector<16x1xf32>
    %cst_107 = arith.constant 3.200000e+01 : f32
    %190 = vector.broadcast %cst_107 : f32 to vector<16x1xf32>
    %191 = arith.divf %189, %190 : vector<16x1xf32>
    %192 = vector.broadcast %191 : vector<16x1xf32> to vector<16x32xf32>
    %193 = arith.subf %185, %192 : vector<16x32xf32>
    %194 = arith.mulf %193, %193 : vector<16x32xf32>
    %cst_108 = arith.constant dense<0.000000e+00> : vector<16xf32>
    %195 = vector.multi_reduction <add>, %194, %cst_108 [1] : vector<16x32xf32> to vector<16xf32>
    %196 = vector.shape_cast %195 : vector<16xf32> to vector<16x1xf32>
    %cst_109 = arith.constant 3.100000e+01 : f32
    %197 = vector.broadcast %cst_109 : f32 to vector<16x1xf32>
    %198 = arith.divf %196, %197 : vector<16x1xf32>
    %199 = math.sqrt %198 : vector<16x1xf32>
    %cst_110 = arith.constant 9.99999974E-6 : f32
    %200 = vector.broadcast %cst_110 : f32 to vector<16x1xf32>
    %201 = arith.addf %199, %200 : vector<16x1xf32>
    %202 = vector.broadcast %201 : vector<16x1xf32> to vector<16x32xf32>
    %203 = arith.divf %193, %202 : vector<16x32xf32>
    %204 = vector.broadcast %186 : vector<1x32xf32> to vector<16x32xf32>
    %205 = arith.mulf %204, %203 : vector<16x32xf32>
    %206 = vector.broadcast %187 : vector<1x32xf32> to vector<16x32xf32>
    %207 = arith.addf %205, %206 : vector<16x32xf32>
    %cst_111 = arith.constant dense<0.000000e+00> : vector<16x64xf32>
    %208 = tpu.matmul %207, %5, %cst_111 {dimension_numbers = #tpu.dot_dimension_numbers<[1], [0], [0], [1], [0, 0, 1, 1], [], []>} : vector<16x32xf32>, vector<32x64xf32>, vector<16x64xf32> -> vector<16x64xf32>
    %c4 = arith.constant 4 : index
    %c0_112 = arith.constant 0 : index
    %209 = vector.load %arg3[%c4, %c0_112] : memref<34x160xf32, #tpu.memory_space<vmem>>, vector<1x64xf32>
    %210 = vector.broadcast %209 : vector<1x64xf32> to vector<16x64xf32>
    %211 = arith.addf %208, %210 : vector<16x64xf32>
    %cst_113 = arith.constant 0.000000e+00 : f32
    %212 = vector.broadcast %cst_113 : f32 to vector<16x64xf32>
    %213 = arith.maximumf %211, %212 : vector<16x64xf32>
    %cst_114 = arith.constant dense<0.000000e+00> : vector<16x32xf32>
    %214 = tpu.matmul %213, %6, %cst_114 {dimension_numbers = #tpu.dot_dimension_numbers<[1], [0], [0], [1], [0, 0, 1, 1], [], []>} : vector<16x64xf32>, vector<64x32xf32>, vector<16x32xf32> -> vector<16x32xf32>
    %c5 = arith.constant 5 : index
    %c0_115 = arith.constant 0 : index
    %215 = vector.load %arg3[%c5, %c0_115] : memref<34x160xf32, #tpu.memory_space<vmem>>, vector<1x32xf32>
    %216 = vector.broadcast %215 : vector<1x32xf32> to vector<16x32xf32>
    %217 = arith.addf %214, %216 : vector<16x32xf32>
    %218 = arith.addf %207, %217 : vector<16x32xf32>
    %c6 = arith.constant 6 : index
    %c0_116 = arith.constant 0 : index
    %219 = vector.load %arg3[%c6, %c0_116] : memref<34x160xf32, #tpu.memory_space<vmem>>, vector<1x32xf32>
    %c7 = arith.constant 7 : index
    %c0_117 = arith.constant 0 : index
    %220 = vector.load %arg3[%c7, %c0_117] : memref<34x160xf32, #tpu.memory_space<vmem>>, vector<1x32xf32>
    %cst_118 = arith.constant dense<0.000000e+00> : vector<16xf32>
    %221 = vector.multi_reduction <add>, %218, %cst_118 [1] : vector<16x32xf32> to vector<16xf32>
    %222 = vector.shape_cast %221 : vector<16xf32> to vector<16x1xf32>
    %cst_119 = arith.constant 3.200000e+01 : f32
    %223 = vector.broadcast %cst_119 : f32 to vector<16x1xf32>
    %224 = arith.divf %222, %223 : vector<16x1xf32>
    %225 = vector.broadcast %224 : vector<16x1xf32> to vector<16x32xf32>
    %226 = arith.subf %218, %225 : vector<16x32xf32>
    %227 = arith.mulf %226, %226 : vector<16x32xf32>
    %cst_120 = arith.constant dense<0.000000e+00> : vector<16xf32>
    %228 = vector.multi_reduction <add>, %227, %cst_120 [1] : vector<16x32xf32> to vector<16xf32>
    %229 = vector.shape_cast %228 : vector<16xf32> to vector<16x1xf32>
    %cst_121 = arith.constant 3.100000e+01 : f32
    %230 = vector.broadcast %cst_121 : f32 to vector<16x1xf32>
    %231 = arith.divf %229, %230 : vector<16x1xf32>
    %232 = math.sqrt %231 : vector<16x1xf32>
    %cst_122 = arith.constant 9.99999974E-6 : f32
    %233 = vector.broadcast %cst_122 : f32 to vector<16x1xf32>
    %234 = arith.addf %232, %233 : vector<16x1xf32>
    %235 = vector.broadcast %234 : vector<16x1xf32> to vector<16x32xf32>
    %236 = arith.divf %226, %235 : vector<16x32xf32>
    %237 = vector.broadcast %219 : vector<1x32xf32> to vector<16x32xf32>
    %238 = arith.mulf %237, %236 : vector<16x32xf32>
    %239 = vector.broadcast %220 : vector<1x32xf32> to vector<16x32xf32>
    %240 = arith.addf %238, %239 : vector<16x32xf32>
    %c160 = arith.constant 160 : index
    %c0_123 = arith.constant 0 : index
    %241 = vector.load %arg2[%c160, %c0_123] : memref<704x160xf32, #tpu.memory_space<vmem>>, vector<32x96xf32>
    %c192 = arith.constant 192 : index
    %c0_124 = arith.constant 0 : index
    %242 = vector.load %arg2[%c192, %c0_124] : memref<704x160xf32, #tpu.memory_space<vmem>>, vector<32x32xf32>
    %c224 = arith.constant 224 : index
    %c0_125 = arith.constant 0 : index
    %243 = vector.load %arg2[%c224, %c0_125] : memref<704x160xf32, #tpu.memory_space<vmem>>, vector<32x64xf32>
    %c256 = arith.constant 256 : index
    %c0_126 = arith.constant 0 : index
    %244 = vector.load %arg2[%c256, %c0_126] : memref<704x160xf32, #tpu.memory_space<vmem>>, vector<64x32xf32>
    %cst_127 = arith.constant dense<0.000000e+00> : vector<16x96xf32>
    %245 = tpu.matmul %240, %241, %cst_127 {dimension_numbers = #tpu.dot_dimension_numbers<[1], [0], [0], [1], [0, 0, 1, 1], [], []>} : vector<16x32xf32>, vector<32x96xf32>, vector<16x96xf32> -> vector<16x96xf32>
    %c8_128 = arith.constant 8 : index
    %c0_129 = arith.constant 0 : index
    %246 = vector.load %arg3[%c8_128, %c0_129] : memref<34x160xf32, #tpu.memory_space<vmem>>, vector<1x96xf32>
    %247 = vector.broadcast %246 : vector<1x96xf32> to vector<16x96xf32>
    %248 = arith.addf %245, %247 : vector<16x96xf32>
    %c0_130 = arith.constant 0 : index
    %c0_131 = arith.constant 0 : index
    %249 = vector.load %arg5[%c0_130, %c0_131] : memref<16x160xf32, #tpu.memory_space<vmem>>, vector<16x96xf32>
    tpu.vector_store %arg5[%c0_130, %c0_131], %248 {strides = array<i32>} : memref<16x160xf32, #tpu.memory_space<vmem>>, vector<16x96xf32>,
    %250 = vector.extract_strided_slice %2 {offsets = [0, 0], sizes = [1, 8], strides = [1, 1]} : vector<2x8xf32> to vector<1x8xf32>
    %cst_132 = arith.constant 0.000000e+00 : f32
    %251 = vector.broadcast %cst_132 : f32 to vector<1x8xf32>
    %252 = arith.cmpf ogt, %250, %251 : vector<1x8xf32>
    %c0_133 = arith.constant 0 : index
    %c0_134 = arith.constant 0 : index
    %253 = vector.load %arg5[%c0_133, %c0_134] : memref<16x160xf32, #tpu.memory_space<vmem>>, vector<8x8xf32>
    %c0_135 = arith.constant 0 : index
    %c32_136 = arith.constant 32 : index
    %254 = vector.load %arg5[%c0_135, %c32_136] : memref<16x160xf32, #tpu.memory_space<vmem>>, vector<8x8xf32>
    %c0_137 = arith.constant 0 : index
    %c64_138 = arith.constant 64 : index
    %255 = vector.load %arg5[%c0_137, %c64_138] : memref<16x160xf32, #tpu.memory_space<vmem>>, vector<8x8xf32>
    %cst_139 = arith.constant dense<0.000000e+00> : vector<8x8xf32>
    %256 = tpu.matmul %253, %254, %cst_139 {dimension_numbers = #tpu.dot_dimension_numbers<[1], [1], [0], [0], [0, 0, 1, 0], [], []>} : vector<8x8xf32>, vector<8x8xf32>, vector<8x8xf32> -> vector<8x8xf32>
    %cst_140 = arith.constant 0.353553385 : f32
    %257 = vector.broadcast %cst_140 : f32 to vector<8x8xf32>
    %258 = arith.mulf %256, %257 : vector<8x8xf32>
    %cst_141 = arith.constant -1.000000e+09 : f32
    %259 = vector.shape_cast %252 : vector<1x8xi1> to vector<1x8xi1>
    %260 = vector.broadcast %259 : vector<1x8xi1> to vector<8x8xi1>
    %261 = vector.broadcast %cst_141 : f32 to vector<8x8xf32>
    %262 = arith.select %260, %258, %261 : vector<8x8xi1>, vector<8x8xf32>
    %cst_142 = arith.constant dense<0xFF800000> : vector<8xf32>
    %263 = vector.multi_reduction <maximumf>, %262, %cst_142 [1] : vector<8x8xf32> to vector<8xf32>
    %264 = vector.shape_cast %263 : vector<8xf32> to vector<8x1xf32>
    %265 = vector.broadcast %264 : vector<8x1xf32> to vector<8x8xf32>
    %266 = arith.subf %262, %265 : vector<8x8xf32>
    %267 = math.exp %266 : vector<8x8xf32>
    %cst_143 = arith.constant dense<0.000000e+00> : vector<8xf32>
    %268 = vector.multi_reduction <add>, %267, %cst_143 [1] : vector<8x8xf32> to vector<8xf32>
    %269 = vector.shape_cast %268 : vector<8xf32> to vector<8x1xf32>
    %270 = vector.broadcast %269 : vector<8x1xf32> to vector<8x8xf32>
    %271 = arith.divf %267, %270 : vector<8x8xf32>
    %cst_144 = arith.constant dense<0.000000e+00> : vector<8x8xf32>
    %272 = tpu.matmul %271, %255, %cst_144 {dimension_numbers = #tpu.dot_dimension_numbers<[1], [0], [0], [1], [0, 0, 1, 1], [], []>} : vector<8x8xf32>, vector<8x8xf32>, vector<8x8xf32> -> vector<8x8xf32>
    %c0_145 = arith.constant 0 : index
    %c8_146 = arith.constant 8 : index
    %273 = vector.load %arg5[%c0_145, %c8_146] : memref<16x160xf32, #tpu.memory_space<vmem>>, vector<8x8xf32>
    %c0_147 = arith.constant 0 : index
    %c40_148 = arith.constant 40 : index
    %274 = vector.load %arg5[%c0_147, %c40_148] : memref<16x160xf32, #tpu.memory_space<vmem>>, vector<8x8xf32>
    %c0_149 = arith.constant 0 : index
    %c72_150 = arith.constant 72 : index
    %275 = vector.load %arg5[%c0_149, %c72_150] : memref<16x160xf32, #tpu.memory_space<vmem>>, vector<8x8xf32>
    %cst_151 = arith.constant dense<0.000000e+00> : vector<8x8xf32>
    %276 = tpu.matmul %273, %274, %cst_151 {dimension_numbers = #tpu.dot_dimension_numbers<[1], [1], [0], [0], [0, 0, 1, 0], [], []>} : vector<8x8xf32>, vector<8x8xf32>, vector<8x8xf32> -> vector<8x8xf32>
    %cst_152 = arith.constant 0.353553385 : f32
    %277 = vector.broadcast %cst_152 : f32 to vector<8x8xf32>
    %278 = arith.mulf %276, %277 : vector<8x8xf32>
    %cst_153 = arith.constant -1.000000e+09 : f32
    %279 = vector.shape_cast %252 : vector<1x8xi1> to vector<1x8xi1>
    %280 = vector.broadcast %279 : vector<1x8xi1> to vector<8x8xi1>
    %281 = vector.broadcast %cst_153 : f32 to vector<8x8xf32>
    %282 = arith.select %280, %278, %281 : vector<8x8xi1>, vector<8x8xf32>
    %cst_154 = arith.constant dense<0xFF800000> : vector<8xf32>
    %283 = vector.multi_reduction <maximumf>, %282, %cst_154 [1] : vector<8x8xf32> to vector<8xf32>
    %284 = vector.shape_cast %283 : vector<8xf32> to vector<8x1xf32>
    %285 = vector.broadcast %284 : vector<8x1xf32> to vector<8x8xf32>
    %286 = arith.subf %282, %285 : vector<8x8xf32>
    %287 = math.exp %286 : vector<8x8xf32>
    %cst_155 = arith.constant dense<0.000000e+00> : vector<8xf32>
    %288 = vector.multi_reduction <add>, %287, %cst_155 [1] : vector<8x8xf32> to vector<8xf32>
    %289 = vector.shape_cast %288 : vector<8xf32> to vector<8x1xf32>
    %290 = vector.broadcast %289 : vector<8x1xf32> to vector<8x8xf32>
    %291 = arith.divf %287, %290 : vector<8x8xf32>
    %cst_156 = arith.constant dense<0.000000e+00> : vector<8x8xf32>
    %292 = tpu.matmul %291, %275, %cst_156 {dimension_numbers = #tpu.dot_dimension_numbers<[1], [0], [0], [1], [0, 0, 1, 1], [], []>} : vector<8x8xf32>, vector<8x8xf32>, vector<8x8xf32> -> vector<8x8xf32>
    %c0_157 = arith.constant 0 : index
    %c16_158 = arith.constant 16 : index
    %293 = vector.load %arg5[%c0_157, %c16_158] : memref<16x160xf32, #tpu.memory_space<vmem>>, vector<8x8xf32>
    %c0_159 = arith.constant 0 : index
    %c48_160 = arith.constant 48 : index
    %294 = vector.load %arg5[%c0_159, %c48_160] : memref<16x160xf32, #tpu.memory_space<vmem>>, vector<8x8xf32>
    %c0_161 = arith.constant 0 : index
    %c80_162 = arith.constant 80 : index
    %295 = vector.load %arg5[%c0_161, %c80_162] : memref<16x160xf32, #tpu.memory_space<vmem>>, vector<8x8xf32>
    %cst_163 = arith.constant dense<0.000000e+00> : vector<8x8xf32>
    %296 = tpu.matmul %293, %294, %cst_163 {dimension_numbers = #tpu.dot_dimension_numbers<[1], [1], [0], [0], [0, 0, 1, 0], [], []>} : vector<8x8xf32>, vector<8x8xf32>, vector<8x8xf32> -> vector<8x8xf32>
    %cst_164 = arith.constant 0.353553385 : f32
    %297 = vector.broadcast %cst_164 : f32 to vector<8x8xf32>
    %298 = arith.mulf %296, %297 : vector<8x8xf32>
    %cst_165 = arith.constant -1.000000e+09 : f32
    %299 = vector.shape_cast %252 : vector<1x8xi1> to vector<1x8xi1>
    %300 = vector.broadcast %299 : vector<1x8xi1> to vector<8x8xi1>
    %301 = vector.broadcast %cst_165 : f32 to vector<8x8xf32>
    %302 = arith.select %300, %298, %301 : vector<8x8xi1>, vector<8x8xf32>
    %cst_166 = arith.constant dense<0xFF800000> : vector<8xf32>
    %303 = vector.multi_reduction <maximumf>, %302, %cst_166 [1] : vector<8x8xf32> to vector<8xf32>
    %304 = vector.shape_cast %303 : vector<8xf32> to vector<8x1xf32>
    %305 = vector.broadcast %304 : vector<8x1xf32> to vector<8x8xf32>
    %306 = arith.subf %302, %305 : vector<8x8xf32>
    %307 = math.exp %306 : vector<8x8xf32>
    %cst_167 = arith.constant dense<0.000000e+00> : vector<8xf32>
    %308 = vector.multi_reduction <add>, %307, %cst_167 [1] : vector<8x8xf32> to vector<8xf32>
    %309 = vector.shape_cast %308 : vector<8xf32> to vector<8x1xf32>
    %310 = vector.broadcast %309 : vector<8x1xf32> to vector<8x8xf32>
    %311 = arith.divf %307, %310 : vector<8x8xf32>
    %cst_168 = arith.constant dense<0.000000e+00> : vector<8x8xf32>
    %312 = tpu.matmul %311, %295, %cst_168 {dimension_numbers = #tpu.dot_dimension_numbers<[1], [0], [0], [1], [0, 0, 1, 1], [], []>} : vector<8x8xf32>, vector<8x8xf32>, vector<8x8xf32> -> vector<8x8xf32>
    %c0_169 = arith.constant 0 : index
    %c24_170 = arith.constant 24 : index
    %313 = vector.load %arg5[%c0_169, %c24_170] : memref<16x160xf32, #tpu.memory_space<vmem>>, vector<8x8xf32>
    %c0_171 = arith.constant 0 : index
    %c56_172 = arith.constant 56 : index
    %314 = vector.load %arg5[%c0_171, %c56_172] : memref<16x160xf32, #tpu.memory_space<vmem>>, vector<8x8xf32>
    %c0_173 = arith.constant 0 : index
    %c88_174 = arith.constant 88 : index
    %315 = vector.load %arg5[%c0_173, %c88_174] : memref<16x160xf32, #tpu.memory_space<vmem>>, vector<8x8xf32>
    %cst_175 = arith.constant dense<0.000000e+00> : vector<8x8xf32>
    %316 = tpu.matmul %313, %314, %cst_175 {dimension_numbers = #tpu.dot_dimension_numbers<[1], [1], [0], [0], [0, 0, 1, 0], [], []>} : vector<8x8xf32>, vector<8x8xf32>, vector<8x8xf32> -> vector<8x8xf32>
    %cst_176 = arith.constant 0.353553385 : f32
    %317 = vector.broadcast %cst_176 : f32 to vector<8x8xf32>
    %318 = arith.mulf %316, %317 : vector<8x8xf32>
    %cst_177 = arith.constant -1.000000e+09 : f32
    %319 = vector.shape_cast %252 : vector<1x8xi1> to vector<1x8xi1>
    %320 = vector.broadcast %319 : vector<1x8xi1> to vector<8x8xi1>
    %321 = vector.broadcast %cst_177 : f32 to vector<8x8xf32>
    %322 = arith.select %320, %318, %321 : vector<8x8xi1>, vector<8x8xf32>
    %cst_178 = arith.constant dense<0xFF800000> : vector<8xf32>
    %323 = vector.multi_reduction <maximumf>, %322, %cst_178 [1] : vector<8x8xf32> to vector<8xf32>
    %324 = vector.shape_cast %323 : vector<8xf32> to vector<8x1xf32>
    %325 = vector.broadcast %324 : vector<8x1xf32> to vector<8x8xf32>
    %326 = arith.subf %322, %325 : vector<8x8xf32>
    %327 = math.exp %326 : vector<8x8xf32>
    %cst_179 = arith.constant dense<0.000000e+00> : vector<8xf32>
    %328 = vector.multi_reduction <add>, %327, %cst_179 [1] : vector<8x8xf32> to vector<8xf32>
    %329 = vector.shape_cast %328 : vector<8xf32> to vector<8x1xf32>
    %330 = vector.broadcast %329 : vector<8x1xf32> to vector<8x8xf32>
    %331 = arith.divf %327, %330 : vector<8x8xf32>
    %cst_180 = arith.constant dense<0.000000e+00> : vector<8x8xf32>
    %332 = tpu.matmul %331, %315, %cst_180 {dimension_numbers = #tpu.dot_dimension_numbers<[1], [0], [0], [1], [0, 0, 1, 1], [], []>} : vector<8x8xf32>, vector<8x8xf32>, vector<8x8xf32> -> vector<8x8xf32>
    %333 = tpu.concatenate %272, %292, %312, %332 in 1 : vector<8x8xf32>, vector<8x8xf32>, vector<8x8xf32>, vector<8x8xf32> -> vector<8x32xf32>
    %334 = vector.extract_strided_slice %2 {offsets = [1, 0], sizes = [1, 8], strides = [1, 1]} : vector<2x8xf32> to vector<1x8xf32>
    %cst_181 = arith.constant 0.000000e+00 : f32
    %335 = vector.broadcast %cst_181 : f32 to vector<1x8xf32>
    %336 = arith.cmpf ogt, %334, %335 : vector<1x8xf32>
    %c8_182 = arith.constant 8 : index
    %c0_183 = arith.constant 0 : index
    %337 = vector.load %arg5[%c8_182, %c0_183] : memref<16x160xf32, #tpu.memory_space<vmem>>, vector<8x8xf32>
    %c8_184 = arith.constant 8 : index
    %c32_185 = arith.constant 32 : index
    %338 = vector.load %arg5[%c8_184, %c32_185] : memref<16x160xf32, #tpu.memory_space<vmem>>, vector<8x8xf32>
    %c8_186 = arith.constant 8 : index
    %c64_187 = arith.constant 64 : index
    %339 = vector.load %arg5[%c8_186, %c64_187] : memref<16x160xf32, #tpu.memory_space<vmem>>, vector<8x8xf32>
    %cst_188 = arith.constant dense<0.000000e+00> : vector<8x8xf32>
    %340 = tpu.matmul %337, %338, %cst_188 {dimension_numbers = #tpu.dot_dimension_numbers<[1], [1], [0], [0], [0, 0, 1, 0], [], []>} : vector<8x8xf32>, vector<8x8xf32>, vector<8x8xf32> -> vector<8x8xf32>
    %cst_189 = arith.constant 0.353553385 : f32
    %341 = vector.broadcast %cst_189 : f32 to vector<8x8xf32>
    %342 = arith.mulf %340, %341 : vector<8x8xf32>
    %cst_190 = arith.constant -1.000000e+09 : f32
    %343 = vector.shape_cast %336 : vector<1x8xi1> to vector<1x8xi1>
    %344 = vector.broadcast %343 : vector<1x8xi1> to vector<8x8xi1>
    %345 = vector.broadcast %cst_190 : f32 to vector<8x8xf32>
    %346 = arith.select %344, %342, %345 : vector<8x8xi1>, vector<8x8xf32>
    %cst_191 = arith.constant dense<0xFF800000> : vector<8xf32>
    %347 = vector.multi_reduction <maximumf>, %346, %cst_191 [1] : vector<8x8xf32> to vector<8xf32>
    %348 = vector.shape_cast %347 : vector<8xf32> to vector<8x1xf32>
    %349 = vector.broadcast %348 : vector<8x1xf32> to vector<8x8xf32>
    %350 = arith.subf %346, %349 : vector<8x8xf32>
    %351 = math.exp %350 : vector<8x8xf32>
    %cst_192 = arith.constant dense<0.000000e+00> : vector<8xf32>
    %352 = vector.multi_reduction <add>, %351, %cst_192 [1] : vector<8x8xf32> to vector<8xf32>
    %353 = vector.shape_cast %352 : vector<8xf32> to vector<8x1xf32>
    %354 = vector.broadcast %353 : vector<8x1xf32> to vector<8x8xf32>
    %355 = arith.divf %351, %354 : vector<8x8xf32>
    %cst_193 = arith.constant dense<0.000000e+00> : vector<8x8xf32>
    %356 = tpu.matmul %355, %339, %cst_193 {dimension_numbers = #tpu.dot_dimension_numbers<[1], [0], [0], [1], [0, 0, 1, 1], [], []>} : vector<8x8xf32>, vector<8x8xf32>, vector<8x8xf32> -> vector<8x8xf32>
    %c8_194 = arith.constant 8 : index
    %c8_195 = arith.constant 8 : index
    %357 = vector.load %arg5[%c8_194, %c8_195] : memref<16x160xf32, #tpu.memory_space<vmem>>, vector<8x8xf32>
    %c8_196 = arith.constant 8 : index
    %c40_197 = arith.constant 40 : index
    %358 = vector.load %arg5[%c8_196, %c40_197] : memref<16x160xf32, #tpu.memory_space<vmem>>, vector<8x8xf32>
    %c8_198 = arith.constant 8 : index
    %c72_199 = arith.constant 72 : index
    %359 = vector.load %arg5[%c8_198, %c72_199] : memref<16x160xf32, #tpu.memory_space<vmem>>, vector<8x8xf32>
    %cst_200 = arith.constant dense<0.000000e+00> : vector<8x8xf32>
    %360 = tpu.matmul %357, %358, %cst_200 {dimension_numbers = #tpu.dot_dimension_numbers<[1], [1], [0], [0], [0, 0, 1, 0], [], []>} : vector<8x8xf32>, vector<8x8xf32>, vector<8x8xf32> -> vector<8x8xf32>
    %cst_201 = arith.constant 0.353553385 : f32
    %361 = vector.broadcast %cst_201 : f32 to vector<8x8xf32>
    %362 = arith.mulf %360, %361 : vector<8x8xf32>
    %cst_202 = arith.constant -1.000000e+09 : f32
    %363 = vector.shape_cast %336 : vector<1x8xi1> to vector<1x8xi1>
    %364 = vector.broadcast %363 : vector<1x8xi1> to vector<8x8xi1>
    %365 = vector.broadcast %cst_202 : f32 to vector<8x8xf32>
    %366 = arith.select %364, %362, %365 : vector<8x8xi1>, vector<8x8xf32>
    %cst_203 = arith.constant dense<0xFF800000> : vector<8xf32>
    %367 = vector.multi_reduction <maximumf>, %366, %cst_203 [1] : vector<8x8xf32> to vector<8xf32>
    %368 = vector.shape_cast %367 : vector<8xf32> to vector<8x1xf32>
    %369 = vector.broadcast %368 : vector<8x1xf32> to vector<8x8xf32>
    %370 = arith.subf %366, %369 : vector<8x8xf32>
    %371 = math.exp %370 : vector<8x8xf32>
    %cst_204 = arith.constant dense<0.000000e+00> : vector<8xf32>
    %372 = vector.multi_reduction <add>, %371, %cst_204 [1] : vector<8x8xf32> to vector<8xf32>
    %373 = vector.shape_cast %372 : vector<8xf32> to vector<8x1xf32>
    %374 = vector.broadcast %373 : vector<8x1xf32> to vector<8x8xf32>
    %375 = arith.divf %371, %374 : vector<8x8xf32>
    %cst_205 = arith.constant dense<0.000000e+00> : vector<8x8xf32>
    %376 = tpu.matmul %375, %359, %cst_205 {dimension_numbers = #tpu.dot_dimension_numbers<[1], [0], [0], [1], [0, 0, 1, 1], [], []>} : vector<8x8xf32>, vector<8x8xf32>, vector<8x8xf32> -> vector<8x8xf32>
    %c8_206 = arith.constant 8 : index
    %c16_207 = arith.constant 16 : index
    %377 = vector.load %arg5[%c8_206, %c16_207] : memref<16x160xf32, #tpu.memory_space<vmem>>, vector<8x8xf32>
    %c8_208 = arith.constant 8 : index
    %c48_209 = arith.constant 48 : index
    %378 = vector.load %arg5[%c8_208, %c48_209] : memref<16x160xf32, #tpu.memory_space<vmem>>, vector<8x8xf32>
    %c8_210 = arith.constant 8 : index
    %c80_211 = arith.constant 80 : index
    %379 = vector.load %arg5[%c8_210, %c80_211] : memref<16x160xf32, #tpu.memory_space<vmem>>, vector<8x8xf32>
    %cst_212 = arith.constant dense<0.000000e+00> : vector<8x8xf32>
    %380 = tpu.matmul %377, %378, %cst_212 {dimension_numbers = #tpu.dot_dimension_numbers<[1], [1], [0], [0], [0, 0, 1, 0], [], []>} : vector<8x8xf32>, vector<8x8xf32>, vector<8x8xf32> -> vector<8x8xf32>
    %cst_213 = arith.constant 0.353553385 : f32
    %381 = vector.broadcast %cst_213 : f32 to vector<8x8xf32>
    %382 = arith.mulf %380, %381 : vector<8x8xf32>
    %cst_214 = arith.constant -1.000000e+09 : f32
    %383 = vector.shape_cast %336 : vector<1x8xi1> to vector<1x8xi1>
    %384 = vector.broadcast %383 : vector<1x8xi1> to vector<8x8xi1>
    %385 = vector.broadcast %cst_214 : f32 to vector<8x8xf32>
    %386 = arith.select %384, %382, %385 : vector<8x8xi1>, vector<8x8xf32>
    %cst_215 = arith.constant dense<0xFF800000> : vector<8xf32>
    %387 = vector.multi_reduction <maximumf>, %386, %cst_215 [1] : vector<8x8xf32> to vector<8xf32>
    %388 = vector.shape_cast %387 : vector<8xf32> to vector<8x1xf32>
    %389 = vector.broadcast %388 : vector<8x1xf32> to vector<8x8xf32>
    %390 = arith.subf %386, %389 : vector<8x8xf32>
    %391 = math.exp %390 : vector<8x8xf32>
    %cst_216 = arith.constant dense<0.000000e+00> : vector<8xf32>
    %392 = vector.multi_reduction <add>, %391, %cst_216 [1] : vector<8x8xf32> to vector<8xf32>
    %393 = vector.shape_cast %392 : vector<8xf32> to vector<8x1xf32>
    %394 = vector.broadcast %393 : vector<8x1xf32> to vector<8x8xf32>
    %395 = arith.divf %391, %394 : vector<8x8xf32>
    %cst_217 = arith.constant dense<0.000000e+00> : vector<8x8xf32>
    %396 = tpu.matmul %395, %379, %cst_217 {dimension_numbers = #tpu.dot_dimension_numbers<[1], [0], [0], [1], [0, 0, 1, 1], [], []>} : vector<8x8xf32>, vector<8x8xf32>, vector<8x8xf32> -> vector<8x8xf32>
    %c8_218 = arith.constant 8 : index
    %c24_219 = arith.constant 24 : index
    %397 = vector.load %arg5[%c8_218, %c24_219] : memref<16x160xf32, #tpu.memory_space<vmem>>, vector<8x8xf32>
    %c8_220 = arith.constant 8 : index
    %c56_221 = arith.constant 56 : index
    %398 = vector.load %arg5[%c8_220, %c56_221] : memref<16x160xf32, #tpu.memory_space<vmem>>, vector<8x8xf32>
    %c8_222 = arith.constant 8 : index
    %c88_223 = arith.constant 88 : index
    %399 = vector.load %arg5[%c8_222, %c88_223] : memref<16x160xf32, #tpu.memory_space<vmem>>, vector<8x8xf32>
    %cst_224 = arith.constant dense<0.000000e+00> : vector<8x8xf32>
    %400 = tpu.matmul %397, %398, %cst_224 {dimension_numbers = #tpu.dot_dimension_numbers<[1], [1], [0], [0], [0, 0, 1, 0], [], []>} : vector<8x8xf32>, vector<8x8xf32>, vector<8x8xf32> -> vector<8x8xf32>
    %cst_225 = arith.constant 0.353553385 : f32
    %401 = vector.broadcast %cst_225 : f32 to vector<8x8xf32>
    %402 = arith.mulf %400, %401 : vector<8x8xf32>
    %cst_226 = arith.constant -1.000000e+09 : f32
    %403 = vector.shape_cast %336 : vector<1x8xi1> to vector<1x8xi1>
    %404 = vector.broadcast %403 : vector<1x8xi1> to vector<8x8xi1>
    %405 = vector.broadcast %cst_226 : f32 to vector<8x8xf32>
    %406 = arith.select %404, %402, %405 : vector<8x8xi1>, vector<8x8xf32>
    %cst_227 = arith.constant dense<0xFF800000> : vector<8xf32>
    %407 = vector.multi_reduction <maximumf>, %406, %cst_227 [1] : vector<8x8xf32> to vector<8xf32>
    %408 = vector.shape_cast %407 : vector<8xf32> to vector<8x1xf32>
    %409 = vector.broadcast %408 : vector<8x1xf32> to vector<8x8xf32>
    %410 = arith.subf %406, %409 : vector<8x8xf32>
    %411 = math.exp %410 : vector<8x8xf32>
    %cst_228 = arith.constant dense<0.000000e+00> : vector<8xf32>
    %412 = vector.multi_reduction <add>, %411, %cst_228 [1] : vector<8x8xf32> to vector<8xf32>
    %413 = vector.shape_cast %412 : vector<8xf32> to vector<8x1xf32>
    %414 = vector.broadcast %413 : vector<8x1xf32> to vector<8x8xf32>
    %415 = arith.divf %411, %414 : vector<8x8xf32>
    %cst_229 = arith.constant dense<0.000000e+00> : vector<8x8xf32>
    %416 = tpu.matmul %415, %399, %cst_229 {dimension_numbers = #tpu.dot_dimension_numbers<[1], [0], [0], [1], [0, 0, 1, 1], [], []>} : vector<8x8xf32>, vector<8x8xf32>, vector<8x8xf32> -> vector<8x8xf32>
    %417 = tpu.concatenate %356, %376, %396, %416 in 1 : vector<8x8xf32>, vector<8x8xf32>, vector<8x8xf32>, vector<8x8xf32> -> vector<8x32xf32>
    %418 = tpu.concatenate %333, %417 in 0 : vector<8x32xf32>, vector<8x32xf32> -> vector<16x32xf32>
    %cst_230 = arith.constant dense<0.000000e+00> : vector<16x32xf32>
    %419 = tpu.matmul %418, %242, %cst_230 {dimension_numbers = #tpu.dot_dimension_numbers<[1], [0], [0], [1], [0, 0, 1, 1], [], []>} : vector<16x32xf32>, vector<32x32xf32>, vector<16x32xf32> -> vector<16x32xf32>
    %c9 = arith.constant 9 : index
    %c0_231 = arith.constant 0 : index
    %420 = vector.load %arg3[%c9, %c0_231] : memref<34x160xf32, #tpu.memory_space<vmem>>, vector<1x32xf32>
    %421 = vector.broadcast %420 : vector<1x32xf32> to vector<16x32xf32>
    %422 = arith.addf %419, %421 : vector<16x32xf32>
    %423 = arith.addf %240, %422 : vector<16x32xf32>
    %c10 = arith.constant 10 : index
    %c0_232 = arith.constant 0 : index
    %424 = vector.load %arg3[%c10, %c0_232] : memref<34x160xf32, #tpu.memory_space<vmem>>, vector<1x32xf32>
    %c11 = arith.constant 11 : index
    %c0_233 = arith.constant 0 : index
    %425 = vector.load %arg3[%c11, %c0_233] : memref<34x160xf32, #tpu.memory_space<vmem>>, vector<1x32xf32>
    %cst_234 = arith.constant dense<0.000000e+00> : vector<16xf32>
    %426 = vector.multi_reduction <add>, %423, %cst_234 [1] : vector<16x32xf32> to vector<16xf32>
    %427 = vector.shape_cast %426 : vector<16xf32> to vector<16x1xf32>
    %cst_235 = arith.constant 3.200000e+01 : f32
    %428 = vector.broadcast %cst_235 : f32 to vector<16x1xf32>
    %429 = arith.divf %427, %428 : vector<16x1xf32>
    %430 = vector.broadcast %429 : vector<16x1xf32> to vector<16x32xf32>
    %431 = arith.subf %423, %430 : vector<16x32xf32>
    %432 = arith.mulf %431, %431 : vector<16x32xf32>
    %cst_236 = arith.constant dense<0.000000e+00> : vector<16xf32>
    %433 = vector.multi_reduction <add>, %432, %cst_236 [1] : vector<16x32xf32> to vector<16xf32>
    %434 = vector.shape_cast %433 : vector<16xf32> to vector<16x1xf32>
    %cst_237 = arith.constant 3.100000e+01 : f32
    %435 = vector.broadcast %cst_237 : f32 to vector<16x1xf32>
    %436 = arith.divf %434, %435 : vector<16x1xf32>
    %437 = math.sqrt %436 : vector<16x1xf32>
    %cst_238 = arith.constant 9.99999974E-6 : f32
    %438 = vector.broadcast %cst_238 : f32 to vector<16x1xf32>
    %439 = arith.addf %437, %438 : vector<16x1xf32>
    %440 = vector.broadcast %439 : vector<16x1xf32> to vector<16x32xf32>
    %441 = arith.divf %431, %440 : vector<16x32xf32>
    %442 = vector.broadcast %424 : vector<1x32xf32> to vector<16x32xf32>
    %443 = arith.mulf %442, %441 : vector<16x32xf32>
    %444 = vector.broadcast %425 : vector<1x32xf32> to vector<16x32xf32>
    %445 = arith.addf %443, %444 : vector<16x32xf32>
    %cst_239 = arith.constant dense<0.000000e+00> : vector<16x64xf32>
    %446 = tpu.matmul %445, %243, %cst_239 {dimension_numbers = #tpu.dot_dimension_numbers<[1], [0], [0], [1], [0, 0, 1, 1], [], []>} : vector<16x32xf32>, vector<32x64xf32>, vector<16x64xf32> -> vector<16x64xf32>
    %c12 = arith.constant 12 : index
    %c0_240 = arith.constant 0 : index
    %447 = vector.load %arg3[%c12, %c0_240] : memref<34x160xf32, #tpu.memory_space<vmem>>, vector<1x64xf32>
    %448 = vector.broadcast %447 : vector<1x64xf32> to vector<16x64xf32>
    %449 = arith.addf %446, %448 : vector<16x64xf32>
    %cst_241 = arith.constant 0.000000e+00 : f32
    %450 = vector.broadcast %cst_241 : f32 to vector<16x64xf32>
    %451 = arith.maximumf %449, %450 : vector<16x64xf32>
    %cst_242 = arith.constant dense<0.000000e+00> : vector<16x32xf32>
    %452 = tpu.matmul %451, %244, %cst_242 {dimension_numbers = #tpu.dot_dimension_numbers<[1], [0], [0], [1], [0, 0, 1, 1], [], []>} : vector<16x64xf32>, vector<64x32xf32>, vector<16x32xf32> -> vector<16x32xf32>
    %c13 = arith.constant 13 : index
    %c0_243 = arith.constant 0 : index
    %453 = vector.load %arg3[%c13, %c0_243] : memref<34x160xf32, #tpu.memory_space<vmem>>, vector<1x32xf32>
    %454 = vector.broadcast %453 : vector<1x32xf32> to vector<16x32xf32>
    %455 = arith.addf %452, %454 : vector<16x32xf32>
    %456 = arith.addf %445, %455 : vector<16x32xf32>
    %c14 = arith.constant 14 : index
    %c0_244 = arith.constant 0 : index
    %457 = vector.load %arg3[%c14, %c0_244] : memref<34x160xf32, #tpu.memory_space<vmem>>, vector<1x32xf32>
    %c15 = arith.constant 15 : index
    %c0_245 = arith.constant 0 : index
    %458 = vector.load %arg3[%c15, %c0_245] : memref<34x160xf32, #tpu.memory_space<vmem>>, vector<1x32xf32>
    %cst_246 = arith.constant dense<0.000000e+00> : vector<16xf32>
    %459 = vector.multi_reduction <add>, %456, %cst_246 [1] : vector<16x32xf32> to vector<16xf32>
    %460 = vector.shape_cast %459 : vector<16xf32> to vector<16x1xf32>
    %cst_247 = arith.constant 3.200000e+01 : f32
    %461 = vector.broadcast %cst_247 : f32 to vector<16x1xf32>
    %462 = arith.divf %460, %461 : vector<16x1xf32>
    %463 = vector.broadcast %462 : vector<16x1xf32> to vector<16x32xf32>
    %464 = arith.subf %456, %463 : vector<16x32xf32>
    %465 = arith.mulf %464, %464 : vector<16x32xf32>
    %cst_248 = arith.constant dense<0.000000e+00> : vector<16xf32>
    %466 = vector.multi_reduction <add>, %465, %cst_248 [1] : vector<16x32xf32> to vector<16xf32>
    %467 = vector.shape_cast %466 : vector<16xf32> to vector<16x1xf32>
    %cst_249 = arith.constant 3.100000e+01 : f32
    %468 = vector.broadcast %cst_249 : f32 to vector<16x1xf32>
    %469 = arith.divf %467, %468 : vector<16x1xf32>
    %470 = math.sqrt %469 : vector<16x1xf32>
    %cst_250 = arith.constant 9.99999974E-6 : f32
    %471 = vector.broadcast %cst_250 : f32 to vector<16x1xf32>
    %472 = arith.addf %470, %471 : vector<16x1xf32>
    %473 = vector.broadcast %472 : vector<16x1xf32> to vector<16x32xf32>
    %474 = arith.divf %464, %473 : vector<16x32xf32>
    %475 = vector.broadcast %457 : vector<1x32xf32> to vector<16x32xf32>
    %476 = arith.mulf %475, %474 : vector<16x32xf32>
    %477 = vector.broadcast %458 : vector<1x32xf32> to vector<16x32xf32>
    %478 = arith.addf %476, %477 : vector<16x32xf32>
    %c1_251 = arith.constant 1 : index
    %c0_252 = arith.constant 0 : index
    %c0_253 = arith.constant 0 : index
    %479 = vector.load %arg1[%c1_251, %c0_252, %c0_253] : memref<3x2x8xf32, #tpu.memory_space<vmem>>, vector<1x2x8xf32>
    %480 = vector.shape_cast %479 : vector<1x2x8xf32> to vector<2x8xf32>
    %481 = vector.extract_strided_slice %478 {offsets = [0, 0], sizes = [1, 32], strides = [1, 1]} : vector<16x32xf32> to vector<1x32xf32>
    %482 = vector.extract_strided_slice %478 {offsets = [1, 0], sizes = [1, 32], strides = [1, 1]} : vector<16x32xf32> to vector<1x32xf32>
    %483 = tpu.concatenate %481, %482 in 1 : vector<1x32xf32>, vector<1x32xf32> -> vector<1x64xf32>
    %484 = vector.extract_strided_slice %478 {offsets = [2, 0], sizes = [1, 32], strides = [1, 1]} : vector<16x32xf32> to vector<1x32xf32>
    %485 = vector.extract_strided_slice %478 {offsets = [3, 0], sizes = [1, 32], strides = [1, 1]} : vector<16x32xf32> to vector<1x32xf32>
    %486 = tpu.concatenate %484, %485 in 1 : vector<1x32xf32>, vector<1x32xf32> -> vector<1x64xf32>
    %487 = vector.extract_strided_slice %478 {offsets = [4, 0], sizes = [1, 32], strides = [1, 1]} : vector<16x32xf32> to vector<1x32xf32>
    %488 = vector.extract_strided_slice %478 {offsets = [5, 0], sizes = [1, 32], strides = [1, 1]} : vector<16x32xf32> to vector<1x32xf32>
    %489 = tpu.concatenate %487, %488 in 1 : vector<1x32xf32>, vector<1x32xf32> -> vector<1x64xf32>
    %490 = vector.extract_strided_slice %478 {offsets = [6, 0], sizes = [1, 32], strides = [1, 1]} : vector<16x32xf32> to vector<1x32xf32>
    %491 = vector.extract_strided_slice %478 {offsets = [7, 0], sizes = [1, 32], strides = [1, 1]} : vector<16x32xf32> to vector<1x32xf32>
    %492 = tpu.concatenate %490, %491 in 1 : vector<1x32xf32>, vector<1x32xf32> -> vector<1x64xf32>
    %493 = vector.extract_strided_slice %478 {offsets = [8, 0], sizes = [1, 32], strides = [1, 1]} : vector<16x32xf32> to vector<1x32xf32>
    %494 = vector.extract_strided_slice %478 {offsets = [9, 0], sizes = [1, 32], strides = [1, 1]} : vector<16x32xf32> to vector<1x32xf32>
    %495 = tpu.concatenate %493, %494 in 1 : vector<1x32xf32>, vector<1x32xf32> -> vector<1x64xf32>
    %496 = vector.extract_strided_slice %478 {offsets = [10, 0], sizes = [1, 32], strides = [1, 1]} : vector<16x32xf32> to vector<1x32xf32>
    %497 = vector.extract_strided_slice %478 {offsets = [11, 0], sizes = [1, 32], strides = [1, 1]} : vector<16x32xf32> to vector<1x32xf32>
    %498 = tpu.concatenate %496, %497 in 1 : vector<1x32xf32>, vector<1x32xf32> -> vector<1x64xf32>
    %499 = vector.extract_strided_slice %478 {offsets = [12, 0], sizes = [1, 32], strides = [1, 1]} : vector<16x32xf32> to vector<1x32xf32>
    %500 = vector.extract_strided_slice %478 {offsets = [13, 0], sizes = [1, 32], strides = [1, 1]} : vector<16x32xf32> to vector<1x32xf32>
    %501 = tpu.concatenate %499, %500 in 1 : vector<1x32xf32>, vector<1x32xf32> -> vector<1x64xf32>
    %502 = vector.extract_strided_slice %478 {offsets = [14, 0], sizes = [1, 32], strides = [1, 1]} : vector<16x32xf32> to vector<1x32xf32>
    %503 = vector.extract_strided_slice %478 {offsets = [15, 0], sizes = [1, 32], strides = [1, 1]} : vector<16x32xf32> to vector<1x32xf32>
    %504 = tpu.concatenate %502, %503 in 1 : vector<1x32xf32>, vector<1x32xf32> -> vector<1x64xf32>
    %505 = tpu.concatenate %483, %486, %489, %492, %495, %498, %501, %504 in 0 : vector<1x64xf32>, vector<1x64xf32>, vector<1x64xf32>, vector<1x64xf32>, vector<1x64xf32>, vector<1x64xf32>, vector<1x64xf32>, vector<1x64xf32> -> vector<8x64xf32>
    %c320 = arith.constant 320 : index
    %c0_254 = arith.constant 0 : index
    %506 = vector.load %arg2[%c320, %c0_254] : memref<704x160xf32, #tpu.memory_space<vmem>>, vector<64x160xf32>
    %c384 = arith.constant 384 : index
    %c0_255 = arith.constant 0 : index
    %507 = vector.load %arg2[%c384, %c0_255] : memref<704x160xf32, #tpu.memory_space<vmem>>, vector<32x32xf32>
    %c416 = arith.constant 416 : index
    %c0_256 = arith.constant 0 : index
    %508 = vector.load %arg2[%c416, %c0_256] : memref<704x160xf32, #tpu.memory_space<vmem>>, vector<32x64xf32>
    %c448 = arith.constant 448 : index
    %c0_257 = arith.constant 0 : index
    %509 = vector.load %arg2[%c448, %c0_257] : memref<704x160xf32, #tpu.memory_space<vmem>>, vector<64x32xf32>
    %cst_258 = arith.constant dense<0.000000e+00> : vector<8x160xf32>
    %510 = tpu.matmul %505, %506, %cst_258 {dimension_numbers = #tpu.dot_dimension_numbers<[1], [0], [0], [1], [0, 0, 1, 1], [], []>} : vector<8x64xf32>, vector<64x160xf32>, vector<8x160xf32> -> vector<8x160xf32>
    %c16_259 = arith.constant 16 : index
    %c0_260 = arith.constant 0 : index
    %511 = vector.load %arg3[%c16_259, %c0_260] : memref<34x160xf32, #tpu.memory_space<vmem>>, vector<1x160xf32>
    %512 = vector.broadcast %511 : vector<1x160xf32> to vector<8x160xf32>
    %513 = arith.addf %510, %512 : vector<8x160xf32>
    %c0_261 = arith.constant 0 : index
    %c0_262 = arith.constant 0 : index
    %514 = vector.load %arg5[%c0_261, %c0_262] : memref<16x160xf32, #tpu.memory_space<vmem>>, vector<8x160xf32>
    tpu.vector_store %arg5[%c0_261, %c0_262], %513 {strides = array<i32>} : memref<16x160xf32, #tpu.memory_space<vmem>>, vector<8x160xf32>,
    %515 = vector.extract_strided_slice %480 {offsets = [0, 0], sizes = [1, 4], strides = [1, 1]} : vector<2x8xf32> to vector<1x4xf32>
    %cst_263 = arith.constant 0.000000e+00 : f32
    %516 = vector.broadcast %cst_263 : f32 to vector<1x4xf32>
    %517 = arith.cmpf ogt, %515, %516 : vector<1x4xf32>
    %c0_264 = arith.constant 0 : index
    %c0_265 = arith.constant 0 : index
    %518 = vector.load %arg5[%c0_264, %c0_265] : memref<16x160xf32, #tpu.memory_space<vmem>>, vector<4x16xf32>
    %c0_266 = arith.constant 0 : index
    %c64_267 = arith.constant 64 : index
    %519 = vector.load %arg5[%c0_266, %c64_267] : memref<16x160xf32, #tpu.memory_space<vmem>>, vector<4x16xf32>
    %c0_268 = arith.constant 0 : index
    %c128 = arith.constant 128 : index
    %520 = vector.load %arg5[%c0_268, %c128] : memref<16x160xf32, #tpu.memory_space<vmem>>, vector<4x8xf32>
    %cst_269 = arith.constant dense<0.000000e+00> : vector<4x4xf32>
    %521 = tpu.matmul %518, %519, %cst_269 {dimension_numbers = #tpu.dot_dimension_numbers<[1], [1], [0], [0], [0, 0, 1, 0], [], []>} : vector<4x16xf32>, vector<4x16xf32>, vector<4x4xf32> -> vector<4x4xf32>
    %cst_270 = arith.constant 2.500000e-01 : f32
    %522 = vector.broadcast %cst_270 : f32 to vector<4x4xf32>
    %523 = arith.mulf %521, %522 : vector<4x4xf32>
    %cst_271 = arith.constant -1.000000e+09 : f32
    %524 = vector.shape_cast %517 : vector<1x4xi1> to vector<1x4xi1>
    %525 = vector.broadcast %524 : vector<1x4xi1> to vector<4x4xi1>
    %526 = vector.broadcast %cst_271 : f32 to vector<4x4xf32>
    %527 = arith.select %525, %523, %526 : vector<4x4xi1>, vector<4x4xf32>
    %cst_272 = arith.constant dense<0xFF800000> : vector<4xf32>
    %528 = vector.multi_reduction <maximumf>, %527, %cst_272 [1] : vector<4x4xf32> to vector<4xf32>
    %529 = vector.shape_cast %528 : vector<4xf32> to vector<4x1xf32>
    %530 = vector.broadcast %529 : vector<4x1xf32> to vector<4x4xf32>
    %531 = arith.subf %527, %530 : vector<4x4xf32>
    %532 = math.exp %531 : vector<4x4xf32>
    %cst_273 = arith.constant dense<0.000000e+00> : vector<4xf32>
    %533 = vector.multi_reduction <add>, %532, %cst_273 [1] : vector<4x4xf32> to vector<4xf32>
    %534 = vector.shape_cast %533 : vector<4xf32> to vector<4x1xf32>
    %535 = vector.broadcast %534 : vector<4x1xf32> to vector<4x4xf32>
    %536 = arith.divf %532, %535 : vector<4x4xf32>
    %cst_274 = arith.constant dense<0.000000e+00> : vector<4x8xf32>
    %537 = tpu.matmul %536, %520, %cst_274 {dimension_numbers = #tpu.dot_dimension_numbers<[1], [0], [0], [1], [0, 0, 1, 1], [], []>} : vector<4x4xf32>, vector<4x8xf32>, vector<4x8xf32> -> vector<4x8xf32>
    %c0_275 = arith.constant 0 : index
    %c16_276 = arith.constant 16 : index
    %538 = vector.load %arg5[%c0_275, %c16_276] : memref<16x160xf32, #tpu.memory_space<vmem>>, vector<4x16xf32>
    %c0_277 = arith.constant 0 : index
    %c80_278 = arith.constant 80 : index
    %539 = vector.load %arg5[%c0_277, %c80_278] : memref<16x160xf32, #tpu.memory_space<vmem>>, vector<4x16xf32>
    %c0_279 = arith.constant 0 : index
    %c136 = arith.constant 136 : index
    %540 = vector.load %arg5[%c0_279, %c136] : memref<16x160xf32, #tpu.memory_space<vmem>>, vector<4x8xf32>
    %cst_280 = arith.constant dense<0.000000e+00> : vector<4x4xf32>
    %541 = tpu.matmul %538, %539, %cst_280 {dimension_numbers = #tpu.dot_dimension_numbers<[1], [1], [0], [0], [0, 0, 1, 0], [], []>} : vector<4x16xf32>, vector<4x16xf32>, vector<4x4xf32> -> vector<4x4xf32>
    %cst_281 = arith.constant 2.500000e-01 : f32
    %542 = vector.broadcast %cst_281 : f32 to vector<4x4xf32>
    %543 = arith.mulf %541, %542 : vector<4x4xf32>
    %cst_282 = arith.constant -1.000000e+09 : f32
    %544 = vector.shape_cast %517 : vector<1x4xi1> to vector<1x4xi1>
    %545 = vector.broadcast %544 : vector<1x4xi1> to vector<4x4xi1>
    %546 = vector.broadcast %cst_282 : f32 to vector<4x4xf32>
    %547 = arith.select %545, %543, %546 : vector<4x4xi1>, vector<4x4xf32>
    %cst_283 = arith.constant dense<0xFF800000> : vector<4xf32>
    %548 = vector.multi_reduction <maximumf>, %547, %cst_283 [1] : vector<4x4xf32> to vector<4xf32>
    %549 = vector.shape_cast %548 : vector<4xf32> to vector<4x1xf32>
    %550 = vector.broadcast %549 : vector<4x1xf32> to vector<4x4xf32>
    %551 = arith.subf %547, %550 : vector<4x4xf32>
    %552 = math.exp %551 : vector<4x4xf32>
    %cst_284 = arith.constant dense<0.000000e+00> : vector<4xf32>
    %553 = vector.multi_reduction <add>, %552, %cst_284 [1] : vector<4x4xf32> to vector<4xf32>
    %554 = vector.shape_cast %553 : vector<4xf32> to vector<4x1xf32>
    %555 = vector.broadcast %554 : vector<4x1xf32> to vector<4x4xf32>
    %556 = arith.divf %552, %555 : vector<4x4xf32>
    %cst_285 = arith.constant dense<0.000000e+00> : vector<4x8xf32>
    %557 = tpu.matmul %556, %540, %cst_285 {dimension_numbers = #tpu.dot_dimension_numbers<[1], [0], [0], [1], [0, 0, 1, 1], [], []>} : vector<4x4xf32>, vector<4x8xf32>, vector<4x8xf32> -> vector<4x8xf32>
    %c0_286 = arith.constant 0 : index
    %c32_287 = arith.constant 32 : index
    %558 = vector.load %arg5[%c0_286, %c32_287] : memref<16x160xf32, #tpu.memory_space<vmem>>, vector<4x16xf32>
    %c0_288 = arith.constant 0 : index
    %c96_289 = arith.constant 96 : index
    %559 = vector.load %arg5[%c0_288, %c96_289] : memref<16x160xf32, #tpu.memory_space<vmem>>, vector<4x16xf32>
    %c0_290 = arith.constant 0 : index
    %c144 = arith.constant 144 : index
    %560 = vector.load %arg5[%c0_290, %c144] : memref<16x160xf32, #tpu.memory_space<vmem>>, vector<4x8xf32>
    %cst_291 = arith.constant dense<0.000000e+00> : vector<4x4xf32>
    %561 = tpu.matmul %558, %559, %cst_291 {dimension_numbers = #tpu.dot_dimension_numbers<[1], [1], [0], [0], [0, 0, 1, 0], [], []>} : vector<4x16xf32>, vector<4x16xf32>, vector<4x4xf32> -> vector<4x4xf32>
    %cst_292 = arith.constant 2.500000e-01 : f32
    %562 = vector.broadcast %cst_292 : f32 to vector<4x4xf32>
    %563 = arith.mulf %561, %562 : vector<4x4xf32>
    %cst_293 = arith.constant -1.000000e+09 : f32
    %564 = vector.shape_cast %517 : vector<1x4xi1> to vector<1x4xi1>
    %565 = vector.broadcast %564 : vector<1x4xi1> to vector<4x4xi1>
    %566 = vector.broadcast %cst_293 : f32 to vector<4x4xf32>
    %567 = arith.select %565, %563, %566 : vector<4x4xi1>, vector<4x4xf32>
    %cst_294 = arith.constant dense<0xFF800000> : vector<4xf32>
    %568 = vector.multi_reduction <maximumf>, %567, %cst_294 [1] : vector<4x4xf32> to vector<4xf32>
    %569 = vector.shape_cast %568 : vector<4xf32> to vector<4x1xf32>
    %570 = vector.broadcast %569 : vector<4x1xf32> to vector<4x4xf32>
    %571 = arith.subf %567, %570 : vector<4x4xf32>
    %572 = math.exp %571 : vector<4x4xf32>
    %cst_295 = arith.constant dense<0.000000e+00> : vector<4xf32>
    %573 = vector.multi_reduction <add>, %572, %cst_295 [1] : vector<4x4xf32> to vector<4xf32>
    %574 = vector.shape_cast %573 : vector<4xf32> to vector<4x1xf32>
    %575 = vector.broadcast %574 : vector<4x1xf32> to vector<4x4xf32>
    %576 = arith.divf %572, %575 : vector<4x4xf32>
    %cst_296 = arith.constant dense<0.000000e+00> : vector<4x8xf32>
    %577 = tpu.matmul %576, %560, %cst_296 {dimension_numbers = #tpu.dot_dimension_numbers<[1], [0], [0], [1], [0, 0, 1, 1], [], []>} : vector<4x4xf32>, vector<4x8xf32>, vector<4x8xf32> -> vector<4x8xf32>
    %c0_297 = arith.constant 0 : index
    %c48_298 = arith.constant 48 : index
    %578 = vector.load %arg5[%c0_297, %c48_298] : memref<16x160xf32, #tpu.memory_space<vmem>>, vector<4x16xf32>
    %c0_299 = arith.constant 0 : index
    %c112 = arith.constant 112 : index
    %579 = vector.load %arg5[%c0_299, %c112] : memref<16x160xf32, #tpu.memory_space<vmem>>, vector<4x16xf32>
    %c0_300 = arith.constant 0 : index
    %c152 = arith.constant 152 : index
    %580 = vector.load %arg5[%c0_300, %c152] : memref<16x160xf32, #tpu.memory_space<vmem>>, vector<4x8xf32>
    %cst_301 = arith.constant dense<0.000000e+00> : vector<4x4xf32>
    %581 = tpu.matmul %578, %579, %cst_301 {dimension_numbers = #tpu.dot_dimension_numbers<[1], [1], [0], [0], [0, 0, 1, 0], [], []>} : vector<4x16xf32>, vector<4x16xf32>, vector<4x4xf32> -> vector<4x4xf32>
    %cst_302 = arith.constant 2.500000e-01 : f32
    %582 = vector.broadcast %cst_302 : f32 to vector<4x4xf32>
    %583 = arith.mulf %581, %582 : vector<4x4xf32>
    %cst_303 = arith.constant -1.000000e+09 : f32
    %584 = vector.shape_cast %517 : vector<1x4xi1> to vector<1x4xi1>
    %585 = vector.broadcast %584 : vector<1x4xi1> to vector<4x4xi1>
    %586 = vector.broadcast %cst_303 : f32 to vector<4x4xf32>
    %587 = arith.select %585, %583, %586 : vector<4x4xi1>, vector<4x4xf32>
    %cst_304 = arith.constant dense<0xFF800000> : vector<4xf32>
    %588 = vector.multi_reduction <maximumf>, %587, %cst_304 [1] : vector<4x4xf32> to vector<4xf32>
    %589 = vector.shape_cast %588 : vector<4xf32> to vector<4x1xf32>
    %590 = vector.broadcast %589 : vector<4x1xf32> to vector<4x4xf32>
    %591 = arith.subf %587, %590 : vector<4x4xf32>
    %592 = math.exp %591 : vector<4x4xf32>
    %cst_305 = arith.constant dense<0.000000e+00> : vector<4xf32>
    %593 = vector.multi_reduction <add>, %592, %cst_305 [1] : vector<4x4xf32> to vector<4xf32>
    %594 = vector.shape_cast %593 : vector<4xf32> to vector<4x1xf32>
    %595 = vector.broadcast %594 : vector<4x1xf32> to vector<4x4xf32>
    %596 = arith.divf %592, %595 : vector<4x4xf32>
    %cst_306 = arith.constant dense<0.000000e+00> : vector<4x8xf32>
    %597 = tpu.matmul %596, %580, %cst_306 {dimension_numbers = #tpu.dot_dimension_numbers<[1], [0], [0], [1], [0, 0, 1, 1], [], []>} : vector<4x4xf32>, vector<4x8xf32>, vector<4x8xf32> -> vector<4x8xf32>
    %598 = tpu.concatenate %537, %557, %577, %597 in 1 : vector<4x8xf32>, vector<4x8xf32>, vector<4x8xf32>, vector<4x8xf32> -> vector<4x32xf32>
    %599 = vector.extract_strided_slice %480 {offsets = [1, 0], sizes = [1, 4], strides = [1, 1]} : vector<2x8xf32> to vector<1x4xf32>
    %cst_307 = arith.constant 0.000000e+00 : f32
    %600 = vector.broadcast %cst_307 : f32 to vector<1x4xf32>
    %601 = arith.cmpf ogt, %599, %600 : vector<1x4xf32>
    %c4_308 = arith.constant 4 : index
    %c0_309 = arith.constant 0 : index
    %602 = vector.load %arg5[%c4_308, %c0_309] : memref<16x160xf32, #tpu.memory_space<vmem>>, vector<4x16xf32>
    %c4_310 = arith.constant 4 : index
    %c64_311 = arith.constant 64 : index
    %603 = vector.load %arg5[%c4_310, %c64_311] : memref<16x160xf32, #tpu.memory_space<vmem>>, vector<4x16xf32>
    %c4_312 = arith.constant 4 : index
    %c128_313 = arith.constant 128 : index
    %604 = vector.load %arg5[%c4_312, %c128_313] : memref<16x160xf32, #tpu.memory_space<vmem>>, vector<4x8xf32>
    %cst_314 = arith.constant dense<0.000000e+00> : vector<4x4xf32>
    %605 = tpu.matmul %602, %603, %cst_314 {dimension_numbers = #tpu.dot_dimension_numbers<[1], [1], [0], [0], [0, 0, 1, 0], [], []>} : vector<4x16xf32>, vector<4x16xf32>, vector<4x4xf32> -> vector<4x4xf32>
    %cst_315 = arith.constant 2.500000e-01 : f32
    %606 = vector.broadcast %cst_315 : f32 to vector<4x4xf32>
    %607 = arith.mulf %605, %606 : vector<4x4xf32>
    %cst_316 = arith.constant -1.000000e+09 : f32
    %608 = vector.shape_cast %601 : vector<1x4xi1> to vector<1x4xi1>
    %609 = vector.broadcast %608 : vector<1x4xi1> to vector<4x4xi1>
    %610 = vector.broadcast %cst_316 : f32 to vector<4x4xf32>
    %611 = arith.select %609, %607, %610 : vector<4x4xi1>, vector<4x4xf32>
    %cst_317 = arith.constant dense<0xFF800000> : vector<4xf32>
    %612 = vector.multi_reduction <maximumf>, %611, %cst_317 [1] : vector<4x4xf32> to vector<4xf32>
    %613 = vector.shape_cast %612 : vector<4xf32> to vector<4x1xf32>
    %614 = vector.broadcast %613 : vector<4x1xf32> to vector<4x4xf32>
    %615 = arith.subf %611, %614 : vector<4x4xf32>
    %616 = math.exp %615 : vector<4x4xf32>
    %cst_318 = arith.constant dense<0.000000e+00> : vector<4xf32>
    %617 = vector.multi_reduction <add>, %616, %cst_318 [1] : vector<4x4xf32> to vector<4xf32>
    %618 = vector.shape_cast %617 : vector<4xf32> to vector<4x1xf32>
    %619 = vector.broadcast %618 : vector<4x1xf32> to vector<4x4xf32>
    %620 = arith.divf %616, %619 : vector<4x4xf32>
    %cst_319 = arith.constant dense<0.000000e+00> : vector<4x8xf32>
    %621 = tpu.matmul %620, %604, %cst_319 {dimension_numbers = #tpu.dot_dimension_numbers<[1], [0], [0], [1], [0, 0, 1, 1], [], []>} : vector<4x4xf32>, vector<4x8xf32>, vector<4x8xf32> -> vector<4x8xf32>
    %c4_320 = arith.constant 4 : index
    %c16_321 = arith.constant 16 : index
    %622 = vector.load %arg5[%c4_320, %c16_321] : memref<16x160xf32, #tpu.memory_space<vmem>>, vector<4x16xf32>
    %c4_322 = arith.constant 4 : index
    %c80_323 = arith.constant 80 : index
    %623 = vector.load %arg5[%c4_322, %c80_323] : memref<16x160xf32, #tpu.memory_space<vmem>>, vector<4x16xf32>
    %c4_324 = arith.constant 4 : index
    %c136_325 = arith.constant 136 : index
    %624 = vector.load %arg5[%c4_324, %c136_325] : memref<16x160xf32, #tpu.memory_space<vmem>>, vector<4x8xf32>
    %cst_326 = arith.constant dense<0.000000e+00> : vector<4x4xf32>
    %625 = tpu.matmul %622, %623, %cst_326 {dimension_numbers = #tpu.dot_dimension_numbers<[1], [1], [0], [0], [0, 0, 1, 0], [], []>} : vector<4x16xf32>, vector<4x16xf32>, vector<4x4xf32> -> vector<4x4xf32>
    %cst_327 = arith.constant 2.500000e-01 : f32
    %626 = vector.broadcast %cst_327 : f32 to vector<4x4xf32>
    %627 = arith.mulf %625, %626 : vector<4x4xf32>
    %cst_328 = arith.constant -1.000000e+09 : f32
    %628 = vector.shape_cast %601 : vector<1x4xi1> to vector<1x4xi1>
    %629 = vector.broadcast %628 : vector<1x4xi1> to vector<4x4xi1>
    %630 = vector.broadcast %cst_328 : f32 to vector<4x4xf32>
    %631 = arith.select %629, %627, %630 : vector<4x4xi1>, vector<4x4xf32>
    %cst_329 = arith.constant dense<0xFF800000> : vector<4xf32>
    %632 = vector.multi_reduction <maximumf>, %631, %cst_329 [1] : vector<4x4xf32> to vector<4xf32>
    %633 = vector.shape_cast %632 : vector<4xf32> to vector<4x1xf32>
    %634 = vector.broadcast %633 : vector<4x1xf32> to vector<4x4xf32>
    %635 = arith.subf %631, %634 : vector<4x4xf32>
    %636 = math.exp %635 : vector<4x4xf32>
    %cst_330 = arith.constant dense<0.000000e+00> : vector<4xf32>
    %637 = vector.multi_reduction <add>, %636, %cst_330 [1] : vector<4x4xf32> to vector<4xf32>
    %638 = vector.shape_cast %637 : vector<4xf32> to vector<4x1xf32>
    %639 = vector.broadcast %638 : vector<4x1xf32> to vector<4x4xf32>
    %640 = arith.divf %636, %639 : vector<4x4xf32>
    %cst_331 = arith.constant dense<0.000000e+00> : vector<4x8xf32>
    %641 = tpu.matmul %640, %624, %cst_331 {dimension_numbers = #tpu.dot_dimension_numbers<[1], [0], [0], [1], [0, 0, 1, 1], [], []>} : vector<4x4xf32>, vector<4x8xf32>, vector<4x8xf32> -> vector<4x8xf32>
    %c4_332 = arith.constant 4 : index
    %c32_333 = arith.constant 32 : index
    %642 = vector.load %arg5[%c4_332, %c32_333] : memref<16x160xf32, #tpu.memory_space<vmem>>, vector<4x16xf32>
    %c4_334 = arith.constant 4 : index
    %c96_335 = arith.constant 96 : index
    %643 = vector.load %arg5[%c4_334, %c96_335] : memref<16x160xf32, #tpu.memory_space<vmem>>, vector<4x16xf32>
    %c4_336 = arith.constant 4 : index
    %c144_337 = arith.constant 144 : index
    %644 = vector.load %arg5[%c4_336, %c144_337] : memref<16x160xf32, #tpu.memory_space<vmem>>, vector<4x8xf32>
    %cst_338 = arith.constant dense<0.000000e+00> : vector<4x4xf32>
    %645 = tpu.matmul %642, %643, %cst_338 {dimension_numbers = #tpu.dot_dimension_numbers<[1], [1], [0], [0], [0, 0, 1, 0], [], []>} : vector<4x16xf32>, vector<4x16xf32>, vector<4x4xf32> -> vector<4x4xf32>
    %cst_339 = arith.constant 2.500000e-01 : f32
    %646 = vector.broadcast %cst_339 : f32 to vector<4x4xf32>
    %647 = arith.mulf %645, %646 : vector<4x4xf32>
    %cst_340 = arith.constant -1.000000e+09 : f32
    %648 = vector.shape_cast %601 : vector<1x4xi1> to vector<1x4xi1>
    %649 = vector.broadcast %648 : vector<1x4xi1> to vector<4x4xi1>
    %650 = vector.broadcast %cst_340 : f32 to vector<4x4xf32>
    %651 = arith.select %649, %647, %650 : vector<4x4xi1>, vector<4x4xf32>
    %cst_341 = arith.constant dense<0xFF800000> : vector<4xf32>
    %652 = vector.multi_reduction <maximumf>, %651, %cst_341 [1] : vector<4x4xf32> to vector<4xf32>
    %653 = vector.shape_cast %652 : vector<4xf32> to vector<4x1xf32>
    %654 = vector.broadcast %653 : vector<4x1xf32> to vector<4x4xf32>
    %655 = arith.subf %651, %654 : vector<4x4xf32>
    %656 = math.exp %655 : vector<4x4xf32>
    %cst_342 = arith.constant dense<0.000000e+00> : vector<4xf32>
    %657 = vector.multi_reduction <add>, %656, %cst_342 [1] : vector<4x4xf32> to vector<4xf32>
    %658 = vector.shape_cast %657 : vector<4xf32> to vector<4x1xf32>
    %659 = vector.broadcast %658 : vector<4x1xf32> to vector<4x4xf32>
    %660 = arith.divf %656, %659 : vector<4x4xf32>
    %cst_343 = arith.constant dense<0.000000e+00> : vector<4x8xf32>
    %661 = tpu.matmul %660, %644, %cst_343 {dimension_numbers = #tpu.dot_dimension_numbers<[1], [0], [0], [1], [0, 0, 1, 1], [], []>} : vector<4x4xf32>, vector<4x8xf32>, vector<4x8xf32> -> vector<4x8xf32>
    %c4_344 = arith.constant 4 : index
    %c48_345 = arith.constant 48 : index
    %662 = vector.load %arg5[%c4_344, %c48_345] : memref<16x160xf32, #tpu.memory_space<vmem>>, vector<4x16xf32>
    %c4_346 = arith.constant 4 : index
    %c112_347 = arith.constant 112 : index
    %663 = vector.load %arg5[%c4_346, %c112_347] : memref<16x160xf32, #tpu.memory_space<vmem>>, vector<4x16xf32>
    %c4_348 = arith.constant 4 : index
    %c152_349 = arith.constant 152 : index
    %664 = vector.load %arg5[%c4_348, %c152_349] : memref<16x160xf32, #tpu.memory_space<vmem>>, vector<4x8xf32>
    %cst_350 = arith.constant dense<0.000000e+00> : vector<4x4xf32>
    %665 = tpu.matmul %662, %663, %cst_350 {dimension_numbers = #tpu.dot_dimension_numbers<[1], [1], [0], [0], [0, 0, 1, 0], [], []>} : vector<4x16xf32>, vector<4x16xf32>, vector<4x4xf32> -> vector<4x4xf32>
    %cst_351 = arith.constant 2.500000e-01 : f32
    %666 = vector.broadcast %cst_351 : f32 to vector<4x4xf32>
    %667 = arith.mulf %665, %666 : vector<4x4xf32>
    %cst_352 = arith.constant -1.000000e+09 : f32
    %668 = vector.shape_cast %601 : vector<1x4xi1> to vector<1x4xi1>
    %669 = vector.broadcast %668 : vector<1x4xi1> to vector<4x4xi1>
    %670 = vector.broadcast %cst_352 : f32 to vector<4x4xf32>
    %671 = arith.select %669, %667, %670 : vector<4x4xi1>, vector<4x4xf32>
    %cst_353 = arith.constant dense<0xFF800000> : vector<4xf32>
    %672 = vector.multi_reduction <maximumf>, %671, %cst_353 [1] : vector<4x4xf32> to vector<4xf32>
    %673 = vector.shape_cast %672 : vector<4xf32> to vector<4x1xf32>
    %674 = vector.broadcast %673 : vector<4x1xf32> to vector<4x4xf32>
    %675 = arith.subf %671, %674 : vector<4x4xf32>
    %676 = math.exp %675 : vector<4x4xf32>
    %cst_354 = arith.constant dense<0.000000e+00> : vector<4xf32>
    %677 = vector.multi_reduction <add>, %676, %cst_354 [1] : vector<4x4xf32> to vector<4xf32>
    %678 = vector.shape_cast %677 : vector<4xf32> to vector<4x1xf32>
    %679 = vector.broadcast %678 : vector<4x1xf32> to vector<4x4xf32>
    %680 = arith.divf %676, %679 : vector<4x4xf32>
    %cst_355 = arith.constant dense<0.000000e+00> : vector<4x8xf32>
    %681 = tpu.matmul %680, %664, %cst_355 {dimension_numbers = #tpu.dot_dimension_numbers<[1], [0], [0], [1], [0, 0, 1, 1], [], []>} : vector<4x4xf32>, vector<4x8xf32>, vector<4x8xf32> -> vector<4x8xf32>
    %682 = tpu.concatenate %621, %641, %661, %681 in 1 : vector<4x8xf32>, vector<4x8xf32>, vector<4x8xf32>, vector<4x8xf32> -> vector<4x32xf32>
    %683 = tpu.concatenate %598, %682 in 0 : vector<4x32xf32>, vector<4x32xf32> -> vector<8x32xf32>
    %cst_356 = arith.constant dense<0.000000e+00> : vector<8x32xf32>
    %684 = tpu.matmul %683, %507, %cst_356 {dimension_numbers = #tpu.dot_dimension_numbers<[1], [0], [0], [1], [0, 0, 1, 1], [], []>} : vector<8x32xf32>, vector<32x32xf32>, vector<8x32xf32> -> vector<8x32xf32>
    %c17 = arith.constant 17 : index
    %c0_357 = arith.constant 0 : index
    %685 = vector.load %arg3[%c17, %c0_357] : memref<34x160xf32, #tpu.memory_space<vmem>>, vector<1x32xf32>
    %686 = vector.broadcast %685 : vector<1x32xf32> to vector<8x32xf32>
    %687 = arith.addf %684, %686 : vector<8x32xf32>
    %c18 = arith.constant 18 : index
    %c0_358 = arith.constant 0 : index
    %688 = vector.load %arg3[%c18, %c0_358] : memref<34x160xf32, #tpu.memory_space<vmem>>, vector<1x32xf32>
    %c19 = arith.constant 19 : index
    %c0_359 = arith.constant 0 : index
    %689 = vector.load %arg3[%c19, %c0_359] : memref<34x160xf32, #tpu.memory_space<vmem>>, vector<1x32xf32>
    %cst_360 = arith.constant dense<0.000000e+00> : vector<8xf32>
    %690 = vector.multi_reduction <add>, %687, %cst_360 [1] : vector<8x32xf32> to vector<8xf32>
    %691 = vector.shape_cast %690 : vector<8xf32> to vector<8x1xf32>
    %cst_361 = arith.constant 3.200000e+01 : f32
    %692 = vector.broadcast %cst_361 : f32 to vector<8x1xf32>
    %693 = arith.divf %691, %692 : vector<8x1xf32>
    %694 = vector.broadcast %693 : vector<8x1xf32> to vector<8x32xf32>
    %695 = arith.subf %687, %694 : vector<8x32xf32>
    %696 = arith.mulf %695, %695 : vector<8x32xf32>
    %cst_362 = arith.constant dense<0.000000e+00> : vector<8xf32>
    %697 = vector.multi_reduction <add>, %696, %cst_362 [1] : vector<8x32xf32> to vector<8xf32>
    %698 = vector.shape_cast %697 : vector<8xf32> to vector<8x1xf32>
    %cst_363 = arith.constant 3.100000e+01 : f32
    %699 = vector.broadcast %cst_363 : f32 to vector<8x1xf32>
    %700 = arith.divf %698, %699 : vector<8x1xf32>
    %701 = math.sqrt %700 : vector<8x1xf32>
    %cst_364 = arith.constant 9.99999974E-6 : f32
    %702 = vector.broadcast %cst_364 : f32 to vector<8x1xf32>
    %703 = arith.addf %701, %702 : vector<8x1xf32>
    %704 = vector.broadcast %703 : vector<8x1xf32> to vector<8x32xf32>
    %705 = arith.divf %695, %704 : vector<8x32xf32>
    %706 = vector.broadcast %688 : vector<1x32xf32> to vector<8x32xf32>
    %707 = arith.mulf %706, %705 : vector<8x32xf32>
    %708 = vector.broadcast %689 : vector<1x32xf32> to vector<8x32xf32>
    %709 = arith.addf %707, %708 : vector<8x32xf32>
    %cst_365 = arith.constant dense<0.000000e+00> : vector<8x64xf32>
    %710 = tpu.matmul %709, %508, %cst_365 {dimension_numbers = #tpu.dot_dimension_numbers<[1], [0], [0], [1], [0, 0, 1, 1], [], []>} : vector<8x32xf32>, vector<32x64xf32>, vector<8x64xf32> -> vector<8x64xf32>
    %c20 = arith.constant 20 : index
    %c0_366 = arith.constant 0 : index
    %711 = vector.load %arg3[%c20, %c0_366] : memref<34x160xf32, #tpu.memory_space<vmem>>, vector<1x64xf32>
    %712 = vector.broadcast %711 : vector<1x64xf32> to vector<8x64xf32>
    %713 = arith.addf %710, %712 : vector<8x64xf32>
    %cst_367 = arith.constant 0.000000e+00 : f32
    %714 = vector.broadcast %cst_367 : f32 to vector<8x64xf32>
    %715 = arith.maximumf %713, %714 : vector<8x64xf32>
    %cst_368 = arith.constant dense<0.000000e+00> : vector<8x32xf32>
    %716 = tpu.matmul %715, %509, %cst_368 {dimension_numbers = #tpu.dot_dimension_numbers<[1], [0], [0], [1], [0, 0, 1, 1], [], []>} : vector<8x64xf32>, vector<64x32xf32>, vector<8x32xf32> -> vector<8x32xf32>
    %c21 = arith.constant 21 : index
    %c0_369 = arith.constant 0 : index
    %717 = vector.load %arg3[%c21, %c0_369] : memref<34x160xf32, #tpu.memory_space<vmem>>, vector<1x32xf32>
    %718 = vector.broadcast %717 : vector<1x32xf32> to vector<8x32xf32>
    %719 = arith.addf %716, %718 : vector<8x32xf32>
    %720 = arith.addf %709, %719 : vector<8x32xf32>
    %c22 = arith.constant 22 : index
    %c0_370 = arith.constant 0 : index
    %721 = vector.load %arg3[%c22, %c0_370] : memref<34x160xf32, #tpu.memory_space<vmem>>, vector<1x32xf32>
    %c23 = arith.constant 23 : index
    %c0_371 = arith.constant 0 : index
    %722 = vector.load %arg3[%c23, %c0_371] : memref<34x160xf32, #tpu.memory_space<vmem>>, vector<1x32xf32>
    %cst_372 = arith.constant dense<0.000000e+00> : vector<8xf32>
    %723 = vector.multi_reduction <add>, %720, %cst_372 [1] : vector<8x32xf32> to vector<8xf32>
    %724 = vector.shape_cast %723 : vector<8xf32> to vector<8x1xf32>
    %cst_373 = arith.constant 3.200000e+01 : f32
    %725 = vector.broadcast %cst_373 : f32 to vector<8x1xf32>
    %726 = arith.divf %724, %725 : vector<8x1xf32>
    %727 = vector.broadcast %726 : vector<8x1xf32> to vector<8x32xf32>
    %728 = arith.subf %720, %727 : vector<8x32xf32>
    %729 = arith.mulf %728, %728 : vector<8x32xf32>
    %cst_374 = arith.constant dense<0.000000e+00> : vector<8xf32>
    %730 = vector.multi_reduction <add>, %729, %cst_374 [1] : vector<8x32xf32> to vector<8xf32>
    %731 = vector.shape_cast %730 : vector<8xf32> to vector<8x1xf32>
    %cst_375 = arith.constant 3.100000e+01 : f32
    %732 = vector.broadcast %cst_375 : f32 to vector<8x1xf32>
    %733 = arith.divf %731, %732 : vector<8x1xf32>
    %734 = math.sqrt %733 : vector<8x1xf32>
    %cst_376 = arith.constant 9.99999974E-6 : f32
    %735 = vector.broadcast %cst_376 : f32 to vector<8x1xf32>
    %736 = arith.addf %734, %735 : vector<8x1xf32>
    %737 = vector.broadcast %736 : vector<8x1xf32> to vector<8x32xf32>
    %738 = arith.divf %728, %737 : vector<8x32xf32>
    %739 = vector.broadcast %721 : vector<1x32xf32> to vector<8x32xf32>
    %740 = arith.mulf %739, %738 : vector<8x32xf32>
    %741 = vector.broadcast %722 : vector<1x32xf32> to vector<8x32xf32>
    %742 = arith.addf %740, %741 : vector<8x32xf32>
    %c2_377 = arith.constant 2 : index
    %c0_378 = arith.constant 0 : index
    %c0_379 = arith.constant 0 : index
    %743 = vector.load %arg1[%c2_377, %c0_378, %c0_379] : memref<3x2x8xf32, #tpu.memory_space<vmem>>, vector<1x2x8xf32>
    %744 = vector.shape_cast %743 : vector<1x2x8xf32> to vector<2x8xf32>
    %745 = vector.extract_strided_slice %742 {offsets = [0, 0], sizes = [1, 32], strides = [1, 1]} : vector<8x32xf32> to vector<1x32xf32>
    %746 = vector.extract_strided_slice %742 {offsets = [1, 0], sizes = [1, 32], strides = [1, 1]} : vector<8x32xf32> to vector<1x32xf32>
    %747 = tpu.concatenate %745, %746 in 1 : vector<1x32xf32>, vector<1x32xf32> -> vector<1x64xf32>
    %748 = vector.extract_strided_slice %742 {offsets = [2, 0], sizes = [1, 32], strides = [1, 1]} : vector<8x32xf32> to vector<1x32xf32>
    %749 = vector.extract_strided_slice %742 {offsets = [3, 0], sizes = [1, 32], strides = [1, 1]} : vector<8x32xf32> to vector<1x32xf32>
    %750 = tpu.concatenate %748, %749 in 1 : vector<1x32xf32>, vector<1x32xf32> -> vector<1x64xf32>
    %751 = vector.extract_strided_slice %742 {offsets = [4, 0], sizes = [1, 32], strides = [1, 1]} : vector<8x32xf32> to vector<1x32xf32>
    %752 = vector.extract_strided_slice %742 {offsets = [5, 0], sizes = [1, 32], strides = [1, 1]} : vector<8x32xf32> to vector<1x32xf32>
    %753 = tpu.concatenate %751, %752 in 1 : vector<1x32xf32>, vector<1x32xf32> -> vector<1x64xf32>
    %754 = vector.extract_strided_slice %742 {offsets = [6, 0], sizes = [1, 32], strides = [1, 1]} : vector<8x32xf32> to vector<1x32xf32>
    %755 = vector.extract_strided_slice %742 {offsets = [7, 0], sizes = [1, 32], strides = [1, 1]} : vector<8x32xf32> to vector<1x32xf32>
    %756 = tpu.concatenate %754, %755 in 1 : vector<1x32xf32>, vector<1x32xf32> -> vector<1x64xf32>
    %757 = tpu.concatenate %747, %750, %753, %756 in 0 : vector<1x64xf32>, vector<1x64xf32>, vector<1x64xf32>, vector<1x64xf32> -> vector<4x64xf32>
    %c512 = arith.constant 512 : index
    %c0_380 = arith.constant 0 : index
    %758 = vector.load %arg2[%c512, %c0_380] : memref<704x160xf32, #tpu.memory_space<vmem>>, vector<64x160xf32>
    %c576 = arith.constant 576 : index
    %c0_381 = arith.constant 0 : index
    %759 = vector.load %arg2[%c576, %c0_381] : memref<704x160xf32, #tpu.memory_space<vmem>>, vector<32x32xf32>
    %c608 = arith.constant 608 : index
    %c0_382 = arith.constant 0 : index
    %760 = vector.load %arg2[%c608, %c0_382] : memref<704x160xf32, #tpu.memory_space<vmem>>, vector<32x64xf32>
    %c640 = arith.constant 640 : index
    %c0_383 = arith.constant 0 : index
    %761 = vector.load %arg2[%c640, %c0_383] : memref<704x160xf32, #tpu.memory_space<vmem>>, vector<64x32xf32>
    %cst_384 = arith.constant dense<0.000000e+00> : vector<4x160xf32>
    %762 = tpu.matmul %757, %758, %cst_384 {dimension_numbers = #tpu.dot_dimension_numbers<[1], [0], [0], [1], [0, 0, 1, 1], [], []>} : vector<4x64xf32>, vector<64x160xf32>, vector<4x160xf32> -> vector<4x160xf32>
    %c24_385 = arith.constant 24 : index
    %c0_386 = arith.constant 0 : index
    %763 = vector.load %arg3[%c24_385, %c0_386] : memref<34x160xf32, #tpu.memory_space<vmem>>, vector<1x160xf32>
    %764 = vector.broadcast %763 : vector<1x160xf32> to vector<4x160xf32>
    %765 = arith.addf %762, %764 : vector<4x160xf32>
    %c0_387 = arith.constant 0 : index
    %c0_388 = arith.constant 0 : index
    %766 = vector.load %arg5[%c0_387, %c0_388] : memref<16x160xf32, #tpu.memory_space<vmem>>, vector<4x160xf32>
    tpu.vector_store %arg5[%c0_387, %c0_388], %765 {strides = array<i32>} : memref<16x160xf32, #tpu.memory_space<vmem>>, vector<4x160xf32>,
    %767 = vector.extract_strided_slice %744 {offsets = [0, 0], sizes = [1, 2], strides = [1, 1]} : vector<2x8xf32> to vector<1x2xf32>
    %cst_389 = arith.constant 0.000000e+00 : f32
    %768 = vector.broadcast %cst_389 : f32 to vector<1x2xf32>
    %769 = arith.cmpf ogt, %767, %768 : vector<1x2xf32>
    %c0_390 = arith.constant 0 : index
    %c0_391 = arith.constant 0 : index
    %770 = vector.load %arg5[%c0_390, %c0_391] : memref<16x160xf32, #tpu.memory_space<vmem>>, vector<2x16xf32>
    %c0_392 = arith.constant 0 : index
    %c64_393 = arith.constant 64 : index
    %771 = vector.load %arg5[%c0_392, %c64_393] : memref<16x160xf32, #tpu.memory_space<vmem>>, vector<2x16xf32>
    %c0_394 = arith.constant 0 : index
    %c128_395 = arith.constant 128 : index
    %772 = vector.load %arg5[%c0_394, %c128_395] : memref<16x160xf32, #tpu.memory_space<vmem>>, vector<2x8xf32>
    %cst_396 = arith.constant dense<0.000000e+00> : vector<2x2xf32>
    %773 = tpu.matmul %770, %771, %cst_396 {dimension_numbers = #tpu.dot_dimension_numbers<[1], [1], [0], [0], [0, 0, 1, 0], [], []>} : vector<2x16xf32>, vector<2x16xf32>, vector<2x2xf32> -> vector<2x2xf32>
    %cst_397 = arith.constant 2.500000e-01 : f32
    %774 = vector.broadcast %cst_397 : f32 to vector<2x2xf32>
    %775 = arith.mulf %773, %774 : vector<2x2xf32>
    %cst_398 = arith.constant -1.000000e+09 : f32
    %776 = vector.shape_cast %769 : vector<1x2xi1> to vector<1x2xi1>
    %777 = vector.broadcast %776 : vector<1x2xi1> to vector<2x2xi1>
    %778 = vector.broadcast %cst_398 : f32 to vector<2x2xf32>
    %779 = arith.select %777, %775, %778 : vector<2x2xi1>, vector<2x2xf32>
    %cst_399 = arith.constant dense<0xFF800000> : vector<2xf32>
    %780 = vector.multi_reduction <maximumf>, %779, %cst_399 [1] : vector<2x2xf32> to vector<2xf32>
    %781 = vector.shape_cast %780 : vector<2xf32> to vector<2x1xf32>
    %782 = vector.broadcast %781 : vector<2x1xf32> to vector<2x2xf32>
    %783 = arith.subf %779, %782 : vector<2x2xf32>
    %784 = math.exp %783 : vector<2x2xf32>
    %cst_400 = arith.constant dense<0.000000e+00> : vector<2xf32>
    %785 = vector.multi_reduction <add>, %784, %cst_400 [1] : vector<2x2xf32> to vector<2xf32>
    %786 = vector.shape_cast %785 : vector<2xf32> to vector<2x1xf32>
    %787 = vector.broadcast %786 : vector<2x1xf32> to vector<2x2xf32>
    %788 = arith.divf %784, %787 : vector<2x2xf32>
    %cst_401 = arith.constant dense<0.000000e+00> : vector<2x8xf32>
    %789 = tpu.matmul %788, %772, %cst_401 {dimension_numbers = #tpu.dot_dimension_numbers<[1], [0], [0], [1], [0, 0, 1, 1], [], []>} : vector<2x2xf32>, vector<2x8xf32>, vector<2x8xf32> -> vector<2x8xf32>
    %c0_402 = arith.constant 0 : index
    %c16_403 = arith.constant 16 : index
    %790 = vector.load %arg5[%c0_402, %c16_403] : memref<16x160xf32, #tpu.memory_space<vmem>>, vector<2x16xf32>
    %c0_404 = arith.constant 0 : index
    %c80_405 = arith.constant 80 : index
    %791 = vector.load %arg5[%c0_404, %c80_405] : memref<16x160xf32, #tpu.memory_space<vmem>>, vector<2x16xf32>
    %c0_406 = arith.constant 0 : index
    %c136_407 = arith.constant 136 : index
    %792 = vector.load %arg5[%c0_406, %c136_407] : memref<16x160xf32, #tpu.memory_space<vmem>>, vector<2x8xf32>
    %cst_408 = arith.constant dense<0.000000e+00> : vector<2x2xf32>
    %793 = tpu.matmul %790, %791, %cst_408 {dimension_numbers = #tpu.dot_dimension_numbers<[1], [1], [0], [0], [0, 0, 1, 0], [], []>} : vector<2x16xf32>, vector<2x16xf32>, vector<2x2xf32> -> vector<2x2xf32>
    %cst_409 = arith.constant 2.500000e-01 : f32
    %794 = vector.broadcast %cst_409 : f32 to vector<2x2xf32>
    %795 = arith.mulf %793, %794 : vector<2x2xf32>
    %cst_410 = arith.constant -1.000000e+09 : f32
    %796 = vector.shape_cast %769 : vector<1x2xi1> to vector<1x2xi1>
    %797 = vector.broadcast %796 : vector<1x2xi1> to vector<2x2xi1>
    %798 = vector.broadcast %cst_410 : f32 to vector<2x2xf32>
    %799 = arith.select %797, %795, %798 : vector<2x2xi1>, vector<2x2xf32>
    %cst_411 = arith.constant dense<0xFF800000> : vector<2xf32>
    %800 = vector.multi_reduction <maximumf>, %799, %cst_411 [1] : vector<2x2xf32> to vector<2xf32>
    %801 = vector.shape_cast %800 : vector<2xf32> to vector<2x1xf32>
    %802 = vector.broadcast %801 : vector<2x1xf32> to vector<2x2xf32>
    %803 = arith.subf %799, %802 : vector<2x2xf32>
    %804 = math.exp %803 : vector<2x2xf32>
    %cst_412 = arith.constant dense<0.000000e+00> : vector<2xf32>
    %805 = vector.multi_reduction <add>, %804, %cst_412 [1] : vector<2x2xf32> to vector<2xf32>
    %806 = vector.shape_cast %805 : vector<2xf32> to vector<2x1xf32>
    %807 = vector.broadcast %806 : vector<2x1xf32> to vector<2x2xf32>
    %808 = arith.divf %804, %807 : vector<2x2xf32>
    %cst_413 = arith.constant dense<0.000000e+00> : vector<2x8xf32>
    %809 = tpu.matmul %808, %792, %cst_413 {dimension_numbers = #tpu.dot_dimension_numbers<[1], [0], [0], [1], [0, 0, 1, 1], [], []>} : vector<2x2xf32>, vector<2x8xf32>, vector<2x8xf32> -> vector<2x8xf32>
    %c0_414 = arith.constant 0 : index
    %c32_415 = arith.constant 32 : index
    %810 = vector.load %arg5[%c0_414, %c32_415] : memref<16x160xf32, #tpu.memory_space<vmem>>, vector<2x16xf32>
    %c0_416 = arith.constant 0 : index
    %c96_417 = arith.constant 96 : index
    %811 = vector.load %arg5[%c0_416, %c96_417] : memref<16x160xf32, #tpu.memory_space<vmem>>, vector<2x16xf32>
    %c0_418 = arith.constant 0 : index
    %c144_419 = arith.constant 144 : index
    %812 = vector.load %arg5[%c0_418, %c144_419] : memref<16x160xf32, #tpu.memory_space<vmem>>, vector<2x8xf32>
    %cst_420 = arith.constant dense<0.000000e+00> : vector<2x2xf32>
    %813 = tpu.matmul %810, %811, %cst_420 {dimension_numbers = #tpu.dot_dimension_numbers<[1], [1], [0], [0], [0, 0, 1, 0], [], []>} : vector<2x16xf32>, vector<2x16xf32>, vector<2x2xf32> -> vector<2x2xf32>
    %cst_421 = arith.constant 2.500000e-01 : f32
    %814 = vector.broadcast %cst_421 : f32 to vector<2x2xf32>
    %815 = arith.mulf %813, %814 : vector<2x2xf32>
    %cst_422 = arith.constant -1.000000e+09 : f32
    %816 = vector.shape_cast %769 : vector<1x2xi1> to vector<1x2xi1>
    %817 = vector.broadcast %816 : vector<1x2xi1> to vector<2x2xi1>
    %818 = vector.broadcast %cst_422 : f32 to vector<2x2xf32>
    %819 = arith.select %817, %815, %818 : vector<2x2xi1>, vector<2x2xf32>
    %cst_423 = arith.constant dense<0xFF800000> : vector<2xf32>
    %820 = vector.multi_reduction <maximumf>, %819, %cst_423 [1] : vector<2x2xf32> to vector<2xf32>
    %821 = vector.shape_cast %820 : vector<2xf32> to vector<2x1xf32>
    %822 = vector.broadcast %821 : vector<2x1xf32> to vector<2x2xf32>
    %823 = arith.subf %819, %822 : vector<2x2xf32>
    %824 = math.exp %823 : vector<2x2xf32>
    %cst_424 = arith.constant dense<0.000000e+00> : vector<2xf32>
    %825 = vector.multi_reduction <add>, %824, %cst_424 [1] : vector<2x2xf32> to vector<2xf32>
    %826 = vector.shape_cast %825 : vector<2xf32> to vector<2x1xf32>
    %827 = vector.broadcast %826 : vector<2x1xf32> to vector<2x2xf32>
    %828 = arith.divf %824, %827 : vector<2x2xf32>
    %cst_425 = arith.constant dense<0.000000e+00> : vector<2x8xf32>
    %829 = tpu.matmul %828, %812, %cst_425 {dimension_numbers = #tpu.dot_dimension_numbers<[1], [0], [0], [1], [0, 0, 1, 1], [], []>} : vector<2x2xf32>, vector<2x8xf32>, vector<2x8xf32> -> vector<2x8xf32>
    %c0_426 = arith.constant 0 : index
    %c48_427 = arith.constant 48 : index
    %830 = vector.load %arg5[%c0_426, %c48_427] : memref<16x160xf32, #tpu.memory_space<vmem>>, vector<2x16xf32>
    %c0_428 = arith.constant 0 : index
    %c112_429 = arith.constant 112 : index
    %831 = vector.load %arg5[%c0_428, %c112_429] : memref<16x160xf32, #tpu.memory_space<vmem>>, vector<2x16xf32>
    %c0_430 = arith.constant 0 : index
    %c152_431 = arith.constant 152 : index
    %832 = vector.load %arg5[%c0_430, %c152_431] : memref<16x160xf32, #tpu.memory_space<vmem>>, vector<2x8xf32>
    %cst_432 = arith.constant dense<0.000000e+00> : vector<2x2xf32>
    %833 = tpu.matmul %830, %831, %cst_432 {dimension_numbers = #tpu.dot_dimension_numbers<[1], [1], [0], [0], [0, 0, 1, 0], [], []>} : vector<2x16xf32>, vector<2x16xf32>, vector<2x2xf32> -> vector<2x2xf32>
    %cst_433 = arith.constant 2.500000e-01 : f32
    %834 = vector.broadcast %cst_433 : f32 to vector<2x2xf32>
    %835 = arith.mulf %833, %834 : vector<2x2xf32>
    %cst_434 = arith.constant -1.000000e+09 : f32
    %836 = vector.shape_cast %769 : vector<1x2xi1> to vector<1x2xi1>
    %837 = vector.broadcast %836 : vector<1x2xi1> to vector<2x2xi1>
    %838 = vector.broadcast %cst_434 : f32 to vector<2x2xf32>
    %839 = arith.select %837, %835, %838 : vector<2x2xi1>, vector<2x2xf32>
    %cst_435 = arith.constant dense<0xFF800000> : vector<2xf32>
    %840 = vector.multi_reduction <maximumf>, %839, %cst_435 [1] : vector<2x2xf32> to vector<2xf32>
    %841 = vector.shape_cast %840 : vector<2xf32> to vector<2x1xf32>
    %842 = vector.broadcast %841 : vector<2x1xf32> to vector<2x2xf32>
    %843 = arith.subf %839, %842 : vector<2x2xf32>
    %844 = math.exp %843 : vector<2x2xf32>
    %cst_436 = arith.constant dense<0.000000e+00> : vector<2xf32>
    %845 = vector.multi_reduction <add>, %844, %cst_436 [1] : vector<2x2xf32> to vector<2xf32>
    %846 = vector.shape_cast %845 : vector<2xf32> to vector<2x1xf32>
    %847 = vector.broadcast %846 : vector<2x1xf32> to vector<2x2xf32>
    %848 = arith.divf %844, %847 : vector<2x2xf32>
    %cst_437 = arith.constant dense<0.000000e+00> : vector<2x8xf32>
    %849 = tpu.matmul %848, %832, %cst_437 {dimension_numbers = #tpu.dot_dimension_numbers<[1], [0], [0], [1], [0, 0, 1, 1], [], []>} : vector<2x2xf32>, vector<2x8xf32>, vector<2x8xf32> -> vector<2x8xf32>
    %850 = tpu.concatenate %789, %809, %829, %849 in 1 : vector<2x8xf32>, vector<2x8xf32>, vector<2x8xf32>, vector<2x8xf32> -> vector<2x32xf32>
    %851 = vector.extract_strided_slice %744 {offsets = [1, 0], sizes = [1, 2], strides = [1, 1]} : vector<2x8xf32> to vector<1x2xf32>
    %cst_438 = arith.constant 0.000000e+00 : f32
    %852 = vector.broadcast %cst_438 : f32 to vector<1x2xf32>
    %853 = arith.cmpf ogt, %851, %852 : vector<1x2xf32>
    %c2_439 = arith.constant 2 : index
    %c0_440 = arith.constant 0 : index
    %854 = vector.load %arg5[%c2_439, %c0_440] : memref<16x160xf32, #tpu.memory_space<vmem>>, vector<2x16xf32>
    %c2_441 = arith.constant 2 : index
    %c64_442 = arith.constant 64 : index
    %855 = vector.load %arg5[%c2_441, %c64_442] : memref<16x160xf32, #tpu.memory_space<vmem>>, vector<2x16xf32>
    %c2_443 = arith.constant 2 : index
    %c128_444 = arith.constant 128 : index
    %856 = vector.load %arg5[%c2_443, %c128_444] : memref<16x160xf32, #tpu.memory_space<vmem>>, vector<2x8xf32>
    %cst_445 = arith.constant dense<0.000000e+00> : vector<2x2xf32>
    %857 = tpu.matmul %854, %855, %cst_445 {dimension_numbers = #tpu.dot_dimension_numbers<[1], [1], [0], [0], [0, 0, 1, 0], [], []>} : vector<2x16xf32>, vector<2x16xf32>, vector<2x2xf32> -> vector<2x2xf32>
    %cst_446 = arith.constant 2.500000e-01 : f32
    %858 = vector.broadcast %cst_446 : f32 to vector<2x2xf32>
    %859 = arith.mulf %857, %858 : vector<2x2xf32>
    %cst_447 = arith.constant -1.000000e+09 : f32
    %860 = vector.shape_cast %853 : vector<1x2xi1> to vector<1x2xi1>
    %861 = vector.broadcast %860 : vector<1x2xi1> to vector<2x2xi1>
    %862 = vector.broadcast %cst_447 : f32 to vector<2x2xf32>
    %863 = arith.select %861, %859, %862 : vector<2x2xi1>, vector<2x2xf32>
    %cst_448 = arith.constant dense<0xFF800000> : vector<2xf32>
    %864 = vector.multi_reduction <maximumf>, %863, %cst_448 [1] : vector<2x2xf32> to vector<2xf32>
    %865 = vector.shape_cast %864 : vector<2xf32> to vector<2x1xf32>
    %866 = vector.broadcast %865 : vector<2x1xf32> to vector<2x2xf32>
    %867 = arith.subf %863, %866 : vector<2x2xf32>
    %868 = math.exp %867 : vector<2x2xf32>
    %cst_449 = arith.constant dense<0.000000e+00> : vector<2xf32>
    %869 = vector.multi_reduction <add>, %868, %cst_449 [1] : vector<2x2xf32> to vector<2xf32>
    %870 = vector.shape_cast %869 : vector<2xf32> to vector<2x1xf32>
    %871 = vector.broadcast %870 : vector<2x1xf32> to vector<2x2xf32>
    %872 = arith.divf %868, %871 : vector<2x2xf32>
    %cst_450 = arith.constant dense<0.000000e+00> : vector<2x8xf32>
    %873 = tpu.matmul %872, %856, %cst_450 {dimension_numbers = #tpu.dot_dimension_numbers<[1], [0], [0], [1], [0, 0, 1, 1], [], []>} : vector<2x2xf32>, vector<2x8xf32>, vector<2x8xf32> -> vector<2x8xf32>
    %c2_451 = arith.constant 2 : index
    %c16_452 = arith.constant 16 : index
    %874 = vector.load %arg5[%c2_451, %c16_452] : memref<16x160xf32, #tpu.memory_space<vmem>>, vector<2x16xf32>
    %c2_453 = arith.constant 2 : index
    %c80_454 = arith.constant 80 : index
    %875 = vector.load %arg5[%c2_453, %c80_454] : memref<16x160xf32, #tpu.memory_space<vmem>>, vector<2x16xf32>
    %c2_455 = arith.constant 2 : index
    %c136_456 = arith.constant 136 : index
    %876 = vector.load %arg5[%c2_455, %c136_456] : memref<16x160xf32, #tpu.memory_space<vmem>>, vector<2x8xf32>
    %cst_457 = arith.constant dense<0.000000e+00> : vector<2x2xf32>
    %877 = tpu.matmul %874, %875, %cst_457 {dimension_numbers = #tpu.dot_dimension_numbers<[1], [1], [0], [0], [0, 0, 1, 0], [], []>} : vector<2x16xf32>, vector<2x16xf32>, vector<2x2xf32> -> vector<2x2xf32>
    %cst_458 = arith.constant 2.500000e-01 : f32
    %878 = vector.broadcast %cst_458 : f32 to vector<2x2xf32>
    %879 = arith.mulf %877, %878 : vector<2x2xf32>
    %cst_459 = arith.constant -1.000000e+09 : f32
    %880 = vector.shape_cast %853 : vector<1x2xi1> to vector<1x2xi1>
    %881 = vector.broadcast %880 : vector<1x2xi1> to vector<2x2xi1>
    %882 = vector.broadcast %cst_459 : f32 to vector<2x2xf32>
    %883 = arith.select %881, %879, %882 : vector<2x2xi1>, vector<2x2xf32>
    %cst_460 = arith.constant dense<0xFF800000> : vector<2xf32>
    %884 = vector.multi_reduction <maximumf>, %883, %cst_460 [1] : vector<2x2xf32> to vector<2xf32>
    %885 = vector.shape_cast %884 : vector<2xf32> to vector<2x1xf32>
    %886 = vector.broadcast %885 : vector<2x1xf32> to vector<2x2xf32>
    %887 = arith.subf %883, %886 : vector<2x2xf32>
    %888 = math.exp %887 : vector<2x2xf32>
    %cst_461 = arith.constant dense<0.000000e+00> : vector<2xf32>
    %889 = vector.multi_reduction <add>, %888, %cst_461 [1] : vector<2x2xf32> to vector<2xf32>
    %890 = vector.shape_cast %889 : vector<2xf32> to vector<2x1xf32>
    %891 = vector.broadcast %890 : vector<2x1xf32> to vector<2x2xf32>
    %892 = arith.divf %888, %891 : vector<2x2xf32>
    %cst_462 = arith.constant dense<0.000000e+00> : vector<2x8xf32>
    %893 = tpu.matmul %892, %876, %cst_462 {dimension_numbers = #tpu.dot_dimension_numbers<[1], [0], [0], [1], [0, 0, 1, 1], [], []>} : vector<2x2xf32>, vector<2x8xf32>, vector<2x8xf32> -> vector<2x8xf32>
    %c2_463 = arith.constant 2 : index
    %c32_464 = arith.constant 32 : index
    %894 = vector.load %arg5[%c2_463, %c32_464] : memref<16x160xf32, #tpu.memory_space<vmem>>, vector<2x16xf32>
    %c2_465 = arith.constant 2 : index
    %c96_466 = arith.constant 96 : index
    %895 = vector.load %arg5[%c2_465, %c96_466] : memref<16x160xf32, #tpu.memory_space<vmem>>, vector<2x16xf32>
    %c2_467 = arith.constant 2 : index
    %c144_468 = arith.constant 144 : index
    %896 = vector.load %arg5[%c2_467, %c144_468] : memref<16x160xf32, #tpu.memory_space<vmem>>, vector<2x8xf32>
    %cst_469 = arith.constant dense<0.000000e+00> : vector<2x2xf32>
    %897 = tpu.matmul %894, %895, %cst_469 {dimension_numbers = #tpu.dot_dimension_numbers<[1], [1], [0], [0], [0, 0, 1, 0], [], []>} : vector<2x16xf32>, vector<2x16xf32>, vector<2x2xf32> -> vector<2x2xf32>
    %cst_470 = arith.constant 2.500000e-01 : f32
    %898 = vector.broadcast %cst_470 : f32 to vector<2x2xf32>
    %899 = arith.mulf %897, %898 : vector<2x2xf32>
    %cst_471 = arith.constant -1.000000e+09 : f32
    %900 = vector.shape_cast %853 : vector<1x2xi1> to vector<1x2xi1>
    %901 = vector.broadcast %900 : vector<1x2xi1> to vector<2x2xi1>
    %902 = vector.broadcast %cst_471 : f32 to vector<2x2xf32>
    %903 = arith.select %901, %899, %902 : vector<2x2xi1>, vector<2x2xf32>
    %cst_472 = arith.constant dense<0xFF800000> : vector<2xf32>
    %904 = vector.multi_reduction <maximumf>, %903, %cst_472 [1] : vector<2x2xf32> to vector<2xf32>
    %905 = vector.shape_cast %904 : vector<2xf32> to vector<2x1xf32>
    %906 = vector.broadcast %905 : vector<2x1xf32> to vector<2x2xf32>
    %907 = arith.subf %903, %906 : vector<2x2xf32>
    %908 = math.exp %907 : vector<2x2xf32>
    %cst_473 = arith.constant dense<0.000000e+00> : vector<2xf32>
    %909 = vector.multi_reduction <add>, %908, %cst_473 [1] : vector<2x2xf32> to vector<2xf32>
    %910 = vector.shape_cast %909 : vector<2xf32> to vector<2x1xf32>
    %911 = vector.broadcast %910 : vector<2x1xf32> to vector<2x2xf32>
    %912 = arith.divf %908, %911 : vector<2x2xf32>
    %cst_474 = arith.constant dense<0.000000e+00> : vector<2x8xf32>
    %913 = tpu.matmul %912, %896, %cst_474 {dimension_numbers = #tpu.dot_dimension_numbers<[1], [0], [0], [1], [0, 0, 1, 1], [], []>} : vector<2x2xf32>, vector<2x8xf32>, vector<2x8xf32> -> vector<2x8xf32>
    %c2_475 = arith.constant 2 : index
    %c48_476 = arith.constant 48 : index
    %914 = vector.load %arg5[%c2_475, %c48_476] : memref<16x160xf32, #tpu.memory_space<vmem>>, vector<2x16xf32>
    %c2_477 = arith.constant 2 : index
    %c112_478 = arith.constant 112 : index
    %915 = vector.load %arg5[%c2_477, %c112_478] : memref<16x160xf32, #tpu.memory_space<vmem>>, vector<2x16xf32>
    %c2_479 = arith.constant 2 : index
    %c152_480 = arith.constant 152 : index
    %916 = vector.load %arg5[%c2_479, %c152_480] : memref<16x160xf32, #tpu.memory_space<vmem>>, vector<2x8xf32>
    %cst_481 = arith.constant dense<0.000000e+00> : vector<2x2xf32>
    %917 = tpu.matmul %914, %915, %cst_481 {dimension_numbers = #tpu.dot_dimension_numbers<[1], [1], [0], [0], [0, 0, 1, 0], [], []>} : vector<2x16xf32>, vector<2x16xf32>, vector<2x2xf32> -> vector<2x2xf32>
    %cst_482 = arith.constant 2.500000e-01 : f32
    %918 = vector.broadcast %cst_482 : f32 to vector<2x2xf32>
    %919 = arith.mulf %917, %918 : vector<2x2xf32>
    %cst_483 = arith.constant -1.000000e+09 : f32
    %920 = vector.shape_cast %853 : vector<1x2xi1> to vector<1x2xi1>
    %921 = vector.broadcast %920 : vector<1x2xi1> to vector<2x2xi1>
    %922 = vector.broadcast %cst_483 : f32 to vector<2x2xf32>
    %923 = arith.select %921, %919, %922 : vector<2x2xi1>, vector<2x2xf32>
    %cst_484 = arith.constant dense<0xFF800000> : vector<2xf32>
    %924 = vector.multi_reduction <maximumf>, %923, %cst_484 [1] : vector<2x2xf32> to vector<2xf32>
    %925 = vector.shape_cast %924 : vector<2xf32> to vector<2x1xf32>
    %926 = vector.broadcast %925 : vector<2x1xf32> to vector<2x2xf32>
    %927 = arith.subf %923, %926 : vector<2x2xf32>
    %928 = math.exp %927 : vector<2x2xf32>
    %cst_485 = arith.constant dense<0.000000e+00> : vector<2xf32>
    %929 = vector.multi_reduction <add>, %928, %cst_485 [1] : vector<2x2xf32> to vector<2xf32>
    %930 = vector.shape_cast %929 : vector<2xf32> to vector<2x1xf32>
    %931 = vector.broadcast %930 : vector<2x1xf32> to vector<2x2xf32>
    %932 = arith.divf %928, %931 : vector<2x2xf32>
    %cst_486 = arith.constant dense<0.000000e+00> : vector<2x8xf32>
    %933 = tpu.matmul %932, %916, %cst_486 {dimension_numbers = #tpu.dot_dimension_numbers<[1], [0], [0], [1], [0, 0, 1, 1], [], []>} : vector<2x2xf32>, vector<2x8xf32>, vector<2x8xf32> -> vector<2x8xf32>
    %934 = tpu.concatenate %873, %893, %913, %933 in 1 : vector<2x8xf32>, vector<2x8xf32>, vector<2x8xf32>, vector<2x8xf32> -> vector<2x32xf32>
    %935 = tpu.concatenate %850, %934 in 0 : vector<2x32xf32>, vector<2x32xf32> -> vector<4x32xf32>
    %cst_487 = arith.constant dense<0.000000e+00> : vector<4x32xf32>
    %936 = tpu.matmul %935, %759, %cst_487 {dimension_numbers = #tpu.dot_dimension_numbers<[1], [0], [0], [1], [0, 0, 1, 1], [], []>} : vector<4x32xf32>, vector<32x32xf32>, vector<4x32xf32> -> vector<4x32xf32>
    %c25 = arith.constant 25 : index
    %c0_488 = arith.constant 0 : index
    %937 = vector.load %arg3[%c25, %c0_488] : memref<34x160xf32, #tpu.memory_space<vmem>>, vector<1x32xf32>
    %938 = vector.broadcast %937 : vector<1x32xf32> to vector<4x32xf32>
    %939 = arith.addf %936, %938 : vector<4x32xf32>
    %c26 = arith.constant 26 : index
    %c0_489 = arith.constant 0 : index
    %940 = vector.load %arg3[%c26, %c0_489] : memref<34x160xf32, #tpu.memory_space<vmem>>, vector<1x32xf32>
    %c27 = arith.constant 27 : index
    %c0_490 = arith.constant 0 : index
    %941 = vector.load %arg3[%c27, %c0_490] : memref<34x160xf32, #tpu.memory_space<vmem>>, vector<1x32xf32>
    %cst_491 = arith.constant dense<0.000000e+00> : vector<4xf32>
    %942 = vector.multi_reduction <add>, %939, %cst_491 [1] : vector<4x32xf32> to vector<4xf32>
    %943 = vector.shape_cast %942 : vector<4xf32> to vector<4x1xf32>
    %cst_492 = arith.constant 3.200000e+01 : f32
    %944 = vector.broadcast %cst_492 : f32 to vector<4x1xf32>
    %945 = arith.divf %943, %944 : vector<4x1xf32>
    %946 = vector.broadcast %945 : vector<4x1xf32> to vector<4x32xf32>
    %947 = arith.subf %939, %946 : vector<4x32xf32>
    %948 = arith.mulf %947, %947 : vector<4x32xf32>
    %cst_493 = arith.constant dense<0.000000e+00> : vector<4xf32>
    %949 = vector.multi_reduction <add>, %948, %cst_493 [1] : vector<4x32xf32> to vector<4xf32>
    %950 = vector.shape_cast %949 : vector<4xf32> to vector<4x1xf32>
    %cst_494 = arith.constant 3.100000e+01 : f32
    %951 = vector.broadcast %cst_494 : f32 to vector<4x1xf32>
    %952 = arith.divf %950, %951 : vector<4x1xf32>
    %953 = math.sqrt %952 : vector<4x1xf32>
    %cst_495 = arith.constant 9.99999974E-6 : f32
    %954 = vector.broadcast %cst_495 : f32 to vector<4x1xf32>
    %955 = arith.addf %953, %954 : vector<4x1xf32>
    %956 = vector.broadcast %955 : vector<4x1xf32> to vector<4x32xf32>
    %957 = arith.divf %947, %956 : vector<4x32xf32>
    %958 = vector.broadcast %940 : vector<1x32xf32> to vector<4x32xf32>
    %959 = arith.mulf %958, %957 : vector<4x32xf32>
    %960 = vector.broadcast %941 : vector<1x32xf32> to vector<4x32xf32>
    %961 = arith.addf %959, %960 : vector<4x32xf32>
    %cst_496 = arith.constant dense<0.000000e+00> : vector<4x64xf32>
    %962 = tpu.matmul %961, %760, %cst_496 {dimension_numbers = #tpu.dot_dimension_numbers<[1], [0], [0], [1], [0, 0, 1, 1], [], []>} : vector<4x32xf32>, vector<32x64xf32>, vector<4x64xf32> -> vector<4x64xf32>
    %c28 = arith.constant 28 : index
    %c0_497 = arith.constant 0 : index
    %963 = vector.load %arg3[%c28, %c0_497] : memref<34x160xf32, #tpu.memory_space<vmem>>, vector<1x64xf32>
    %964 = vector.broadcast %963 : vector<1x64xf32> to vector<4x64xf32>
    %965 = arith.addf %962, %964 : vector<4x64xf32>
    %cst_498 = arith.constant 0.000000e+00 : f32
    %966 = vector.broadcast %cst_498 : f32 to vector<4x64xf32>
    %967 = arith.maximumf %965, %966 : vector<4x64xf32>
    %cst_499 = arith.constant dense<0.000000e+00> : vector<4x32xf32>
    %968 = tpu.matmul %967, %761, %cst_499 {dimension_numbers = #tpu.dot_dimension_numbers<[1], [0], [0], [1], [0, 0, 1, 1], [], []>} : vector<4x64xf32>, vector<64x32xf32>, vector<4x32xf32> -> vector<4x32xf32>
    %c29 = arith.constant 29 : index
    %c0_500 = arith.constant 0 : index
    %969 = vector.load %arg3[%c29, %c0_500] : memref<34x160xf32, #tpu.memory_space<vmem>>, vector<1x32xf32>
    %970 = vector.broadcast %969 : vector<1x32xf32> to vector<4x32xf32>
    %971 = arith.addf %968, %970 : vector<4x32xf32>
    %972 = arith.addf %961, %971 : vector<4x32xf32>
    %c30 = arith.constant 30 : index
    %c0_501 = arith.constant 0 : index
    %973 = vector.load %arg3[%c30, %c0_501] : memref<34x160xf32, #tpu.memory_space<vmem>>, vector<1x32xf32>
    %c31 = arith.constant 31 : index
    %c0_502 = arith.constant 0 : index
    %974 = vector.load %arg3[%c31, %c0_502] : memref<34x160xf32, #tpu.memory_space<vmem>>, vector<1x32xf32>
    %cst_503 = arith.constant dense<0.000000e+00> : vector<4xf32>
    %975 = vector.multi_reduction <add>, %972, %cst_503 [1] : vector<4x32xf32> to vector<4xf32>
    %976 = vector.shape_cast %975 : vector<4xf32> to vector<4x1xf32>
    %cst_504 = arith.constant 3.200000e+01 : f32
    %977 = vector.broadcast %cst_504 : f32 to vector<4x1xf32>
    %978 = arith.divf %976, %977 : vector<4x1xf32>
    %979 = vector.broadcast %978 : vector<4x1xf32> to vector<4x32xf32>
    %980 = arith.subf %972, %979 : vector<4x32xf32>
    %981 = arith.mulf %980, %980 : vector<4x32xf32>
    %cst_505 = arith.constant dense<0.000000e+00> : vector<4xf32>
    %982 = vector.multi_reduction <add>, %981, %cst_505 [1] : vector<4x32xf32> to vector<4xf32>
    %983 = vector.shape_cast %982 : vector<4xf32> to vector<4x1xf32>
    %cst_506 = arith.constant 3.100000e+01 : f32
    %984 = vector.broadcast %cst_506 : f32 to vector<4x1xf32>
    %985 = arith.divf %983, %984 : vector<4x1xf32>
    %986 = math.sqrt %985 : vector<4x1xf32>
    %cst_507 = arith.constant 9.99999974E-6 : f32
    %987 = vector.broadcast %cst_507 : f32 to vector<4x1xf32>
    %988 = arith.addf %986, %987 : vector<4x1xf32>
    %989 = vector.broadcast %988 : vector<4x1xf32> to vector<4x32xf32>
    %990 = arith.divf %980, %989 : vector<4x32xf32>
    %991 = vector.broadcast %973 : vector<1x32xf32> to vector<4x32xf32>
    %992 = arith.mulf %991, %990 : vector<4x32xf32>
    %993 = vector.broadcast %974 : vector<1x32xf32> to vector<4x32xf32>
    %994 = arith.addf %992, %993 : vector<4x32xf32>
    %c32_508 = arith.constant 32 : index
    %c0_509 = arith.constant 0 : index
    %995 = vector.load %arg3[%c32_508, %c0_509] : memref<34x160xf32, #tpu.memory_space<vmem>>, vector<1x32xf32>
    %c33 = arith.constant 33 : index
    %c0_510 = arith.constant 0 : index
    %996 = vector.load %arg3[%c33, %c0_510] : memref<34x160xf32, #tpu.memory_space<vmem>>, vector<1x32xf32>
    %cst_511 = arith.constant dense<0.000000e+00> : vector<4xf32>
    %997 = vector.multi_reduction <add>, %994, %cst_511 [1] : vector<4x32xf32> to vector<4xf32>
    %998 = vector.shape_cast %997 : vector<4xf32> to vector<4x1xf32>
    %cst_512 = arith.constant 3.200000e+01 : f32
    %999 = vector.broadcast %cst_512 : f32 to vector<4x1xf32>
    %1000 = arith.divf %998, %999 : vector<4x1xf32>
    %1001 = vector.broadcast %1000 : vector<4x1xf32> to vector<4x32xf32>
    %1002 = arith.subf %994, %1001 : vector<4x32xf32>
    %1003 = arith.mulf %1002, %1002 : vector<4x32xf32>
    %cst_513 = arith.constant dense<0.000000e+00> : vector<4xf32>
    %1004 = vector.multi_reduction <add>, %1003, %cst_513 [1] : vector<4x32xf32> to vector<4xf32>
    %1005 = vector.shape_cast %1004 : vector<4xf32> to vector<4x1xf32>
    %cst_514 = arith.constant 3.100000e+01 : f32
    %1006 = vector.broadcast %cst_514 : f32 to vector<4x1xf32>
    %1007 = arith.divf %1005, %1006 : vector<4x1xf32>
    %1008 = math.sqrt %1007 : vector<4x1xf32>
    %cst_515 = arith.constant 9.99999974E-6 : f32
    %1009 = vector.broadcast %cst_515 : f32 to vector<4x1xf32>
    %1010 = arith.addf %1008, %1009 : vector<4x1xf32>
    %1011 = vector.broadcast %1010 : vector<4x1xf32> to vector<4x32xf32>
    %1012 = arith.divf %1002, %1011 : vector<4x32xf32>
    %1013 = vector.broadcast %995 : vector<1x32xf32> to vector<4x32xf32>
    %1014 = arith.mulf %1013, %1012 : vector<4x32xf32>
    %1015 = vector.broadcast %996 : vector<1x32xf32> to vector<4x32xf32>
    %1016 = arith.addf %1014, %1015 : vector<4x32xf32>
    %c0_516 = arith.constant 0 : index
    %c0_517 = arith.constant 0 : index
    %1017 = vector.load %arg4[%c0_516, %c0_517] : memref<4x32xf32, #tpu.memory_space<vmem>>, vector<4x32xf32>
    tpu.vector_store %arg4[%c0_516, %c0_517], %1016 {strides = array<i32>} : memref<4x32xf32, #tpu.memory_space<vmem>>, vector<4x32xf32>,
    return
  }
}

</mosaic_0001>

<llo_original>
// kernel: tpu_custom_call.1
$region0: #{tpu_custom_call.1}
  #allocation0 [shape = 'u32[]', space=smem, size = 0x4, offset = 0x4, fixed_abs, tag = 'smem constant byte address 0x4 - core index']
  #allocation1 [shape = 'u32[72,128]{1,0:T(1,128)}', space=vmem, size = 0x9000, scoped, tag = 'internal scratch']
  #allocation2 [shape = 'f32[16,160]{1,0:T(8,128)}', space=vmem, size = 0x4000, scoped, tag = 'scratch operand']
  %s0 = inlined_call_operand.vmem [shape: f32[16,32], index: 0, kind: input, shape index: {}]
  %s1 = inlined_call_operand.vmem [shape: f32[3,2,8], index: 1, kind: input, shape index: {}]
  %s2 = inlined_call_operand.vmem [shape: f32[704,160], index: 2, kind: input, shape index: {}]
  %s3 = inlined_call_operand.vmem [shape: f32[34,160], index: 3, kind: input, shape index: {}]
  %s4 = inlined_call_operand.hbm [shape: f32[4,32], index: 4, kind: output, shape index: {}]
  %s5 = sld [smem:[#allocation0]]
  $region26: #{tpu_custom_call.1} parent=0
    _
  %s7 = ssub.s32 1, %s5
  %s8 = scalar_select 0, %s7, %s5
  $region1: #{tpu_custom_call.1} parent=0
    #allocation3 [shape = 'u8[2048]{0}', space=vmem, size = 0x800, scoped, tag = 'output window, operand 0, single buffered']
    #allocation4 [shape = 's32[1]{0}', space=sflag, size = 0x4, scoped, tag = 'scoped memory for tpu_custom_call.1']
    %9 = vsyncpa [#allocation4], 0
    // Predicated region
    $region2: #{tpu_custom_call.1} parent=1 // pred_check
      _
    $region3: #{tpu_custom_call.1} parent=1 // pred_check_branch
      %11 = sbr.rel (0) target = $region5
    $region4: #{tpu_custom_call.1} parent=1 // pred_region
      _
    $region5: #{tpu_custom_call.1} parent=1 // pred_fallthru
      _
    // Predicated region
    $region6: #{tpu_custom_call.1} parent=1 // pred_check
      _
    $region7: #{tpu_custom_call.1} parent=1 // pred_check_branch
      %13 = sbr.rel (0) target = $region9
    $region8: #{tpu_custom_call.1} parent=1 // pred_region
      _
    $region9: #{tpu_custom_call.1} parent=1 // pred_fallthru
      _
    // Predicated region
    $region10: #{tpu_custom_call.1} parent=1 // pred_check
      _
    $region11: #{tpu_custom_call.1} parent=1 // pred_check_branch
      %15 = sbr.rel (0) target = $region13
    $region12: #{tpu_custom_call.1} parent=1 // pred_region
      _
    $region13: #{tpu_custom_call.1} parent=1 // pred_fallthru
      _
    // Predicated region
    $region14: #{tpu_custom_call.1} parent=1 // pred_check
      _
    $region15: #{tpu_custom_call.1} parent=1 // pred_check_branch
      %17 = sbr.rel (0) target = $region17
    $region16: #{tpu_custom_call.1} parent=1 // pred_region
      _
    $region17: #{tpu_custom_call.1} parent=1 // pred_fallthru
      _
    %v18 = vld [vmem:[%s0] sm:$0xff]
    %v19 = vld [vmem:[%s0 + $0x8] sm:$0xff]
    %v20 = vld [vmem:[%s1] sm:$0x3]
    %v21 = vld [vmem:[%s2] sm:$0xff]
    %v22 = vld [vmem:[%s2 + $0x10] sm:$0xff]
    %v23 = vld [vmem:[%s2 + $0x20] sm:$0xff]
    %v24 = vld [vmem:[%s2 + $0x30] sm:$0xff]
    %v25 = vld [vmem:[%s2 + $0x40] sm:$0xff]
    %v26 = vld [vmem:[%s2 + $0x50] sm:$0xff]
    %v27 = vld [vmem:[%s2 + $0x60] sm:$0xff]
    %v28 = vld [vmem:[%s2 + $0x70] sm:$0xff]
    %v29 = vld [vmem:[%s2 + $0x80] sm:$0xff]
    %v30 = vld [vmem:[%s2 + $0x90] sm:$0xff]
    %v31 = vld [vmem:[%s2 + $0xa0] sm:$0xff]
    %v32 = vld [vmem:[%s2 + $0xb0] sm:$0xff]
    %v33 = vld [vmem:[%s2 + $0xc0] sm:$0xff]
    %v34 = vld [vmem:[%s2 + $0xd0] sm:$0xff]
    %v35 = vld [vmem:[%s2 + $0xe0] sm:$0xff]
    %v36 = vld [vmem:[%s2 + $0xf0] sm:$0xff]
    %v37 = vld [vmem:[%s2 + $0x100] sm:$0xff]
    %v38 = vld [vmem:[%s2 + $0x110] sm:$0xff]
    %v39 = vld [vmem:[%s2 + $0x120] sm:$0xff]
    %v40 = vld [vmem:[%s2 + $0x130] sm:$0xff]
    %v41 = vld [vmem:[%s3] ss:$0 sm:$0xff]
    %vm42 = vcmask 261120
    %v44 = vsel %vm42, %v18, 0
    %v47 = vsel %vm42, %v19, 0
    %49 = vmatpush.msra.mxu0 0.0
    %50 = vmatpush.msra.mxu0 0.0
    %51 = vmatpush.msra.mxu0 0.0
    %52 = vmatpush.msra.mxu0 0.0
    %53 = vmatpush.msra.mxu0 0.0
    %54 = vmatpush.msra.mxu0 0.0
    %55 = vmatpush.msra.mxu0 0.0
    %56 = vmatpush.msra.mxu0 0.0
    %57 = vmatpush.msra.mxu0 0.0
    %58 = vmatpush.msra.mxu0 0.0
    %59 = vmatpush.msra.mxu0 0.0
    %60 = vmatpush.msra.mxu0 0.0
    %61 = vmatpush.msra.mxu0 %v24
    %62 = vmatpush.msra.mxu0 %v23
    %63 = vmatpush.msra.mxu0 %v22
    %64 = vmatpush.msra.mxu0 %v21
    %65 = vmatmul.f32.gmra.mxu0 %v44
    %v66 = vpop.f32.mrf.mxu0
    %v67 = vadd.f32 %v41, %v66
    %68 = vmatmul.f32.gmra.mxu0 %v47
    %v69 = vpop.f32.mrf.mxu0
    %v70 = vadd.f32 %v41, %v69
    %71 = vdwg.mxu0
    %vm72 = vcmask 785408
    %73 = vst.msk [vmem:[#allocation2] sm:$0xff] %vm72, %v67
    %74 = vst.msk [vmem:[#allocation2 + $0x10] sm:$0xff] %vm72, %v70
    %vm75 = vcmp.gt.f32.partialorder %v20, 0.0
    %v76 = vld [vmem:[#allocation2] sm:$0xff]
    %78 = vrot.lane.b32.xlu0 %v76, 96
    %v79 = vpop.permute.xlu0 %78
    %vm80 = vcmask 64512
    %v81 = vsel %vm80, %v76, 0
    %v83 = vsel %vm80, %v79, 0
    %85 = vmatpush.xpose.msra.mxu0 0.0
    %86 = vmatpush.xpose.msra.mxu0 0.0
    %87 = vmatpush.xpose.msra.mxu0 0.0
    %88 = vmatpush.xpose.msra.mxu0 0.0
    %89 = vmatpush.xpose.msra.mxu0 0.0
    %90 = vmatpush.xpose.msra.mxu0 0.0
    %91 = vmatpush.xpose.msra.mxu0 0.0
    %92 = vmatpush.xpose.msra.mxu0 0.0
    %93 = vmatpush.xpose.msra.mxu0 0.0
    %94 = vmatpush.xpose.msra.mxu0 0.0
    %95 = vmatpush.xpose.msra.mxu0 0.0
    %96 = vmatpush.xpose.msra.mxu0 0.0
    %97 = vmatpush.xpose.msra.mxu0 0.0
    %98 = vmatpush.xpose.msra.mxu0 0.0
    %99 = vmatpush.xpose.msra.mxu0 0.0
    %100 = vmatpush.xpose.msra.mxu0 %v83
    %101 = vmatmul.f32.gmra.mxu0 %v81
    %v102 = vpop.f32.mrf.mxu0
    %v103 = vadd.f32 0.0, %v102
    %104 = vdwg.mxu0
    %v105 = vmul.f32 %v103, 0.35355338
    %v106 = vsel %vm75, 1, 0
    %v107 = vperm.slane %v106, 0
    %vm108 = vcmp.eq.s32.totalorder %v107, 1
    %v109 = vsel %vm108, %v105, -1e+09
    %v110 = vsel %vm80, %v109, -inf
    %111 = vmax.xlane.f32.xlu0 %v110
    %v112 = vpop.xlane.xlu0 %111
    %v113 = vsub.f32 %v109, %v112
    %v114 = vmul.f32 %v113, 1.442695
    %v115 = vpow.pop %v114
    %v116 = vsel %vm80, %v115, 0.0
    %117 = vadd.xlane.f32.xlu0 %v116
    %v118 = vpop.xlane.xlu0 %117
    %v119 = vrcp.pop %v118
    %v120 = vmul.f32 %v118, %v119
    %v121 = vsub.f32 1.0, %v120
    %v122 = vmul.f32 %v119, %v121
    %v123 = vadd.f32 %v119, %v122
    %vm124 = vweird.f32 %v118
    %vm125 = vweird.f32 %v119
    %vm126 = vmor %vm124, %vm125
    %v127 = vsel %vm126, %v119, %v123
    %v128 = vand.u32 2147483647, %v118
    %vm129 = vcmp.eq.f32.partialorder %v128, 8.507059e+37
    %v130 = vand.u32 %v118, 2147483648
    %v131 = vor.u32 1.1754944e-38, %v130
    %v132 = vsel %vm129, %v131, %v127
    %v133 = vmul.f32 %v115, %v132
    %134 = vrot.lane.b32.xlu0 %v76, 64
    %v135 = vpop.permute.xlu0 %134
    %v138 = vsel %vm80, %v133, 0
    %140 = vmatpush.msra.mxu0 0.0
    %141 = vmatpush.msra.mxu0 0.0
    %142 = vmatpush.msra.mxu0 0.0
    %143 = vmatpush.msra.mxu0 0.0
    %144 = vmatpush.msra.mxu0 0.0
    %145 = vmatpush.msra.mxu0 0.0
    %146 = vmatpush.msra.mxu0 0.0
    %147 = vmatpush.msra.mxu0 0.0
    %148 = vmatpush.msra.mxu0 0.0
    %149 = vmatpush.msra.mxu0 0.0
    %150 = vmatpush.msra.mxu0 0.0
    %151 = vmatpush.msra.mxu0 0.0
    %152 = vmatpush.msra.mxu0 0.0
    %153 = vmatpush.msra.mxu0 0.0
    %154 = vmatpush.msra.mxu0 0.0
    %155 = vmatpush.msra.mxu0 %v135
    %156 = vmatmul.f32.gmra.mxu0 %v138
    %v157 = vpop.f32.mrf.mxu0
    %v158 = vadd.f32 0.0, %v157
    %159 = vdwg.mxu0
    %160 = vrot.lane.b32.xlu0 %v76, 120
    %v161 = vpop.permute.xlu0 %160
    %162 = vrot.lane.b32.xlu0 %v76, 88
    %v163 = vpop.permute.xlu0 %162
    %v164 = vsel %vm80, %v161, 0
    %v166 = vsel %vm80, %v163, 0
    %168 = vmatpush.xpose.msra.mxu0 0.0
    %169 = vmatpush.xpose.msra.mxu0 0.0
    %170 = vmatpush.xpose.msra.mxu0 0.0
    %171 = vmatpush.xpose.msra.mxu0 0.0
    %172 = vmatpush.xpose.msra.mxu0 0.0
    %173 = vmatpush.xpose.msra.mxu0 0.0
    %174 = vmatpush.xpose.msra.mxu0 0.0
    %175 = vmatpush.xpose.msra.mxu0 0.0
    %176 = vmatpush.xpose.msra.mxu0 0.0
    %177 = vmatpush.xpose.msra.mxu0 0.0
    %178 = vmatpush.xpose.msra.mxu0 0.0
    %179 = vmatpush.xpose.msra.mxu0 0.0
    %180 = vmatpush.xpose.msra.mxu0 0.0
    %181 = vmatpush.xpose.msra.mxu0 0.0
    %182 = vmatpush.xpose.msra.mxu0 0.0
    %183 = vmatpush.xpose.msra.mxu0 %v166
    %184 = vmatmul.f32.gmra.mxu0 %v164
    %v185 = vpop.f32.mrf.mxu0
    %v186 = vadd.f32 0.0, %v185
    %187 = vdwg.mxu0
    %v188 = vmul.f32 %v186, 0.35355338
    %v189 = vsel %vm108, %v188, -1e+09
    %v190 = vsel %vm80, %v189, -inf
    %191 = vmax.xlane.f32.xlu0 %v190
    %v192 = vpop.xlane.xlu0 %191
    %v193 = vsub.f32 %v189, %v192
    %v194 = vmul.f32 %v193, 1.442695
    %v195 = vpow.pop %v194
    %v196 = vsel %vm80, %v195, 0.0
    %197 = vadd.xlane.f32.xlu0 %v196
    %v198 = vpop.xlane.xlu0 %197
    %v199 = vrcp.pop %v198
    %v200 = vmul.f32 %v198, %v199
    %v201 = vsub.f32 1.0, %v200
    %v202 = vmul.f32 %v199, %v201
    %v203 = vadd.f32 %v199, %v202
    %vm204 = vweird.f32 %v198
    %vm205 = vweird.f32 %v199
    %vm206 = vmor %vm204, %vm205
    %v207 = vsel %vm206, %v199, %v203
    %v208 = vand.u32 2147483647, %v198
    %vm209 = vcmp.eq.f32.partialorder %v208, 8.507059e+37
    %v210 = vand.u32 %v198, 2147483648
    %v211 = vor.u32 1.1754944e-38, %v210
    %v212 = vsel %vm209, %v211, %v207
    %v213 = vmul.f32 %v195, %v212
    %214 = vrot.lane.b32.xlu0 %v76, 56
    %v215 = vpop.permute.xlu0 %214
    %v218 = vsel %vm80, %v213, 0
    %220 = vmatpush.msra.mxu0 0.0
    %221 = vmatpush.msra.mxu0 0.0
    %222 = vmatpush.msra.mxu0 0.0
    %223 = vmatpush.msra.mxu0 0.0
    %224 = vmatpush.msra.mxu0 0.0
    %225 = vmatpush.msra.mxu0 0.0
    %226 = vmatpush.msra.mxu0 0.0
    %227 = vmatpush.msra.mxu0 0.0
    %228 = vmatpush.msra.mxu0 0.0
    %229 = vmatpush.msra.mxu0 0.0
    %230 = vmatpush.msra.mxu0 0.0
    %231 = vmatpush.msra.mxu0 0.0
    %232 = vmatpush.msra.mxu0 0.0
    %233 = vmatpush.msra.mxu0 0.0
    %234 = vmatpush.msra.mxu0 0.0
    %235 = vmatpush.msra.mxu0 %v215
    %236 = vmatmul.f32.gmra.mxu0 %v218
    %v237 = vpop.f32.mrf.mxu0
    %v238 = vadd.f32 0.0, %v237
    %239 = vdwg.mxu0
    %240 = vrot.lane.b32.xlu0 %v76, 112
    %v241 = vpop.permute.xlu0 %240
    %242 = vrot.lane.b32.xlu0 %v76, 80
    %v243 = vpop.permute.xlu0 %242
    %v244 = vsel %vm80, %v241, 0
    %v246 = vsel %vm80, %v243, 0
    %248 = vmatpush.xpose.msra.mxu0 0.0
    %249 = vmatpush.xpose.msra.mxu0 0.0
    %250 = vmatpush.xpose.msra.mxu0 0.0
    %251 = vmatpush.xpose.msra.mxu0 0.0
    %252 = vmatpush.xpose.msra.mxu0 0.0
    %253 = vmatpush.xpose.msra.mxu0 0.0
    %254 = vmatpush.xpose.msra.mxu0 0.0
    %255 = vmatpush.xpose.msra.mxu0 0.0
    %256 = vmatpush.xpose.msra.mxu0 0.0
    %257 = vmatpush.xpose.msra.mxu0 0.0
    %258 = vmatpush.xpose.msra.mxu0 0.0
    %259 = vmatpush.xpose.msra.mxu0 0.0
    %260 = vmatpush.xpose.msra.mxu0 0.0
    %261 = vmatpush.xpose.msra.mxu0 0.0
    %262 = vmatpush.xpose.msra.mxu0 0.0
    %263 = vmatpush.xpose.msra.mxu0 %v246
    %264 = vmatmul.f32.gmra.mxu0 %v244
    %v265 = vpop.f32.mrf.mxu0
    %v266 = vadd.f32 0.0, %v265
    %267 = vdwg.mxu0
    %v268 = vmul.f32 %v266, 0.35355338
    %v269 = vsel %vm108, %v268, -1e+09
    %v270 = vsel %vm80, %v269, -inf
    %271 = vmax.xlane.f32.xlu0 %v270
    %v272 = vpop.xlane.xlu0 %271
    %v273 = vsub.f32 %v269, %v272
    %v274 = vmul.f32 %v273, 1.442695
    %v275 = vpow.pop %v274
    %v276 = vsel %vm80, %v275, 0.0
    %277 = vadd.xlane.f32.xlu0 %v276
    %v278 = vpop.xlane.xlu0 %277
    %v279 = vrcp.pop %v278
    %v280 = vmul.f32 %v278, %v279
    %v281 = vsub.f32 1.0, %v280
    %v282 = vmul.f32 %v279, %v281
    %v283 = vadd.f32 %v279, %v282
    %vm284 = vweird.f32 %v278
    %vm285 = vweird.f32 %v279
    %vm286 = vmor %vm284, %vm285
    %v287 = vsel %vm286, %v279, %v283
    %v288 = vand.u32 2147483647, %v278
    %vm289 = vcmp.eq.f32.partialorder %v288, 8.507059e+37
    %v290 = vand.u32 %v278, 2147483648
    %v291 = vor.u32 1.1754944e-38, %v290
    %v292 = vsel %vm289, %v291, %v287
    %v293 = vmul.f32 %v275, %v292
    %294 = vrot.lane.b32.xlu0 %v76, 48
    %v295 = vpop.permute.xlu0 %294
    %v298 = vsel %vm80, %v293, 0
    %300 = vmatpush.msra.mxu0 0.0
    %301 = vmatpush.msra.mxu0 0.0
    %302 = vmatpush.msra.mxu0 0.0
    %303 = vmatpush.msra.mxu0 0.0
    %304 = vmatpush.msra.mxu0 0.0
    %305 = vmatpush.msra.mxu0 0.0
    %306 = vmatpush.msra.mxu0 0.0
    %307 = vmatpush.msra.mxu0 0.0
    %308 = vmatpush.msra.mxu0 0.0
    %309 = vmatpush.msra.mxu0 0.0
    %310 = vmatpush.msra.mxu0 0.0
    %311 = vmatpush.msra.mxu0 0.0
    %312 = vmatpush.msra.mxu0 0.0
    %313 = vmatpush.msra.mxu0 0.0
    %314 = vmatpush.msra.mxu0 0.0
    %315 = vmatpush.msra.mxu0 %v295
    %316 = vmatmul.f32.gmra.mxu0 %v298
    %v317 = vpop.f32.mrf.mxu0
    %v318 = vadd.f32 0.0, %v317
    %319 = vdwg.mxu0
    %320 = vrot.lane.b32.xlu0 %v76, 104
    %v321 = vpop.permute.xlu0 %320
    %322 = vrot.lane.b32.xlu0 %v76, 72
    %v323 = vpop.permute.xlu0 %322
    %v324 = vsel %vm80, %v321, 0
    %v326 = vsel %vm80, %v323, 0
    %328 = vmatpush.xpose.msra.mxu0 0.0
    %329 = vmatpush.xpose.msra.mxu0 0.0
    %330 = vmatpush.xpose.msra.mxu0 0.0
    %331 = vmatpush.xpose.msra.mxu0 0.0
    %332 = vmatpush.xpose.msra.mxu0 0.0
    %333 = vmatpush.xpose.msra.mxu0 0.0
    %334 = vmatpush.xpose.msra.mxu0 0.0
    %335 = vmatpush.xpose.msra.mxu0 0.0
    %336 = vmatpush.xpose.msra.mxu0 0.0
    %337 = vmatpush.xpose.msra.mxu0 0.0
    %338 = vmatpush.xpose.msra.mxu0 0.0
    %339 = vmatpush.xpose.msra.mxu0 0.0
    %340 = vmatpush.xpose.msra.mxu0 0.0
    %341 = vmatpush.xpose.msra.mxu0 0.0
    %342 = vmatpush.xpose.msra.mxu0 0.0
    %343 = vmatpush.xpose.msra.mxu0 %v326
    %344 = vmatmul.f32.gmra.mxu0 %v324
    %v345 = vpop.f32.mrf.mxu0
    %v346 = vadd.f32 0.0, %v345
    %347 = vdwg.mxu0
    %v348 = vmul.f32 %v346, 0.35355338
    %v349 = vsel %vm108, %v348, -1e+09
    %v350 = vsel %vm80, %v349, -inf
    %351 = vmax.xlane.f32.xlu0 %v350
    %v352 = vpop.xlane.xlu0 %351
    %v353 = vsub.f32 %v349, %v352
    %v354 = vmul.f32 %v353, 1.442695
    %v355 = vpow.pop %v354
    %v356 = vsel %vm80, %v355, 0.0
    %357 = vadd.xlane.f32.xlu0 %v356
    %v358 = vpop.xlane.xlu0 %357
    %v359 = vrcp.pop %v358
    %v360 = vmul.f32 %v358, %v359
    %v361 = vsub.f32 1.0, %v360
    %v362 = vmul.f32 %v359, %v361
    %v363 = vadd.f32 %v359, %v362
    %vm364 = vweird.f32 %v358
    %vm365 = vweird.f32 %v359
    %vm366 = vmor %vm364, %vm365
    %v367 = vsel %vm366, %v359, %v363
    %v368 = vand.u32 2147483647, %v358
    %vm369 = vcmp.eq.f32.partialorder %v368, 8.507059e+37
    %v370 = vand.u32 %v358, 2147483648
    %v371 = vor.u32 1.1754944e-38, %v370
    %v372 = vsel %vm369, %v371, %v367
    %v373 = vmul.f32 %v355, %v372
    %374 = vrot.lane.b32.xlu0 %v76, 40
    %v375 = vpop.permute.xlu0 %374
    %v378 = vsel %vm80, %v373, 0
    %380 = vmatpush.msra.mxu0 0.0
    %381 = vmatpush.msra.mxu0 0.0
    %382 = vmatpush.msra.mxu0 0.0
    %383 = vmatpush.msra.mxu0 0.0
    %384 = vmatpush.msra.mxu0 0.0
    %385 = vmatpush.msra.mxu0 0.0
    %386 = vmatpush.msra.mxu0 0.0
    %387 = vmatpush.msra.mxu0 0.0
    %388 = vmatpush.msra.mxu0 0.0
    %389 = vmatpush.msra.mxu0 0.0
    %390 = vmatpush.msra.mxu0 0.0
    %391 = vmatpush.msra.mxu0 0.0
    %392 = vmatpush.msra.mxu0 0.0
    %393 = vmatpush.msra.mxu0 0.0
    %394 = vmatpush.msra.mxu0 0.0
    %395 = vmatpush.msra.mxu0 %v375
    %396 = vmatmul.f32.gmra.mxu0 %v378
    %v397 = vpop.f32.mrf.mxu0
    %v398 = vadd.f32 0.0, %v397
    %399 = vdwg.mxu0
    %401 = vrot.lane.b32.xlu0 %v238, 8
    %v402 = vpop.permute.xlu0 %401
    %405 = vrot.lane.b32.xlu0 %v318, 16
    %v406 = vpop.permute.xlu0 %405
    %409 = vrot.lane.b32.xlu0 %v398, 24
    %v410 = vpop.permute.xlu0 %409
    %v412 = vsel %vm80, %v158, %v402
    %vm413 = vcmask 130048
    %v414 = vsel %vm413, %v412, %v406
    %vm415 = vcmask 195584
    %v416 = vsel %vm415, %v414, %v410
    %v417 = vld [vmem:[#allocation2 + $0x10] sm:$0xff]
    %419 = vrot.lane.b32.xlu0 %v417, 96
    %v420 = vpop.permute.xlu0 %419
    %v421 = vsel %vm80, %v417, 0
    %v423 = vsel %vm80, %v420, 0
    %425 = vmatpush.xpose.msra.mxu0 0.0
    %426 = vmatpush.xpose.msra.mxu0 0.0
    %427 = vmatpush.xpose.msra.mxu0 0.0
    %428 = vmatpush.xpose.msra.mxu0 0.0
    %429 = vmatpush.xpose.msra.mxu0 0.0
    %430 = vmatpush.xpose.msra.mxu0 0.0
    %431 = vmatpush.xpose.msra.mxu0 0.0
    %432 = vmatpush.xpose.msra.mxu0 0.0
    %433 = vmatpush.xpose.msra.mxu0 0.0
    %434 = vmatpush.xpose.msra.mxu0 0.0
    %435 = vmatpush.xpose.msra.mxu0 0.0
    %436 = vmatpush.xpose.msra.mxu0 0.0
    %437 = vmatpush.xpose.msra.mxu0 0.0
    %438 = vmatpush.xpose.msra.mxu0 0.0
    %439 = vmatpush.xpose.msra.mxu0 0.0
    %440 = vmatpush.xpose.msra.mxu0 %v423
    %441 = vmatmul.f32.gmra.mxu0 %v421
    %v442 = vpop.f32.mrf.mxu0
    %v443 = vadd.f32 0.0, %v442
    %444 = vdwg.mxu0
    %v445 = vmul.f32 %v443, 0.35355338
    %v446 = vperm.slane %v106, 1
    %vm447 = vcmp.eq.s32.totalorder %v446, 1
    %v448 = vsel %vm447, %v445, -1e+09
    %v449 = vsel %vm80, %v448, -inf
    %450 = vmax.xlane.f32.xlu0 %v449
    %v451 = vpop.xlane.xlu0 %450
    %v452 = vsub.f32 %v448, %v451
    %v453 = vmul.f32 %v452, 1.442695
    %v454 = vpow.pop %v453
    %v455 = vsel %vm80, %v454, 0.0
    %456 = vadd.xlane.f32.xlu0 %v455
    %v457 = vpop.xlane.xlu0 %456
    %v458 = vrcp.pop %v457
    %v459 = vmul.f32 %v457, %v458
    %v460 = vsub.f32 1.0, %v459
    %v461 = vmul.f32 %v458, %v460
    %v462 = vadd.f32 %v458, %v461
    %vm463 = vweird.f32 %v457
    %vm464 = vweird.f32 %v458
    %vm465 = vmor %vm463, %vm464
    %v466 = vsel %vm465, %v458, %v462
    %v467 = vand.u32 2147483647, %v457
    %vm468 = vcmp.eq.f32.partialorder %v467, 8.507059e+37
    %v469 = vand.u32 %v457, 2147483648
    %v470 = vor.u32 1.1754944e-38, %v469
    %v471 = vsel %vm468, %v470, %v466
    %v472 = vmul.f32 %v454, %v471
    %473 = vrot.lane.b32.xlu0 %v417, 64
    %v474 = vpop.permute.xlu0 %473
    %v477 = vsel %vm80, %v472, 0
    %479 = vmatpush.msra.mxu0 0.0
    %480 = vmatpush.msra.mxu0 0.0
    %481 = vmatpush.msra.mxu0 0.0
    %482 = vmatpush.msra.mxu0 0.0
    %483 = vmatpush.msra.mxu0 0.0
    %484 = vmatpush.msra.mxu0 0.0
    %485 = vmatpush.msra.mxu0 0.0
    %486 = vmatpush.msra.mxu0 0.0
    %487 = vmatpush.msra.mxu0 0.0
    %488 = vmatpush.msra.mxu0 0.0
    %489 = vmatpush.msra.mxu0 0.0
    %490 = vmatpush.msra.mxu0 0.0
    %491 = vmatpush.msra.mxu0 0.0
    %492 = vmatpush.msra.mxu0 0.0
    %493 = vmatpush.msra.mxu0 0.0
    %494 = vmatpush.msra.mxu0 %v474
    %495 = vmatmul.f32.gmra.mxu0 %v477
    %v496 = vpop.f32.mrf.mxu0
    %v497 = vadd.f32 0.0, %v496
    %498 = vdwg.mxu0
    %499 = vrot.lane.b32.xlu0 %v417, 120
    %v500 = vpop.permute.xlu0 %499
    %501 = vrot.lane.b32.xlu0 %v417, 88
    %v502 = vpop.permute.xlu0 %501
    %v503 = vsel %vm80, %v500, 0
    %v505 = vsel %vm80, %v502, 0
    %507 = vmatpush.xpose.msra.mxu0 0.0
    %508 = vmatpush.xpose.msra.mxu0 0.0
    %509 = vmatpush.xpose.msra.mxu0 0.0
    %510 = vmatpush.xpose.msra.mxu0 0.0
    %511 = vmatpush.xpose.msra.mxu0 0.0
    %512 = vmatpush.xpose.msra.mxu0 0.0
    %513 = vmatpush.xpose.msra.mxu0 0.0
    %514 = vmatpush.xpose.msra.mxu0 0.0
    %515 = vmatpush.xpose.msra.mxu0 0.0
    %516 = vmatpush.xpose.msra.mxu0 0.0
    %517 = vmatpush.xpose.msra.mxu0 0.0
    %518 = vmatpush.xpose.msra.mxu0 0.0
    %519 = vmatpush.xpose.msra.mxu0 0.0
    %520 = vmatpush.xpose.msra.mxu0 0.0
    %521 = vmatpush.xpose.msra.mxu0 0.0
    %522 = vmatpush.xpose.msra.mxu0 %v505
    %523 = vmatmul.f32.gmra.mxu0 %v503
    %v524 = vpop.f32.mrf.mxu0
    %v525 = vadd.f32 0.0, %v524
    %526 = vdwg.mxu0
    %v527 = vmul.f32 %v525, 0.35355338
    %v528 = vsel %vm447, %v527, -1e+09
    %v529 = vsel %vm80, %v528, -inf
    %530 = vmax.xlane.f32.xlu0 %v529
    %v531 = vpop.xlane.xlu0 %530
    %v532 = vsub.f32 %v528, %v531
    %v533 = vmul.f32 %v532, 1.442695
    %v534 = vpow.pop %v533
    %v535 = vsel %vm80, %v534, 0.0
    %536 = vadd.xlane.f32.xlu0 %v535
    %v537 = vpop.xlane.xlu0 %536
    %v538 = vrcp.pop %v537
    %v539 = vmul.f32 %v537, %v538
    %v540 = vsub.f32 1.0, %v539
    %v541 = vmul.f32 %v538, %v540
    %v542 = vadd.f32 %v538, %v541
    %vm543 = vweird.f32 %v537
    %vm544 = vweird.f32 %v538
    %vm545 = vmor %vm543, %vm544
    %v546 = vsel %vm545, %v538, %v542
    %v547 = vand.u32 2147483647, %v537
    %vm548 = vcmp.eq.f32.partialorder %v547, 8.507059e+37
    %v549 = vand.u32 %v537, 2147483648
    %v550 = vor.u32 1.1754944e-38, %v549
    %v551 = vsel %vm548, %v550, %v546
    %v552 = vmul.f32 %v534, %v551
    %553 = vrot.lane.b32.xlu0 %v417, 56
    %v554 = vpop.permute.xlu0 %553
    %v557 = vsel %vm80, %v552, 0
    %559 = vmatpush.msra.mxu0 0.0
    %560 = vmatpush.msra.mxu0 0.0
    %561 = vmatpush.msra.mxu0 0.0
    %562 = vmatpush.msra.mxu0 0.0
    %563 = vmatpush.msra.mxu0 0.0
    %564 = vmatpush.msra.mxu0 0.0
    %565 = vmatpush.msra.mxu0 0.0
    %566 = vmatpush.msra.mxu0 0.0
    %567 = vmatpush.msra.mxu0 0.0
    %568 = vmatpush.msra.mxu0 0.0
    %569 = vmatpush.msra.mxu0 0.0
    %570 = vmatpush.msra.mxu0 0.0
    %571 = vmatpush.msra.mxu0 0.0
    %572 = vmatpush.msra.mxu0 0.0
    %573 = vmatpush.msra.mxu0 0.0
    %574 = vmatpush.msra.mxu0 %v554
    %575 = vmatmul.f32.gmra.mxu0 %v557
    %v576 = vpop.f32.mrf.mxu0
    %v577 = vadd.f32 0.0, %v576
    %578 = vdwg.mxu0
    %579 = vrot.lane.b32.xlu0 %v417, 112
    %v580 = vpop.permute.xlu0 %579
    %581 = vrot.lane.b32.xlu0 %v417, 80
    %v582 = vpop.permute.xlu0 %581
    %v583 = vsel %vm80, %v580, 0
    %v585 = vsel %vm80, %v582, 0
    %587 = vmatpush.xpose.msra.mxu0 0.0
    %588 = vmatpush.xpose.msra.mxu0 0.0
    %589 = vmatpush.xpose.msra.mxu0 0.0
    %590 = vmatpush.xpose.msra.mxu0 0.0
    %591 = vmatpush.xpose.msra.mxu0 0.0
    %592 = vmatpush.xpose.msra.mxu0 0.0
    %593 = vmatpush.xpose.msra.mxu0 0.0
    %594 = vmatpush.xpose.msra.mxu0 0.0
    %595 = vmatpush.xpose.msra.mxu0 0.0
    %596 = vmatpush.xpose.msra.mxu0 0.0
    %597 = vmatpush.xpose.msra.mxu0 0.0
    %598 = vmatpush.xpose.msra.mxu0 0.0
    %599 = vmatpush.xpose.msra.mxu0 0.0
    %600 = vmatpush.xpose.msra.mxu0 0.0
    %601 = vmatpush.xpose.msra.mxu0 0.0
    %602 = vmatpush.xpose.msra.mxu0 %v585
    %603 = vmatmul.f32.gmra.mxu0 %v583
    %v604 = vpop.f32.mrf.mxu0
    %v605 = vadd.f32 0.0, %v604
    %606 = vdwg.mxu0
    %v607 = vmul.f32 %v605, 0.35355338
    %v608 = vsel %vm447, %v607, -1e+09
    %v609 = vsel %vm80, %v608, -inf
    %610 = vmax.xlane.f32.xlu0 %v609
    %v611 = vpop.xlane.xlu0 %610
    %v612 = vsub.f32 %v608, %v611
    %v613 = vmul.f32 %v612, 1.442695
    %v614 = vpow.pop %v613
    %v615 = vsel %vm80, %v614, 0.0
    %616 = vadd.xlane.f32.xlu0 %v615
    %v617 = vpop.xlane.xlu0 %616
    %v618 = vrcp.pop %v617
    %v619 = vmul.f32 %v617, %v618
    %v620 = vsub.f32 1.0, %v619
    %v621 = vmul.f32 %v618, %v620
    %v622 = vadd.f32 %v618, %v621
    %vm623 = vweird.f32 %v617
    %vm624 = vweird.f32 %v618
    %vm625 = vmor %vm623, %vm624
    %v626 = vsel %vm625, %v618, %v622
    %v627 = vand.u32 2147483647, %v617
    %vm628 = vcmp.eq.f32.partialorder %v627, 8.507059e+37
    %v629 = vand.u32 %v617, 2147483648
    %v630 = vor.u32 1.1754944e-38, %v629
    %v631 = vsel %vm628, %v630, %v626
    %v632 = vmul.f32 %v614, %v631
    %633 = vrot.lane.b32.xlu0 %v417, 48
    %v634 = vpop.permute.xlu0 %633
    %v637 = vsel %vm80, %v632, 0
    %639 = vmatpush.msra.mxu0 0.0
    %640 = vmatpush.msra.mxu0 0.0
    %641 = vmatpush.msra.mxu0 0.0
    %642 = vmatpush.msra.mxu0 0.0
    %643 = vmatpush.msra.mxu0 0.0
    %644 = vmatpush.msra.mxu0 0.0
    %645 = vmatpush.msra.mxu0 0.0
    %646 = vmatpush.msra.mxu0 0.0
    %647 = vmatpush.msra.mxu0 0.0
    %648 = vmatpush.msra.mxu0 0.0
    %649 = vmatpush.msra.mxu0 0.0
    %650 = vmatpush.msra.mxu0 0.0
    %651 = vmatpush.msra.mxu0 0.0
    %652 = vmatpush.msra.mxu0 0.0
    %653 = vmatpush.msra.mxu0 0.0
    %654 = vmatpush.msra.mxu0 %v634
    %655 = vmatmul.f32.gmra.mxu0 %v637
    %v656 = vpop.f32.mrf.mxu0
    %v657 = vadd.f32 0.0, %v656
    %658 = vdwg.mxu0
    %659 = vrot.lane.b32.xlu0 %v417, 104
    %v660 = vpop.permute.xlu0 %659
    %661 = vrot.lane.b32.xlu0 %v417, 72
    %v662 = vpop.permute.xlu0 %661
    %v663 = vsel %vm80, %v660, 0
    %v665 = vsel %vm80, %v662, 0
    %667 = vmatpush.xpose.msra.mxu0 0.0
    %668 = vmatpush.xpose.msra.mxu0 0.0
    %669 = vmatpush.xpose.msra.mxu0 0.0
    %670 = vmatpush.xpose.msra.mxu0 0.0
    %671 = vmatpush.xpose.msra.mxu0 0.0
    %672 = vmatpush.xpose.msra.mxu0 0.0
    %673 = vmatpush.xpose.msra.mxu0 0.0
    %674 = vmatpush.xpose.msra.mxu0 0.0
    %675 = vmatpush.xpose.msra.mxu0 0.0
    %676 = vmatpush.xpose.msra.mxu0 0.0
    %677 = vmatpush.xpose.msra.mxu0 0.0
    %678 = vmatpush.xpose.msra.mxu0 0.0
    %679 = vmatpush.xpose.msra.mxu0 0.0
    %680 = vmatpush.xpose.msra.mxu0 0.0
    %681 = vmatpush.xpose.msra.mxu0 0.0
    %682 = vmatpush.xpose.msra.mxu0 %v665
    %683 = vmatmul.f32.gmra.mxu0 %v663
    %v684 = vpop.f32.mrf.mxu0
    %v685 = vadd.f32 0.0, %v684
    %686 = vdwg.mxu0
    %v687 = vmul.f32 %v685, 0.35355338
    %v688 = vsel %vm447, %v687, -1e+09
    %v689 = vsel %vm80, %v688, -inf
    %690 = vmax.xlane.f32.xlu0 %v689
    %v691 = vpop.xlane.xlu0 %690
    %v692 = vsub.f32 %v688, %v691
    %v693 = vmul.f32 %v692, 1.442695
    %v694 = vpow.pop %v693
    %v695 = vsel %vm80, %v694, 0.0
    %696 = vadd.xlane.f32.xlu0 %v695
    %v697 = vpop.xlane.xlu0 %696
    %v698 = vrcp.pop %v697
    %v699 = vmul.f32 %v697, %v698
    %v700 = vsub.f32 1.0, %v699
    %v701 = vmul.f32 %v698, %v700
    %v702 = vadd.f32 %v698, %v701
    %vm703 = vweird.f32 %v697
    %vm704 = vweird.f32 %v698
    %vm705 = vmor %vm703, %vm704
    %v706 = vsel %vm705, %v698, %v702
    %v707 = vand.u32 2147483647, %v697
    %vm708 = vcmp.eq.f32.partialorder %v707, 8.507059e+37
    %v709 = vand.u32 %v697, 2147483648
    %v710 = vor.u32 1.1754944e-38, %v709
    %v711 = vsel %vm708, %v710, %v706
    %v712 = vmul.f32 %v694, %v711
    %713 = vrot.lane.b32.xlu0 %v417, 40
    %v714 = vpop.permute.xlu0 %713
    %v717 = vsel %vm80, %v712, 0
    %719 = vmatpush.msra.mxu0 0.0
    %720 = vmatpush.msra.mxu0 0.0
    %721 = vmatpush.msra.mxu0 0.0
    %722 = vmatpush.msra.mxu0 0.0
    %723 = vmatpush.msra.mxu0 0.0
    %724 = vmatpush.msra.mxu0 0.0
    %725 = vmatpush.msra.mxu0 0.0
    %726 = vmatpush.msra.mxu0 0.0
    %727 = vmatpush.msra.mxu0 0.0
    %728 = vmatpush.msra.mxu0 0.0
    %729 = vmatpush.msra.mxu0 0.0
    %730 = vmatpush.msra.mxu0 0.0
    %731 = vmatpush.msra.mxu0 0.0
    %732 = vmatpush.msra.mxu0 0.0
    %733 = vmatpush.msra.mxu0 0.0
    %734 = vmatpush.msra.mxu0 %v714
    %735 = vmatmul.f32.gmra.mxu0 %v717
    %v736 = vpop.f32.mrf.mxu0
    %v737 = vadd.f32 0.0, %v736
    %738 = vdwg.mxu0
    %740 = vrot.lane.b32.xlu0 %v577, 8
    %v741 = vpop.permute.xlu0 %740
    %744 = vrot.lane.b32.xlu0 %v657, 16
    %v745 = vpop.permute.xlu0 %744
    %748 = vrot.lane.b32.xlu0 %v737, 24
    %v749 = vpop.permute.xlu0 %748
    %v751 = vsel %vm80, %v497, %v741
    %v752 = vsel %vm413, %v751, %v745
    %v753 = vsel %vm415, %v752, %v749
    %v754 = vld [vmem:[%s3 + $0x1] ss:$0 sm:$0xff]
    %v756 = vsel %vm42, %v416, 0
    %v759 = vsel %vm42, %v753, 0
    %761 = vmatpush.msra.mxu0 0.0
    %762 = vmatpush.msra.mxu0 0.0
    %763 = vmatpush.msra.mxu0 0.0
    %764 = vmatpush.msra.mxu0 0.0
    %765 = vmatpush.msra.mxu0 0.0
    %766 = vmatpush.msra.mxu0 0.0
    %767 = vmatpush.msra.mxu0 0.0
    %768 = vmatpush.msra.mxu0 0.0
    %769 = vmatpush.msra.mxu0 0.0
    %770 = vmatpush.msra.mxu0 0.0
    %771 = vmatpush.msra.mxu0 0.0
    %772 = vmatpush.msra.mxu0 0.0
    %773 = vmatpush.msra.mxu0 %v28
    %774 = vmatpush.msra.mxu0 %v27
    %775 = vmatpush.msra.mxu0 %v26
    %776 = vmatpush.msra.mxu0 %v25
    %777 = vmatmul.f32.gmra.mxu0 %v756
    %v778 = vpop.f32.mrf.mxu0
    %v779 = vadd.f32 %v754, %v778
    %780 = vmatmul.f32.gmra.mxu0 %v759
    %v781 = vpop.f32.mrf.mxu0
    %v782 = vadd.f32 %v754, %v781
    %783 = vdwg.mxu0
    %v784 = vadd.f32 %v18, %v779
    %v785 = vadd.f32 %v19, %v782
    %v786 = vld [vmem:[%s3 + $0x2] ss:$0 sm:$0xff]
    %v787 = vld [vmem:[%s3 + $0x3] ss:$0 sm:$0xff]
    %v788 = vsel %vm42, %v784, 0.0
    %789 = vadd.xlane.f32.xlu0 %v788
    %v790 = vpop.xlane.xlu0 %789
    %v791 = vsel %vm42, %v785, 0.0
    %792 = vadd.xlane.f32.xlu0 %v791
    %v793 = vpop.xlane.xlu0 %792
    %v794 = vrcp.pop 32.0
    %v795 = vmul.f32 32.0, %v794
    %v796 = vsub.f32 1.0, %v795
    %v797 = vmul.f32 %v794, %v796
    %v798 = vadd.f32 %v794, %v797
    %vm799 = vweird.f32 %v794
    %v800 = vsel %vm799, %v794, %v798
    %v801 = vmul.f32 %v790, %v800
    %v802 = vmul.f32 %v793, %v800
    %v803 = vsub.f32 %v784, %v801
    %v804 = vsub.f32 %v785, %v802
    %v805 = vmul.f32 %v803, %v803
    %v806 = vmul.f32 %v804, %v804
    %v807 = vsel %vm42, %v805, 0.0
    %808 = vadd.xlane.f32.xlu0 %v807
    %v809 = vpop.xlane.xlu0 %808
    %v810 = vsel %vm42, %v806, 0.0
    %811 = vadd.xlane.f32.xlu0 %v810
    %v812 = vpop.xlane.xlu0 %811
    %v813 = vrcp.pop 31.0
    %v814 = vmul.f32 31.0, %v813
    %v815 = vsub.f32 1.0, %v814
    %v816 = vmul.f32 %v813, %v815
    %v817 = vadd.f32 %v813, %v816
    %vm818 = vweird.f32 %v813
    %v819 = vsel %vm818, %v813, %v817
    %v820 = vmul.f32 %v809, %v819
    %v821 = vmul.f32 %v812, %v819
    %v822 = vrsqrt.pop %v820
    %v823 = vmul.f32 %v822, %v820
    %v824 = vmul.f32 %v823, %v822
    %v825 = vmul.f32 0.5, %v824
    %v826 = vsub.f32 1.5, %v825
    %v827 = vmul.f32 %v822, %v826
    %v828 = vmul.f32 %v820, %v827
    %vm829 = vcmp.eq.f32.partialorder %v820, inf
    %v830 = vsel %vm829, %v820, %v828
    %vm831 = vcmp.eq.f32.partialorder %v820, 0.0
    %v832 = vand.u32 %v820, 2147483648
    %v833 = vsel %vm831, %v832, %v830
    %v834 = vrsqrt.pop %v821
    %v835 = vmul.f32 %v834, %v821
    %v836 = vmul.f32 %v835, %v834
    %v837 = vmul.f32 0.5, %v836
    %v838 = vsub.f32 1.5, %v837
    %v839 = vmul.f32 %v834, %v838
    %v840 = vmul.f32 %v821, %v839
    %vm841 = vcmp.eq.f32.partialorder %v821, inf
    %v842 = vsel %vm841, %v821, %v840
    %vm843 = vcmp.eq.f32.partialorder %v821, 0.0
    %v844 = vand.u32 %v821, 2147483648
    %v845 = vsel %vm843, %v844, %v842
    %v846 = vadd.f32 %v833, 1e-05
    %v847 = vadd.f32 %v845, 1e-05
    %v848 = vrcp.pop %v846
    %v849 = vmul.f32 %v846, %v848
    %v850 = vsub.f32 1.0, %v849
    %v851 = vmul.f32 %v848, %v850
    %v852 = vadd.f32 %v848, %v851
    %vm853 = vweird.f32 %v846
    %vm854 = vweird.f32 %v848
    %vm855 = vmor %vm853, %vm854
    %v856 = vsel %vm855, %v848, %v852
    %v857 = vand.u32 2147483647, %v846
    %vm858 = vcmp.eq.f32.partialorder %v857, 8.507059e+37
    %v859 = vand.u32 %v846, 2147483648
    %v860 = vor.u32 1.1754944e-38, %v859
    %v861 = vsel %vm858, %v860, %v856
    %v862 = vmul.f32 %v803, %v861
    %v863 = vrcp.pop %v847
    %v864 = vmul.f32 %v847, %v863
    %v865 = vsub.f32 1.0, %v864
    %v866 = vmul.f32 %v863, %v865
    %v867 = vadd.f32 %v863, %v866
    %vm868 = vweird.f32 %v847
    %vm869 = vweird.f32 %v863
    %vm870 = vmor %vm868, %vm869
    %v871 = vsel %vm870, %v863, %v867
    %v872 = vand.u32 2147483647, %v847
    %vm873 = vcmp.eq.f32.partialorder %v872, 8.507059e+37
    %v874 = vand.u32 %v847, 2147483648
    %v875 = vor.u32 1.1754944e-38, %v874
    %v876 = vsel %vm873, %v875, %v871
    %v877 = vmul.f32 %v804, %v876
    %v878 = vmul.f32 %v786, %v862
    %v879 = vmul.f32 %v786, %v877
    %v880 = vadd.f32 %v878, %v787
    %v881 = vadd.f32 %v879, %v787
    %v882 = vld [vmem:[%s3 + $0x4] ss:$0 sm:$0xff]
    %v884 = vsel %vm42, %v880, 0
    %v887 = vsel %vm42, %v881, 0
    %889 = vmatpush.msra.mxu0 0.0
    %890 = vmatpush.msra.mxu0 0.0
    %891 = vmatpush.msra.mxu0 0.0
    %892 = vmatpush.msra.mxu0 0.0
    %893 = vmatpush.msra.mxu0 0.0
    %894 = vmatpush.msra.mxu0 0.0
    %895 = vmatpush.msra.mxu0 0.0
    %896 = vmatpush.msra.mxu0 0.0
    %897 = vmatpush.msra.mxu0 0.0
    %898 = vmatpush.msra.mxu0 0.0
    %899 = vmatpush.msra.mxu0 0.0
    %900 = vmatpush.msra.mxu0 0.0
    %901 = vmatpush.msra.mxu0 %v32
    %902 = vmatpush.msra.mxu0 %v31
    %903 = vmatpush.msra.mxu0 %v30
    %904 = vmatpush.msra.mxu0 %v29
    %905 = vmatmul.f32.gmra.mxu0 %v884
    %v906 = vpop.f32.mrf.mxu0
    %v907 = vadd.f32 %v882, %v906
    %908 = vmatmul.f32.gmra.mxu0 %v887
    %v909 = vpop.f32.mrf.mxu0
    %v910 = vadd.f32 %v882, %v909
    %911 = vdwg.mxu0
    %v912 = vmax.f32 %v907, 0.0
    %v913 = vmax.f32 %v910, 0.0
    %v914 = vld [vmem:[%s3 + $0x5] ss:$0 sm:$0xff]
    %vm915 = vcmask 523264
    %v917 = vsel %vm915, %v912, 0
    %v920 = vsel %vm915, %v913, 0
    %922 = vmatpush.msra.mxu0 0.0
    %923 = vmatpush.msra.mxu0 0.0
    %924 = vmatpush.msra.mxu0 0.0
    %925 = vmatpush.msra.mxu0 0.0
    %926 = vmatpush.msra.mxu0 0.0
    %927 = vmatpush.msra.mxu0 0.0
    %928 = vmatpush.msra.mxu0 0.0
    %929 = vmatpush.msra.mxu0 0.0
    %930 = vmatpush.msra.mxu0 %v40
    %931 = vmatpush.msra.mxu0 %v39
    %932 = vmatpush.msra.mxu0 %v38
    %933 = vmatpush.msra.mxu0 %v37
    %934 = vmatpush.msra.mxu0 %v36
    %935 = vmatpush.msra.mxu0 %v35
    %936 = vmatpush.msra.mxu0 %v34
    %937 = vmatpush.msra.mxu0 %v33
    %938 = vmatmul.f32.gmra.mxu0 %v917
    %v939 = vpop.f32.mrf.mxu0
    %v940 = vadd.f32 %v914, %v939
    %941 = vmatmul.f32.gmra.mxu0 %v920
    %v942 = vpop.f32.mrf.mxu0
    %v943 = vadd.f32 %v914, %v942
    %944 = vdwg.mxu0
    %v945 = vadd.f32 %v880, %v940
    %v946 = vadd.f32 %v881, %v943
    %v947 = vld [vmem:[%s3 + $0x6] ss:$0 sm:$0xff]
    %v948 = vld [vmem:[%s3 + $0x7] ss:$0 sm:$0xff]
    %v949 = vsel %vm42, %v945, 0.0
    %950 = vadd.xlane.f32.xlu0 %v949
    %v951 = vpop.xlane.xlu0 %950
    %v952 = vsel %vm42, %v946, 0.0
    %953 = vadd.xlane.f32.xlu0 %v952
    %v954 = vpop.xlane.xlu0 %953
    %v955 = vmul.f32 %v951, %v800
    %v956 = vmul.f32 %v954, %v800
    %v957 = vsub.f32 %v945, %v955
    %v958 = vsub.f32 %v946, %v956
    %v959 = vmul.f32 %v957, %v957
    %v960 = vmul.f32 %v958, %v958
    %v961 = vsel %vm42, %v959, 0.0
    %962 = vadd.xlane.f32.xlu0 %v961
    %v963 = vpop.xlane.xlu0 %962
    %v964 = vsel %vm42, %v960, 0.0
    %965 = vadd.xlane.f32.xlu0 %v964
    %v966 = vpop.xlane.xlu0 %965
    %v967 = vmul.f32 %v963, %v819
    %v968 = vmul.f32 %v966, %v819
    %v969 = vrsqrt.pop %v967
    %v970 = vmul.f32 %v969, %v967
    %v971 = vmul.f32 %v970, %v969
    %v972 = vmul.f32 0.5, %v971
    %v973 = vsub.f32 1.5, %v972
    %v974 = vmul.f32 %v969, %v973
    %v975 = vmul.f32 %v967, %v974
    %vm976 = vcmp.eq.f32.partialorder %v967, inf
    %v977 = vsel %vm976, %v967, %v975
    %vm978 = vcmp.eq.f32.partialorder %v967, 0.0
    %v979 = vand.u32 %v967, 2147483648
    %v980 = vsel %vm978, %v979, %v977
    %v981 = vrsqrt.pop %v968
    %v982 = vmul.f32 %v981, %v968
    %v983 = vmul.f32 %v982, %v981
    %v984 = vmul.f32 0.5, %v983
    %v985 = vsub.f32 1.5, %v984
    %v986 = vmul.f32 %v981, %v985
    %v987 = vmul.f32 %v968, %v986
    %vm988 = vcmp.eq.f32.partialorder %v968, inf
    %v989 = vsel %vm988, %v968, %v987
    %vm990 = vcmp.eq.f32.partialorder %v968, 0.0
    %v991 = vand.u32 %v968, 2147483648
    %v992 = vsel %vm990, %v991, %v989
    %v993 = vadd.f32 %v980, 1e-05
    %v994 = vadd.f32 %v992, 1e-05
    %v995 = vrcp.pop %v993
    %v996 = vmul.f32 %v993, %v995
    %v997 = vsub.f32 1.0, %v996
    %v998 = vmul.f32 %v995, %v997
    %v999 = vadd.f32 %v995, %v998
    %vm1000 = vweird.f32 %v993
    %vm1001 = vweird.f32 %v995
    %vm1002 = vmor %vm1000, %vm1001
    %v1003 = vsel %vm1002, %v995, %v999
    %v1004 = vand.u32 2147483647, %v993
    %vm1005 = vcmp.eq.f32.partialorder %v1004, 8.507059e+37
    %v1006 = vand.u32 %v993, 2147483648
    %v1007 = vor.u32 1.1754944e-38, %v1006
    %v1008 = vsel %vm1005, %v1007, %v1003
    %v1009 = vmul.f32 %v957, %v1008
    %v1010 = vrcp.pop %v994
    %v1011 = vmul.f32 %v994, %v1010
    %v1012 = vsub.f32 1.0, %v1011
    %v1013 = vmul.f32 %v1010, %v1012
    %v1014 = vadd.f32 %v1010, %v1013
    %vm1015 = vweird.f32 %v994
    %vm1016 = vweird.f32 %v1010
    %vm1017 = vmor %vm1015, %vm1016
    %v1018 = vsel %vm1017, %v1010, %v1014
    %v1019 = vand.u32 2147483647, %v994
    %vm1020 = vcmp.eq.f32.partialorder %v1019, 8.507059e+37
    %v1021 = vand.u32 %v994, 2147483648
    %v1022 = vor.u32 1.1754944e-38, %v1021
    %v1023 = vsel %vm1020, %v1022, %v1018
    %v1024 = vmul.f32 %v958, %v1023
    %v1025 = vmul.f32 %v947, %v1009
    %v1026 = vmul.f32 %v947, %v1024
    %v1027 = vadd.f32 %v1025, %v948
    %v1028 = vadd.f32 %v1026, %v948
    %v1029 = vld [vmem:[%s2 + $0x140] sm:$0xff]
    %v1030 = vld [vmem:[%s2 + $0x150] sm:$0xff]
    %v1031 = vld [vmem:[%s2 + $0x160] sm:$0xff]
    %v1032 = vld [vmem:[%s2 + $0x170] sm:$0xff]
    %v1033 = vld [vmem:[%s2 + $0x180] sm:$0xff]
    %v1034 = vld [vmem:[%s2 + $0x190] sm:$0xff]
    %v1035 = vld [vmem:[%s2 + $0x1a0] sm:$0xff]
    %v1036 = vld [vmem:[%s2 + $0x1b0] sm:$0xff]
    %v1037 = vld [vmem:[%s2 + $0x1c0] sm:$0xff]
    %v1038 = vld [vmem:[%s2 + $0x1d0] sm:$0xff]
    %v1039 = vld [vmem:[%s2 + $0x1e0] sm:$0xff]
    %v1040 = vld [vmem:[%s2 + $0x1f0] sm:$0xff]
    %v1041 = vld [vmem:[%s2 + $0x200] sm:$0xff]
    %v1042 = vld [vmem:[%s2 + $0x210] sm:$0xff]
    %v1043 = vld [vmem:[%s2 + $0x220] sm:$0xff]
    %v1044 = vld [vmem:[%s2 + $0x230] sm:$0xff]
    %v1045 = vld [vmem:[%s2 + $0x240] sm:$0xff]
    %v1046 = vld [vmem:[%s2 + $0x250] sm:$0xff]
    %v1047 = vld [vmem:[%s2 + $0x260] sm:$0xff]
    %v1048 = vld [vmem:[%s2 + $0x270] sm:$0xff]
    %v1049 = vld [vmem:[%s3 + $0x10] ss:$0 sm:$0xff]
    %v1051 = vsel %vm42, %v1027, 0
    %v1054 = vsel %vm42, %v1028, 0
    %1056 = vmatpush.msra.mxu0 0.0
    %1057 = vmatpush.msra.mxu0 0.0
    %1058 = vmatpush.msra.mxu0 0.0
    %1059 = vmatpush.msra.mxu0 0.0
    %1060 = vmatpush.msra.mxu0 0.0
    %1061 = vmatpush.msra.mxu0 0.0
    %1062 = vmatpush.msra.mxu0 0.0
    %1063 = vmatpush.msra.mxu0 0.0
    %1064 = vmatpush.msra.mxu0 0.0
    %1065 = vmatpush.msra.mxu0 0.0
    %1066 = vmatpush.msra.mxu0 0.0
    %1067 = vmatpush.msra.mxu0 0.0
    %1068 = vmatpush.msra.mxu0 %v1032
    %1069 = vmatpush.msra.mxu0 %v1031
    %1070 = vmatpush.msra.mxu0 %v1030
    %1071 = vmatpush.msra.mxu0 %v1029
    %1072 = vmatmul.f32.gmra.mxu0 %v1051
    %v1073 = vpop.f32.mrf.mxu0
    %v1074 = vadd.f32 %v1049, %v1073
    %1075 = vmatmul.f32.gmra.mxu0 %v1054
    %v1076 = vpop.f32.mrf.mxu0
    %v1077 = vadd.f32 %v1049, %v1076
    %1078 = vdwg.mxu0
    %1079 = vst.msk [vmem:[#allocation2] sm:$0xff] %vm72, %v1074
    %1080 = vst.msk [vmem:[#allocation2 + $0x10] sm:$0xff] %vm72, %v1077
    %v1081 = vld [vmem:[#allocation2] sm:$0xff]
    %1083 = vrot.lane.b32.xlu0 %v1081, 96
    %v1084 = vpop.permute.xlu0 %1083
    %v1085 = vsel %vm80, %v1081, 0
    %v1087 = vsel %vm80, %v1084, 0
    %1089 = vmatpush.xpose.msra.mxu0 0.0
    %1090 = vmatpush.xpose.msra.mxu0 0.0
    %1091 = vmatpush.xpose.msra.mxu0 0.0
    %1092 = vmatpush.xpose.msra.mxu0 0.0
    %1093 = vmatpush.xpose.msra.mxu0 0.0
    %1094 = vmatpush.xpose.msra.mxu0 0.0
    %1095 = vmatpush.xpose.msra.mxu0 0.0
    %1096 = vmatpush.xpose.msra.mxu0 0.0
    %1097 = vmatpush.xpose.msra.mxu0 0.0
    %1098 = vmatpush.xpose.msra.mxu0 0.0
    %1099 = vmatpush.xpose.msra.mxu0 0.0
    %1100 = vmatpush.xpose.msra.mxu0 0.0
    %1101 = vmatpush.xpose.msra.mxu0 0.0
    %1102 = vmatpush.xpose.msra.mxu0 0.0
    %1103 = vmatpush.xpose.msra.mxu0 0.0
    %1104 = vmatpush.xpose.msra.mxu0 %v1087
    %1105 = vmatmul.f32.gmra.mxu0 %v1085
    %v1106 = vpop.f32.mrf.mxu0
    %v1107 = vadd.f32 0.0, %v1106
    %1108 = vdwg.mxu0
    %v1109 = vmul.f32 %v1107, 0.35355338
    %v1110 = vsel %vm108, %v1109, -1e+09
    %v1111 = vsel %vm80, %v1110, -inf
    %1112 = vmax.xlane.f32.xlu0 %v1111
    %v1113 = vpop.xlane.xlu0 %1112
    %v1114 = vsub.f32 %v1110, %v1113
    %v1115 = vmul.f32 %v1114, 1.442695
    %v1116 = vpow.pop %v1115
    %v1117 = vsel %vm80, %v1116, 0.0
    %1118 = vadd.xlane.f32.xlu0 %v1117
    %v1119 = vpop.xlane.xlu0 %1118
    %v1120 = vrcp.pop %v1119
    %v1121 = vmul.f32 %v1119, %v1120
    %v1122 = vsub.f32 1.0, %v1121
    %v1123 = vmul.f32 %v1120, %v1122
    %v1124 = vadd.f32 %v1120, %v1123
    %vm1125 = vweird.f32 %v1119
    %vm1126 = vweird.f32 %v1120
    %vm1127 = vmor %vm1125, %vm1126
    %v1128 = vsel %vm1127, %v1120, %v1124
    %v1129 = vand.u32 2147483647, %v1119
    %vm1130 = vcmp.eq.f32.partialorder %v1129, 8.507059e+37
    %v1131 = vand.u32 %v1119, 2147483648
    %v1132 = vor.u32 1.1754944e-38, %v1131
    %v1133 = vsel %vm1130, %v1132, %v1128
    %v1134 = vmul.f32 %v1116, %v1133
    %1135 = vrot.lane.b32.xlu0 %v1081, 64
    %v1136 = vpop.permute.xlu0 %1135
    %v1139 = vsel %vm80, %v1134, 0
    %1141 = vmatpush.msra.mxu0 0.0
    %1142 = vmatpush.msra.mxu0 0.0
    %1143 = vmatpush.msra.mxu0 0.0
    %1144 = vmatpush.msra.mxu0 0.0
    %1145 = vmatpush.msra.mxu0 0.0
    %1146 = vmatpush.msra.mxu0 0.0
    %1147 = vmatpush.msra.mxu0 0.0
    %1148 = vmatpush.msra.mxu0 0.0
    %1149 = vmatpush.msra.mxu0 0.0
    %1150 = vmatpush.msra.mxu0 0.0
    %1151 = vmatpush.msra.mxu0 0.0
    %1152 = vmatpush.msra.mxu0 0.0
    %1153 = vmatpush.msra.mxu0 0.0
    %1154 = vmatpush.msra.mxu0 0.0
    %1155 = vmatpush.msra.mxu0 0.0
    %1156 = vmatpush.msra.mxu0 %v1136
    %1157 = vmatmul.f32.gmra.mxu0 %v1139
    %v1158 = vpop.f32.mrf.mxu0
    %v1159 = vadd.f32 0.0, %v1158
    %1160 = vdwg.mxu0
    %1161 = vrot.lane.b32.xlu0 %v1081, 120
    %v1162 = vpop.permute.xlu0 %1161
    %1163 = vrot.lane.b32.xlu0 %v1081, 88
    %v1164 = vpop.permute.xlu0 %1163
    %v1165 = vsel %vm80, %v1162, 0
    %v1167 = vsel %vm80, %v1164, 0
    %1169 = vmatpush.xpose.msra.mxu0 0.0
    %1170 = vmatpush.xpose.msra.mxu0 0.0
    %1171 = vmatpush.xpose.msra.mxu0 0.0
    %1172 = vmatpush.xpose.msra.mxu0 0.0
    %1173 = vmatpush.xpose.msra.mxu0 0.0
    %1174 = vmatpush.xpose.msra.mxu0 0.0
    %1175 = vmatpush.xpose.msra.mxu0 0.0
    %1176 = vmatpush.xpose.msra.mxu0 0.0
    %1177 = vmatpush.xpose.msra.mxu0 0.0
    %1178 = vmatpush.xpose.msra.mxu0 0.0
    %1179 = vmatpush.xpose.msra.mxu0 0.0
    %1180 = vmatpush.xpose.msra.mxu0 0.0
    %1181 = vmatpush.xpose.msra.mxu0 0.0
    %1182 = vmatpush.xpose.msra.mxu0 0.0
    %1183 = vmatpush.xpose.msra.mxu0 0.0
    %1184 = vmatpush.xpose.msra.mxu0 %v1167
    %1185 = vmatmul.f32.gmra.mxu0 %v1165
    %v1186 = vpop.f32.mrf.mxu0
    %v1187 = vadd.f32 0.0, %v1186
    %1188 = vdwg.mxu0
    %v1189 = vmul.f32 %v1187, 0.35355338
    %v1190 = vsel %vm108, %v1189, -1e+09
    %v1191 = vsel %vm80, %v1190, -inf
    %1192 = vmax.xlane.f32.xlu0 %v1191
    %v1193 = vpop.xlane.xlu0 %1192
    %v1194 = vsub.f32 %v1190, %v1193
    %v1195 = vmul.f32 %v1194, 1.442695
    %v1196 = vpow.pop %v1195
    %v1197 = vsel %vm80, %v1196, 0.0
    %1198 = vadd.xlane.f32.xlu0 %v1197
    %v1199 = vpop.xlane.xlu0 %1198
    %v1200 = vrcp.pop %v1199
    %v1201 = vmul.f32 %v1199, %v1200
    %v1202 = vsub.f32 1.0, %v1201
    %v1203 = vmul.f32 %v1200, %v1202
    %v1204 = vadd.f32 %v1200, %v1203
    %vm1205 = vweird.f32 %v1199
    %vm1206 = vweird.f32 %v1200
    %vm1207 = vmor %vm1205, %vm1206
    %v1208 = vsel %vm1207, %v1200, %v1204
    %v1209 = vand.u32 2147483647, %v1199
    %vm1210 = vcmp.eq.f32.partialorder %v1209, 8.507059e+37
    %v1211 = vand.u32 %v1199, 2147483648
    %v1212 = vor.u32 1.1754944e-38, %v1211
    %v1213 = vsel %vm1210, %v1212, %v1208
    %v1214 = vmul.f32 %v1196, %v1213
    %1215 = vrot.lane.b32.xlu0 %v1081, 56
    %v1216 = vpop.permute.xlu0 %1215
    %v1219 = vsel %vm80, %v1214, 0
    %1221 = vmatpush.msra.mxu0 0.0
    %1222 = vmatpush.msra.mxu0 0.0
    %1223 = vmatpush.msra.mxu0 0.0
    %1224 = vmatpush.msra.mxu0 0.0
    %1225 = vmatpush.msra.mxu0 0.0
    %1226 = vmatpush.msra.mxu0 0.0
    %1227 = vmatpush.msra.mxu0 0.0
    %1228 = vmatpush.msra.mxu0 0.0
    %1229 = vmatpush.msra.mxu0 0.0
    %1230 = vmatpush.msra.mxu0 0.0
    %1231 = vmatpush.msra.mxu0 0.0
    %1232 = vmatpush.msra.mxu0 0.0
    %1233 = vmatpush.msra.mxu0 0.0
    %1234 = vmatpush.msra.mxu0 0.0
    %1235 = vmatpush.msra.mxu0 0.0
    %1236 = vmatpush.msra.mxu0 %v1216
    %1237 = vmatmul.f32.gmra.mxu0 %v1219
    %v1238 = vpop.f32.mrf.mxu0
    %v1239 = vadd.f32 0.0, %v1238
    %1240 = vdwg.mxu0
    %1241 = vrot.lane.b32.xlu0 %v1081, 112
    %v1242 = vpop.permute.xlu0 %1241
    %1243 = vrot.lane.b32.xlu0 %v1081, 80
    %v1244 = vpop.permute.xlu0 %1243
    %v1245 = vsel %vm80, %v1242, 0
    %v1247 = vsel %vm80, %v1244, 0
    %1249 = vmatpush.xpose.msra.mxu0 0.0
    %1250 = vmatpush.xpose.msra.mxu0 0.0
    %1251 = vmatpush.xpose.msra.mxu0 0.0
    %1252 = vmatpush.xpose.msra.mxu0 0.0
    %1253 = vmatpush.xpose.msra.mxu0 0.0
    %1254 = vmatpush.xpose.msra.mxu0 0.0
    %1255 = vmatpush.xpose.msra.mxu0 0.0
    %1256 = vmatpush.xpose.msra.mxu0 0.0
    %1257 = vmatpush.xpose.msra.mxu0 0.0
    %1258 = vmatpush.xpose.msra.mxu0 0.0
    %1259 = vmatpush.xpose.msra.mxu0 0.0
    %1260 = vmatpush.xpose.msra.mxu0 0.0
    %1261 = vmatpush.xpose.msra.mxu0 0.0
    %1262 = vmatpush.xpose.msra.mxu0 0.0
    %1263 = vmatpush.xpose.msra.mxu0 0.0
    %1264 = vmatpush.xpose.msra.mxu0 %v1247
    %1265 = vmatmul.f32.gmra.mxu0 %v1245
    %v1266 = vpop.f32.mrf.mxu0
    %v1267 = vadd.f32 0.0, %v1266
    %1268 = vdwg.mxu0
    %v1269 = vmul.f32 %v1267, 0.35355338
    %v1270 = vsel %vm108, %v1269, -1e+09
    %v1271 = vsel %vm80, %v1270, -inf
    %1272 = vmax.xlane.f32.xlu0 %v1271
    %v1273 = vpop.xlane.xlu0 %1272
    %v1274 = vsub.f32 %v1270, %v1273
    %v1275 = vmul.f32 %v1274, 1.442695
    %v1276 = vpow.pop %v1275
    %v1277 = vsel %vm80, %v1276, 0.0
    %1278 = vadd.xlane.f32.xlu0 %v1277
    %v1279 = vpop.xlane.xlu0 %1278
    %v1280 = vrcp.pop %v1279
    %v1281 = vmul.f32 %v1279, %v1280
    %v1282 = vsub.f32 1.0, %v1281
    %v1283 = vmul.f32 %v1280, %v1282
    %v1284 = vadd.f32 %v1280, %v1283
    %vm1285 = vweird.f32 %v1279
    %vm1286 = vweird.f32 %v1280
    %vm1287 = vmor %vm1285, %vm1286
    %v1288 = vsel %vm1287, %v1280, %v1284
    %v1289 = vand.u32 2147483647, %v1279
    %vm1290 = vcmp.eq.f32.partialorder %v1289, 8.507059e+37
    %v1291 = vand.u32 %v1279, 2147483648
    %v1292 = vor.u32 1.1754944e-38, %v1291
    %v1293 = vsel %vm1290, %v1292, %v1288
    %v1294 = vmul.f32 %v1276, %v1293
    %1295 = vrot.lane.b32.xlu0 %v1081, 48
    %v1296 = vpop.permute.xlu0 %1295
    %v1299 = vsel %vm80, %v1294, 0
    %1301 = vmatpush.msra.mxu0 0.0
    %1302 = vmatpush.msra.mxu0 0.0
    %1303 = vmatpush.msra.mxu0 0.0
    %1304 = vmatpush.msra.mxu0 0.0
    %1305 = vmatpush.msra.mxu0 0.0
    %1306 = vmatpush.msra.mxu0 0.0
    %1307 = vmatpush.msra.mxu0 0.0
    %1308 = vmatpush.msra.mxu0 0.0
    %1309 = vmatpush.msra.mxu0 0.0
    %1310 = vmatpush.msra.mxu0 0.0
    %1311 = vmatpush.msra.mxu0 0.0
    %1312 = vmatpush.msra.mxu0 0.0
    %1313 = vmatpush.msra.mxu0 0.0
    %1314 = vmatpush.msra.mxu0 0.0
    %1315 = vmatpush.msra.mxu0 0.0
    %1316 = vmatpush.msra.mxu0 %v1296
    %1317 = vmatmul.f32.gmra.mxu0 %v1299
    %v1318 = vpop.f32.mrf.mxu0
    %v1319 = vadd.f32 0.0, %v1318
    %1320 = vdwg.mxu0
    %1321 = vrot.lane.b32.xlu0 %v1081, 104
    %v1322 = vpop.permute.xlu0 %1321
    %1323 = vrot.lane.b32.xlu0 %v1081, 72
    %v1324 = vpop.permute.xlu0 %1323
    %v1325 = vsel %vm80, %v1322, 0
    %v1327 = vsel %vm80, %v1324, 0
    %1329 = vmatpush.xpose.msra.mxu0 0.0
    %1330 = vmatpush.xpose.msra.mxu0 0.0
    %1331 = vmatpush.xpose.msra.mxu0 0.0
    %1332 = vmatpush.xpose.msra.mxu0 0.0
    %1333 = vmatpush.xpose.msra.mxu0 0.0
    %1334 = vmatpush.xpose.msra.mxu0 0.0
    %1335 = vmatpush.xpose.msra.mxu0 0.0
    %1336 = vmatpush.xpose.msra.mxu0 0.0
    %1337 = vmatpush.xpose.msra.mxu0 0.0
    %1338 = vmatpush.xpose.msra.mxu0 0.0
    %1339 = vmatpush.xpose.msra.mxu0 0.0
    %1340 = vmatpush.xpose.msra.mxu0 0.0
    %1341 = vmatpush.xpose.msra.mxu0 0.0
    %1342 = vmatpush.xpose.msra.mxu0 0.0
    %1343 = vmatpush.xpose.msra.mxu0 0.0
    %1344 = vmatpush.xpose.msra.mxu0 %v1327
    %1345 = vmatmul.f32.gmra.mxu0 %v1325
    %v1346 = vpop.f32.mrf.mxu0
    %v1347 = vadd.f32 0.0, %v1346
    %1348 = vdwg.mxu0
    %v1349 = vmul.f32 %v1347, 0.35355338
    %v1350 = vsel %vm108, %v1349, -1e+09
    %v1351 = vsel %vm80, %v1350, -inf
    %1352 = vmax.xlane.f32.xlu0 %v1351
    %v1353 = vpop.xlane.xlu0 %1352
    %v1354 = vsub.f32 %v1350, %v1353
    %v1355 = vmul.f32 %v1354, 1.442695
    %v1356 = vpow.pop %v1355
    %v1357 = vsel %vm80, %v1356, 0.0
    %1358 = vadd.xlane.f32.xlu0 %v1357
    %v1359 = vpop.xlane.xlu0 %1358
    %v1360 = vrcp.pop %v1359
    %v1361 = vmul.f32 %v1359, %v1360
    %v1362 = vsub.f32 1.0, %v1361
    %v1363 = vmul.f32 %v1360, %v1362
    %v1364 = vadd.f32 %v1360, %v1363
    %vm1365 = vweird.f32 %v1359
    %vm1366 = vweird.f32 %v1360
    %vm1367 = vmor %vm1365, %vm1366
    %v1368 = vsel %vm1367, %v1360, %v1364
    %v1369 = vand.u32 2147483647, %v1359
    %vm1370 = vcmp.eq.f32.partialorder %v1369, 8.507059e+37
    %v1371 = vand.u32 %v1359, 2147483648
    %v1372 = vor.u32 1.1754944e-38, %v1371
    %v1373 = vsel %vm1370, %v1372, %v1368
    %v1374 = vmul.f32 %v1356, %v1373
    %1375 = vrot.lane.b32.xlu0 %v1081, 40
    %v1376 = vpop.permute.xlu0 %1375
    %v1379 = vsel %vm80, %v1374, 0
    %1381 = vmatpush.msra.mxu0 0.0
    %1382 = vmatpush.msra.mxu0 0.0
    %1383 = vmatpush.msra.mxu0 0.0
    %1384 = vmatpush.msra.mxu0 0.0
    %1385 = vmatpush.msra.mxu0 0.0
    %1386 = vmatpush.msra.mxu0 0.0
    %1387 = vmatpush.msra.mxu0 0.0
    %1388 = vmatpush.msra.mxu0 0.0
    %1389 = vmatpush.msra.mxu0 0.0
    %1390 = vmatpush.msra.mxu0 0.0
    %1391 = vmatpush.msra.mxu0 0.0
    %1392 = vmatpush.msra.mxu0 0.0
    %1393 = vmatpush.msra.mxu0 0.0
    %1394 = vmatpush.msra.mxu0 0.0
    %1395 = vmatpush.msra.mxu0 0.0
    %1396 = vmatpush.msra.mxu0 %v1376
    %1397 = vmatmul.f32.gmra.mxu0 %v1379
    %v1398 = vpop.f32.mrf.mxu0
    %v1399 = vadd.f32 0.0, %v1398
    %1400 = vdwg.mxu0
    %1402 = vrot.lane.b32.xlu0 %v1239, 8
    %v1403 = vpop.permute.xlu0 %1402
    %1406 = vrot.lane.b32.xlu0 %v1319, 16
    %v1407 = vpop.permute.xlu0 %1406
    %1410 = vrot.lane.b32.xlu0 %v1399, 24
    %v1411 = vpop.permute.xlu0 %1410
    %v1413 = vsel %vm80, %v1159, %v1403
    %v1414 = vsel %vm413, %v1413, %v1407
    %v1415 = vsel %vm415, %v1414, %v1411
    %v1416 = vld [vmem:[#allocation2 + $0x10] sm:$0xff]
    %1418 = vrot.lane.b32.xlu0 %v1416, 96
    %v1419 = vpop.permute.xlu0 %1418
    %v1420 = vsel %vm80, %v1416, 0
    %v1422 = vsel %vm80, %v1419, 0
    %1424 = vmatpush.xpose.msra.mxu0 0.0
    %1425 = vmatpush.xpose.msra.mxu0 0.0
    %1426 = vmatpush.xpose.msra.mxu0 0.0
    %1427 = vmatpush.xpose.msra.mxu0 0.0
    %1428 = vmatpush.xpose.msra.mxu0 0.0
    %1429 = vmatpush.xpose.msra.mxu0 0.0
    %1430 = vmatpush.xpose.msra.mxu0 0.0
    %1431 = vmatpush.xpose.msra.mxu0 0.0
    %1432 = vmatpush.xpose.msra.mxu0 0.0
    %1433 = vmatpush.xpose.msra.mxu0 0.0
    %1434 = vmatpush.xpose.msra.mxu0 0.0
    %1435 = vmatpush.xpose.msra.mxu0 0.0
    %1436 = vmatpush.xpose.msra.mxu0 0.0
    %1437 = vmatpush.xpose.msra.mxu0 0.0
    %1438 = vmatpush.xpose.msra.mxu0 0.0
    %1439 = vmatpush.xpose.msra.mxu0 %v1422
    %1440 = vmatmul.f32.gmra.mxu0 %v1420
    %v1441 = vpop.f32.mrf.mxu0
    %v1442 = vadd.f32 0.0, %v1441
    %1443 = vdwg.mxu0
    %v1444 = vmul.f32 %v1442, 0.35355338
    %v1445 = vsel %vm447, %v1444, -1e+09
    %v1446 = vsel %vm80, %v1445, -inf
    %1447 = vmax.xlane.f32.xlu0 %v1446
    %v1448 = vpop.xlane.xlu0 %1447
    %v1449 = vsub.f32 %v1445, %v1448
    %v1450 = vmul.f32 %v1449, 1.442695
    %v1451 = vpow.pop %v1450
    %v1452 = vsel %vm80, %v1451, 0.0
    %1453 = vadd.xlane.f32.xlu0 %v1452
    %v1454 = vpop.xlane.xlu0 %1453
    %v1455 = vrcp.pop %v1454
    %v1456 = vmul.f32 %v1454, %v1455
    %v1457 = vsub.f32 1.0, %v1456
    %v1458 = vmul.f32 %v1455, %v1457
    %v1459 = vadd.f32 %v1455, %v1458
    %vm1460 = vweird.f32 %v1454
    %vm1461 = vweird.f32 %v1455
    %vm1462 = vmor %vm1460, %vm1461
    %v1463 = vsel %vm1462, %v1455, %v1459
    %v1464 = vand.u32 2147483647, %v1454
    %vm1465 = vcmp.eq.f32.partialorder %v1464, 8.507059e+37
    %v1466 = vand.u32 %v1454, 2147483648
    %v1467 = vor.u32 1.1754944e-38, %v1466
    %v1468 = vsel %vm1465, %v1467, %v1463
    %v1469 = vmul.f32 %v1451, %v1468
    %1470 = vrot.lane.b32.xlu0 %v1416, 64
    %v1471 = vpop.permute.xlu0 %1470
    %v1474 = vsel %vm80, %v1469, 0
    %1476 = vmatpush.msra.mxu0 0.0
    %1477 = vmatpush.msra.mxu0 0.0
    %1478 = vmatpush.msra.mxu0 0.0
    %1479 = vmatpush.msra.mxu0 0.0
    %1480 = vmatpush.msra.mxu0 0.0
    %1481 = vmatpush.msra.mxu0 0.0
    %1482 = vmatpush.msra.mxu0 0.0
    %1483 = vmatpush.msra.mxu0 0.0
    %1484 = vmatpush.msra.mxu0 0.0
    %1485 = vmatpush.msra.mxu0 0.0
    %1486 = vmatpush.msra.mxu0 0.0
    %1487 = vmatpush.msra.mxu0 0.0
    %1488 = vmatpush.msra.mxu0 0.0
    %1489 = vmatpush.msra.mxu0 0.0
    %1490 = vmatpush.msra.mxu0 0.0
    %1491 = vmatpush.msra.mxu0 %v1471
    %1492 = vmatmul.f32.gmra.mxu0 %v1474
    %v1493 = vpop.f32.mrf.mxu0
    %v1494 = vadd.f32 0.0, %v1493
    %1495 = vdwg.mxu0
    %1496 = vrot.lane.b32.xlu0 %v1416, 120
    %v1497 = vpop.permute.xlu0 %1496
    %1498 = vrot.lane.b32.xlu0 %v1416, 88
    %v1499 = vpop.permute.xlu0 %1498
    %v1500 = vsel %vm80, %v1497, 0
    %v1502 = vsel %vm80, %v1499, 0
    %1504 = vmatpush.xpose.msra.mxu0 0.0
    %1505 = vmatpush.xpose.msra.mxu0 0.0
    %1506 = vmatpush.xpose.msra.mxu0 0.0
    %1507 = vmatpush.xpose.msra.mxu0 0.0
    %1508 = vmatpush.xpose.msra.mxu0 0.0
    %1509 = vmatpush.xpose.msra.mxu0 0.0
    %1510 = vmatpush.xpose.msra.mxu0 0.0
    %1511 = vmatpush.xpose.msra.mxu0 0.0
    %1512 = vmatpush.xpose.msra.mxu0 0.0
    %1513 = vmatpush.xpose.msra.mxu0 0.0
    %1514 = vmatpush.xpose.msra.mxu0 0.0
    %1515 = vmatpush.xpose.msra.mxu0 0.0
    %1516 = vmatpush.xpose.msra.mxu0 0.0
    %1517 = vmatpush.xpose.msra.mxu0 0.0
    %1518 = vmatpush.xpose.msra.mxu0 0.0
    %1519 = vmatpush.xpose.msra.mxu0 %v1502
    %1520 = vmatmul.f32.gmra.mxu0 %v1500
    %v1521 = vpop.f32.mrf.mxu0
    %v1522 = vadd.f32 0.0, %v1521
    %1523 = vdwg.mxu0
    %v1524 = vmul.f32 %v1522, 0.35355338
    %v1525 = vsel %vm447, %v1524, -1e+09
    %v1526 = vsel %vm80, %v1525, -inf
    %1527 = vmax.xlane.f32.xlu0 %v1526
    %v1528 = vpop.xlane.xlu0 %1527
    %v1529 = vsub.f32 %v1525, %v1528
    %v1530 = vmul.f32 %v1529, 1.442695
    %v1531 = vpow.pop %v1530
    %v1532 = vsel %vm80, %v1531, 0.0
    %1533 = vadd.xlane.f32.xlu0 %v1532
    %v1534 = vpop.xlane.xlu0 %1533
    %v1535 = vrcp.pop %v1534
    %v1536 = vmul.f32 %v1534, %v1535
    %v1537 = vsub.f32 1.0, %v1536
    %v1538 = vmul.f32 %v1535, %v1537
    %v1539 = vadd.f32 %v1535, %v1538
    %vm1540 = vweird.f32 %v1534
    %vm1541 = vweird.f32 %v1535
    %vm1542 = vmor %vm1540, %vm1541
    %v1543 = vsel %vm1542, %v1535, %v1539
    %v1544 = vand.u32 2147483647, %v1534
    %vm1545 = vcmp.eq.f32.partialorder %v1544, 8.507059e+37
    %v1546 = vand.u32 %v1534, 2147483648
    %v1547 = vor.u32 1.1754944e-38, %v1546
    %v1548 = vsel %vm1545, %v1547, %v1543
    %v1549 = vmul.f32 %v1531, %v1548
    %1550 = vrot.lane.b32.xlu0 %v1416, 56
    %v1551 = vpop.permute.xlu0 %1550
    %v1554 = vsel %vm80, %v1549, 0
    %1556 = vmatpush.msra.mxu0 0.0
    %1557 = vmatpush.msra.mxu0 0.0
    %1558 = vmatpush.msra.mxu0 0.0
    %1559 = vmatpush.msra.mxu0 0.0
    %1560 = vmatpush.msra.mxu0 0.0
    %1561 = vmatpush.msra.mxu0 0.0
    %1562 = vmatpush.msra.mxu0 0.0
    %1563 = vmatpush.msra.mxu0 0.0
    %1564 = vmatpush.msra.mxu0 0.0
    %1565 = vmatpush.msra.mxu0 0.0
    %1566 = vmatpush.msra.mxu0 0.0
    %1567 = vmatpush.msra.mxu0 0.0
    %1568 = vmatpush.msra.mxu0 0.0
    %1569 = vmatpush.msra.mxu0 0.0
    %1570 = vmatpush.msra.mxu0 0.0
    %1571 = vmatpush.msra.mxu0 %v1551
    %1572 = vmatmul.f32.gmra.mxu0 %v1554
    %v1573 = vpop.f32.mrf.mxu0
    %v1574 = vadd.f32 0.0, %v1573
    %1575 = vdwg.mxu0
    %1576 = vrot.lane.b32.xlu0 %v1416, 112
    %v1577 = vpop.permute.xlu0 %1576
    %1578 = vrot.lane.b32.xlu0 %v1416, 80
    %v1579 = vpop.permute.xlu0 %1578
    %v1580 = vsel %vm80, %v1577, 0
    %v1582 = vsel %vm80, %v1579, 0
    %1584 = vmatpush.xpose.msra.mxu0 0.0
    %1585 = vmatpush.xpose.msra.mxu0 0.0
    %1586 = vmatpush.xpose.msra.mxu0 0.0
    %1587 = vmatpush.xpose.msra.mxu0 0.0
    %1588 = vmatpush.xpose.msra.mxu0 0.0
    %1589 = vmatpush.xpose.msra.mxu0 0.0
    %1590 = vmatpush.xpose.msra.mxu0 0.0
    %1591 = vmatpush.xpose.msra.mxu0 0.0
    %1592 = vmatpush.xpose.msra.mxu0 0.0
    %1593 = vmatpush.xpose.msra.mxu0 0.0
    %1594 = vmatpush.xpose.msra.mxu0 0.0
    %1595 = vmatpush.xpose.msra.mxu0 0.0
    %1596 = vmatpush.xpose.msra.mxu0 0.0
    %1597 = vmatpush.xpose.msra.mxu0 0.0
    %1598 = vmatpush.xpose.msra.mxu0 0.0
    %1599 = vmatpush.xpose.msra.mxu0 %v1582
    %1600 = vmatmul.f32.gmra.mxu0 %v1580
    %v1601 = vpop.f32.mrf.mxu0
    %v1602 = vadd.f32 0.0, %v1601
    %1603 = vdwg.mxu0
    %v1604 = vmul.f32 %v1602, 0.35355338
    %v1605 = vsel %vm447, %v1604, -1e+09
    %v1606 = vsel %vm80, %v1605, -inf
    %1607 = vmax.xlane.f32.xlu0 %v1606
    %v1608 = vpop.xlane.xlu0 %1607
    %v1609 = vsub.f32 %v1605, %v1608
    %v1610 = vmul.f32 %v1609, 1.442695
    %v1611 = vpow.pop %v1610
    %v1612 = vsel %vm80, %v1611, 0.0
    %1613 = vadd.xlane.f32.xlu0 %v1612
    %v1614 = vpop.xlane.xlu0 %1613
    %v1615 = vrcp.pop %v1614
    %v1616 = vmul.f32 %v1614, %v1615
    %v1617 = vsub.f32 1.0, %v1616
    %v1618 = vmul.f32 %v1615, %v1617
    %v1619 = vadd.f32 %v1615, %v1618
    %vm1620 = vweird.f32 %v1614
    %vm1621 = vweird.f32 %v1615
    %vm1622 = vmor %vm1620, %vm1621
    %v1623 = vsel %vm1622, %v1615, %v1619
    %v1624 = vand.u32 2147483647, %v1614
    %vm1625 = vcmp.eq.f32.partialorder %v1624, 8.507059e+37
    %v1626 = vand.u32 %v1614, 2147483648
    %v1627 = vor.u32 1.1754944e-38, %v1626
    %v1628 = vsel %vm1625, %v1627, %v1623
    %v1629 = vmul.f32 %v1611, %v1628
    %1630 = vrot.lane.b32.xlu0 %v1416, 48
    %v1631 = vpop.permute.xlu0 %1630
    %v1634 = vsel %vm80, %v1629, 0
    %1636 = vmatpush.msra.mxu0 0.0
    %1637 = vmatpush.msra.mxu0 0.0
    %1638 = vmatpush.msra.mxu0 0.0
    %1639 = vmatpush.msra.mxu0 0.0
    %1640 = vmatpush.msra.mxu0 0.0
    %1641 = vmatpush.msra.mxu0 0.0
    %1642 = vmatpush.msra.mxu0 0.0
    %1643 = vmatpush.msra.mxu0 0.0
    %1644 = vmatpush.msra.mxu0 0.0
    %1645 = vmatpush.msra.mxu0 0.0
    %1646 = vmatpush.msra.mxu0 0.0
    %1647 = vmatpush.msra.mxu0 0.0
    %1648 = vmatpush.msra.mxu0 0.0
    %1649 = vmatpush.msra.mxu0 0.0
    %1650 = vmatpush.msra.mxu0 0.0
    %1651 = vmatpush.msra.mxu0 %v1631
    %1652 = vmatmul.f32.gmra.mxu0 %v1634
    %v1653 = vpop.f32.mrf.mxu0
    %v1654 = vadd.f32 0.0, %v1653
    %1655 = vdwg.mxu0
    %1656 = vrot.lane.b32.xlu0 %v1416, 104
    %v1657 = vpop.permute.xlu0 %1656
    %1658 = vrot.lane.b32.xlu0 %v1416, 72
    %v1659 = vpop.permute.xlu0 %1658
    %v1660 = vsel %vm80, %v1657, 0
    %v1662 = vsel %vm80, %v1659, 0
    %1664 = vmatpush.xpose.msra.mxu0 0.0
    %1665 = vmatpush.xpose.msra.mxu0 0.0
    %1666 = vmatpush.xpose.msra.mxu0 0.0
    %1667 = vmatpush.xpose.msra.mxu0 0.0
    %1668 = vmatpush.xpose.msra.mxu0 0.0
    %1669 = vmatpush.xpose.msra.mxu0 0.0
    %1670 = vmatpush.xpose.msra.mxu0 0.0
    %1671 = vmatpush.xpose.msra.mxu0 0.0
    %1672 = vmatpush.xpose.msra.mxu0 0.0
    %1673 = vmatpush.xpose.msra.mxu0 0.0
    %1674 = vmatpush.xpose.msra.mxu0 0.0
    %1675 = vmatpush.xpose.msra.mxu0 0.0
    %1676 = vmatpush.xpose.msra.mxu0 0.0
    %1677 = vmatpush.xpose.msra.mxu0 0.0
    %1678 = vmatpush.xpose.msra.mxu0 0.0
    %1679 = vmatpush.xpose.msra.mxu0 %v1662
    %1680 = vmatmul.f32.gmra.mxu0 %v1660
    %v1681 = vpop.f32.mrf.mxu0
    %v1682 = vadd.f32 0.0, %v1681
    %1683 = vdwg.mxu0
    %v1684 = vmul.f32 %v1682, 0.35355338
    %v1685 = vsel %vm447, %v1684, -1e+09
    %v1686 = vsel %vm80, %v1685, -inf
    %1687 = vmax.xlane.f32.xlu0 %v1686
    %v1688 = vpop.xlane.xlu0 %1687
    %v1689 = vsub.f32 %v1685, %v1688
    %v1690 = vmul.f32 %v1689, 1.442695
    %v1691 = vpow.pop %v1690
    %v1692 = vsel %vm80, %v1691, 0.0
    %1693 = vadd.xlane.f32.xlu0 %v1692
    %v1694 = vpop.xlane.xlu0 %1693
    %v1695 = vrcp.pop %v1694
    %v1696 = vmul.f32 %v1694, %v1695
    %v1697 = vsub.f32 1.0, %v1696
    %v1698 = vmul.f32 %v1695, %v1697
    %v1699 = vadd.f32 %v1695, %v1698
    %vm1700 = vweird.f32 %v1694
    %vm1701 = vweird.f32 %v1695
    %vm1702 = vmor %vm1700, %vm1701
    %v1703 = vsel %vm1702, %v1695, %v1699
    %v1704 = vand.u32 2147483647, %v1694
    %vm1705 = vcmp.eq.f32.partialorder %v1704, 8.507059e+37
    %v1706 = vand.u32 %v1694, 2147483648
    %v1707 = vor.u32 1.1754944e-38, %v1706
    %v1708 = vsel %vm1705, %v1707, %v1703
    %v1709 = vmul.f32 %v1691, %v1708
    %1710 = vrot.lane.b32.xlu0 %v1416, 40
    %v1711 = vpop.permute.xlu0 %1710
    %v1714 = vsel %vm80, %v1709, 0
    %1716 = vmatpush.msra.mxu0 0.0
    %1717 = vmatpush.msra.mxu0 0.0
    %1718 = vmatpush.msra.mxu0 0.0
    %1719 = vmatpush.msra.mxu0 0.0
    %1720 = vmatpush.msra.mxu0 0.0
    %1721 = vmatpush.msra.mxu0 0.0
    %1722 = vmatpush.msra.mxu0 0.0
    %1723 = vmatpush.msra.mxu0 0.0
    %1724 = vmatpush.msra.mxu0 0.0
    %1725 = vmatpush.msra.mxu0 0.0
    %1726 = vmatpush.msra.mxu0 0.0
    %1727 = vmatpush.msra.mxu0 0.0
    %1728 = vmatpush.msra.mxu0 0.0
    %1729 = vmatpush.msra.mxu0 0.0
    %1730 = vmatpush.msra.mxu0 0.0
    %1731 = vmatpush.msra.mxu0 %v1711
    %1732 = vmatmul.f32.gmra.mxu0 %v1714
    %v1733 = vpop.f32.mrf.mxu0
    %v1734 = vadd.f32 0.0, %v1733
    %1735 = vdwg.mxu0
    %1737 = vrot.lane.b32.xlu0 %v1574, 8
    %v1738 = vpop.permute.xlu0 %1737
    %1741 = vrot.lane.b32.xlu0 %v1654, 16
    %v1742 = vpop.permute.xlu0 %1741
    %1745 = vrot.lane.b32.xlu0 %v1734, 24
    %v1746 = vpop.permute.xlu0 %1745
    %v1748 = vsel %vm80, %v1494, %v1738
    %v1749 = vsel %vm413, %v1748, %v1742
    %v1750 = vsel %vm415, %v1749, %v1746
    %v1751 = vld [vmem:[%s3 + $0x11] ss:$0 sm:$0xff]
    %v1753 = vsel %vm42, %v1415, 0
    %v1756 = vsel %vm42, %v1750, 0
    %1758 = vmatpush.msra.mxu0 0.0
    %1759 = vmatpush.msra.mxu0 0.0
    %1760 = vmatpush.msra.mxu0 0.0
    %1761 = vmatpush.msra.mxu0 0.0
    %1762 = vmatpush.msra.mxu0 0.0
    %1763 = vmatpush.msra.mxu0 0.0
    %1764 = vmatpush.msra.mxu0 0.0
    %1765 = vmatpush.msra.mxu0 0.0
    %1766 = vmatpush.msra.mxu0 0.0
    %1767 = vmatpush.msra.mxu0 0.0
    %1768 = vmatpush.msra.mxu0 0.0
    %1769 = vmatpush.msra.mxu0 0.0
    %1770 = vmatpush.msra.mxu0 %v1036
    %1771 = vmatpush.msra.mxu0 %v1035
    %1772 = vmatpush.msra.mxu0 %v1034
    %1773 = vmatpush.msra.mxu0 %v1033
    %1774 = vmatmul.f32.gmra.mxu0 %v1753
    %v1775 = vpop.f32.mrf.mxu0
    %v1776 = vadd.f32 %v1751, %v1775
    %1777 = vmatmul.f32.gmra.mxu0 %v1756
    %v1778 = vpop.f32.mrf.mxu0
    %v1779 = vadd.f32 %v1751, %v1778
    %1780 = vdwg.mxu0
    %v1781 = vadd.f32 %v1027, %v1776
    %v1782 = vadd.f32 %v1028, %v1779
    %v1783 = vld [vmem:[%s3 + $0x12] ss:$0 sm:$0xff]
    %v1784 = vld [vmem:[%s3 + $0x13] ss:$0 sm:$0xff]
    %v1785 = vsel %vm42, %v1781, 0.0
    %1786 = vadd.xlane.f32.xlu0 %v1785
    %v1787 = vpop.xlane.xlu0 %1786
    %v1788 = vsel %vm42, %v1782, 0.0
    %1789 = vadd.xlane.f32.xlu0 %v1788
    %v1790 = vpop.xlane.xlu0 %1789
    %v1791 = vmul.f32 %v1787, %v800
    %v1792 = vmul.f32 %v1790, %v800
    %v1793 = vsub.f32 %v1781, %v1791
    %v1794 = vsub.f32 %v1782, %v1792
    %v1795 = vmul.f32 %v1793, %v1793
    %v1796 = vmul.f32 %v1794, %v1794
    %v1797 = vsel %vm42, %v1795, 0.0
    %1798 = vadd.xlane.f32.xlu0 %v1797
    %v1799 = vpop.xlane.xlu0 %1798
    %v1800 = vsel %vm42, %v1796, 0.0
    %1801 = vadd.xlane.f32.xlu0 %v1800
    %v1802 = vpop.xlane.xlu0 %1801
    %v1803 = vmul.f32 %v1799, %v819
    %v1804 = vmul.f32 %v1802, %v819
    %v1805 = vrsqrt.pop %v1803
    %v1806 = vmul.f32 %v1805, %v1803
    %v1807 = vmul.f32 %v1806, %v1805
    %v1808 = vmul.f32 0.5, %v1807
    %v1809 = vsub.f32 1.5, %v1808
    %v1810 = vmul.f32 %v1805, %v1809
    %v1811 = vmul.f32 %v1803, %v1810
    %vm1812 = vcmp.eq.f32.partialorder %v1803, inf
    %v1813 = vsel %vm1812, %v1803, %v1811
    %vm1814 = vcmp.eq.f32.partialorder %v1803, 0.0
    %v1815 = vand.u32 %v1803, 2147483648
    %v1816 = vsel %vm1814, %v1815, %v1813
    %v1817 = vrsqrt.pop %v1804
    %v1818 = vmul.f32 %v1817, %v1804
    %v1819 = vmul.f32 %v1818, %v1817
    %v1820 = vmul.f32 0.5, %v1819
    %v1821 = vsub.f32 1.5, %v1820
    %v1822 = vmul.f32 %v1817, %v1821
    %v1823 = vmul.f32 %v1804, %v1822
    %vm1824 = vcmp.eq.f32.partialorder %v1804, inf
    %v1825 = vsel %vm1824, %v1804, %v1823
    %vm1826 = vcmp.eq.f32.partialorder %v1804, 0.0
    %v1827 = vand.u32 %v1804, 2147483648
    %v1828 = vsel %vm1826, %v1827, %v1825
    %v1829 = vadd.f32 %v1816, 1e-05
    %v1830 = vadd.f32 %v1828, 1e-05
    %v1831 = vrcp.pop %v1829
    %v1832 = vmul.f32 %v1829, %v1831
    %v1833 = vsub.f32 1.0, %v1832
    %v1834 = vmul.f32 %v1831, %v1833
    %v1835 = vadd.f32 %v1831, %v1834
    %vm1836 = vweird.f32 %v1829
    %vm1837 = vweird.f32 %v1831
    %vm1838 = vmor %vm1836, %vm1837
    %v1839 = vsel %vm1838, %v1831, %v1835
    %v1840 = vand.u32 2147483647, %v1829
    %vm1841 = vcmp.eq.f32.partialorder %v1840, 8.507059e+37
    %v1842 = vand.u32 %v1829, 2147483648
    %v1843 = vor.u32 1.1754944e-38, %v1842
    %v1844 = vsel %vm1841, %v1843, %v1839
    %v1845 = vmul.f32 %v1793, %v1844
    %v1846 = vrcp.pop %v1830
    %v1847 = vmul.f32 %v1830, %v1846
    %v1848 = vsub.f32 1.0, %v1847
    %v1849 = vmul.f32 %v1846, %v1848
    %v1850 = vadd.f32 %v1846, %v1849
    %vm1851 = vweird.f32 %v1830
    %vm1852 = vweird.f32 %v1846
    %vm1853 = vmor %vm1851, %vm1852
    %v1854 = vsel %vm1853, %v1846, %v1850
    %v1855 = vand.u32 2147483647, %v1830
    %vm1856 = vcmp.eq.f32.partialorder %v1855, 8.507059e+37
    %v1857 = vand.u32 %v1830, 2147483648
    %v1858 = vor.u32 1.1754944e-38, %v1857
    %v1859 = vsel %vm1856, %v1858, %v1854
    %v1860 = vmul.f32 %v1794, %v1859
    %v1861 = vmul.f32 %v1783, %v1845
    %v1862 = vmul.f32 %v1783, %v1860
    %v1863 = vadd.f32 %v1861, %v1784
    %v1864 = vadd.f32 %v1862, %v1784
    %v1865 = vld [vmem:[%s3 + $0x14] ss:$0 sm:$0xff]
    %v1867 = vsel %vm42, %v1863, 0
    %v1870 = vsel %vm42, %v1864, 0
    %1872 = vmatpush.msra.mxu0 0.0
    %1873 = vmatpush.msra.mxu0 0.0
    %1874 = vmatpush.msra.mxu0 0.0
    %1875 = vmatpush.msra.mxu0 0.0
    %1876 = vmatpush.msra.mxu0 0.0
    %1877 = vmatpush.msra.mxu0 0.0
    %1878 = vmatpush.msra.mxu0 0.0
    %1879 = vmatpush.msra.mxu0 0.0
    %1880 = vmatpush.msra.mxu0 0.0
    %1881 = vmatpush.msra.mxu0 0.0
    %1882 = vmatpush.msra.mxu0 0.0
    %1883 = vmatpush.msra.mxu0 0.0
    %1884 = vmatpush.msra.mxu0 %v1040
    %1885 = vmatpush.msra.mxu0 %v1039
    %1886 = vmatpush.msra.mxu0 %v1038
    %1887 = vmatpush.msra.mxu0 %v1037
    %1888 = vmatmul.f32.gmra.mxu0 %v1867
    %v1889 = vpop.f32.mrf.mxu0
    %v1890 = vadd.f32 %v1865, %v1889
    %1891 = vmatmul.f32.gmra.mxu0 %v1870
    %v1892 = vpop.f32.mrf.mxu0
    %v1893 = vadd.f32 %v1865, %v1892
    %1894 = vdwg.mxu0
    %v1895 = vmax.f32 %v1890, 0.0
    %v1896 = vmax.f32 %v1893, 0.0
    %v1897 = vld [vmem:[%s3 + $0x15] ss:$0 sm:$0xff]
    %v1899 = vsel %vm915, %v1895, 0
    %v1902 = vsel %vm915, %v1896, 0
    %1904 = vmatpush.msra.mxu0 0.0
    %1905 = vmatpush.msra.mxu0 0.0
    %1906 = vmatpush.msra.mxu0 0.0
    %1907 = vmatpush.msra.mxu0 0.0
    %1908 = vmatpush.msra.mxu0 0.0
    %1909 = vmatpush.msra.mxu0 0.0
    %1910 = vmatpush.msra.mxu0 0.0
    %1911 = vmatpush.msra.mxu0 0.0
    %1912 = vmatpush.msra.mxu0 %v1048
    %1913 = vmatpush.msra.mxu0 %v1047
    %1914 = vmatpush.msra.mxu0 %v1046
    %1915 = vmatpush.msra.mxu0 %v1045
    %1916 = vmatpush.msra.mxu0 %v1044
    %1917 = vmatpush.msra.mxu0 %v1043
    %1918 = vmatpush.msra.mxu0 %v1042
    %1919 = vmatpush.msra.mxu0 %v1041
    %1920 = vmatmul.f32.gmra.mxu0 %v1899
    %v1921 = vpop.f32.mrf.mxu0
    %v1922 = vadd.f32 %v1897, %v1921
    %1923 = vmatmul.f32.gmra.mxu0 %v1902
    %v1924 = vpop.f32.mrf.mxu0
    %v1925 = vadd.f32 %v1897, %v1924
    %1926 = vdwg.mxu0
    %v1927 = vadd.f32 %v1863, %v1922
    %v1928 = vadd.f32 %v1864, %v1925
    %v1929 = vld [vmem:[%s3 + $0x16] ss:$0 sm:$0xff]
    %v1930 = vld [vmem:[%s3 + $0x17] ss:$0 sm:$0xff]
    %v1931 = vsel %vm42, %v1927, 0.0
    %1932 = vadd.xlane.f32.xlu0 %v1931
    %v1933 = vpop.xlane.xlu0 %1932
    %v1934 = vsel %vm42, %v1928, 0.0
    %1935 = vadd.xlane.f32.xlu0 %v1934
    %v1936 = vpop.xlane.xlu0 %1935
    %v1937 = vmul.f32 %v1933, %v800
    %v1938 = vmul.f32 %v1936, %v800
    %v1939 = vsub.f32 %v1927, %v1937
    %v1940 = vsub.f32 %v1928, %v1938
    %v1941 = vmul.f32 %v1939, %v1939
    %v1942 = vmul.f32 %v1940, %v1940
    %v1943 = vsel %vm42, %v1941, 0.0
    %1944 = vadd.xlane.f32.xlu0 %v1943
    %v1945 = vpop.xlane.xlu0 %1944
    %v1946 = vsel %vm42, %v1942, 0.0
    %1947 = vadd.xlane.f32.xlu0 %v1946
    %v1948 = vpop.xlane.xlu0 %1947
    %v1949 = vmul.f32 %v1945, %v819
    %v1950 = vmul.f32 %v1948, %v819
    %v1951 = vrsqrt.pop %v1949
    %v1952 = vmul.f32 %v1951, %v1949
    %v1953 = vmul.f32 %v1952, %v1951
    %v1954 = vmul.f32 0.5, %v1953
    %v1955 = vsub.f32 1.5, %v1954
    %v1956 = vmul.f32 %v1951, %v1955
    %v1957 = vmul.f32 %v1949, %v1956
    %vm1958 = vcmp.eq.f32.partialorder %v1949, inf
    %v1959 = vsel %vm1958, %v1949, %v1957
    %vm1960 = vcmp.eq.f32.partialorder %v1949, 0.0
    %v1961 = vand.u32 %v1949, 2147483648
    %v1962 = vsel %vm1960, %v1961, %v1959
    %v1963 = vrsqrt.pop %v1950
    %v1964 = vmul.f32 %v1963, %v1950
    %v1965 = vmul.f32 %v1964, %v1963
    %v1966 = vmul.f32 0.5, %v1965
    %v1967 = vsub.f32 1.5, %v1966
    %v1968 = vmul.f32 %v1963, %v1967
    %v1969 = vmul.f32 %v1950, %v1968
    %vm1970 = vcmp.eq.f32.partialorder %v1950, inf
    %v1971 = vsel %vm1970, %v1950, %v1969
    %vm1972 = vcmp.eq.f32.partialorder %v1950, 0.0
    %v1973 = vand.u32 %v1950, 2147483648
    %v1974 = vsel %vm1972, %v1973, %v1971
    %v1975 = vadd.f32 %v1962, 1e-05
    %v1976 = vadd.f32 %v1974, 1e-05
    %v1977 = vrcp.pop %v1975
    %v1978 = vmul.f32 %v1975, %v1977
    %v1979 = vsub.f32 1.0, %v1978
    %v1980 = vmul.f32 %v1977, %v1979
    %v1981 = vadd.f32 %v1977, %v1980
    %vm1982 = vweird.f32 %v1975
    %vm1983 = vweird.f32 %v1977
    %vm1984 = vmor %vm1982, %vm1983
    %v1985 = vsel %vm1984, %v1977, %v1981
    %v1986 = vand.u32 2147483647, %v1975
    %vm1987 = vcmp.eq.f32.partialorder %v1986, 8.507059e+37
    %v1988 = vand.u32 %v1975, 2147483648
    %v1989 = vor.u32 1.1754944e-38, %v1988
    %v1990 = vsel %vm1987, %v1989, %v1985
    %v1991 = vmul.f32 %v1939, %v1990
    %v1992 = vrcp.pop %v1976
    %v1993 = vmul.f32 %v1976, %v1992
    %v1994 = vsub.f32 1.0, %v1993
    %v1995 = vmul.f32 %v1992, %v1994
    %v1996 = vadd.f32 %v1992, %v1995
    %vm1997 = vweird.f32 %v1976
    %vm1998 = vweird.f32 %v1992
    %vm1999 = vmor %vm1997, %vm1998
    %v2000 = vsel %vm1999, %v1992, %v1996
    %v2001 = vand.u32 2147483647, %v1976
    %vm2002 = vcmp.eq.f32.partialorder %v2001, 8.507059e+37
    %v2003 = vand.u32 %v1976, 2147483648
    %v2004 = vor.u32 1.1754944e-38, %v2003
    %v2005 = vsel %vm2002, %v2004, %v2000
    %v2006 = vmul.f32 %v1940, %v2005
    %v2007 = vmul.f32 %v1929, %v1991
    %v2008 = vmul.f32 %v1929, %v2006
    %v2009 = vadd.f32 %v2007, %v1930
    %v2010 = vadd.f32 %v2008, %v1930
    %s2011 = scalar_lea.vmem %s1, 2
    %v2012 = vld [vmem:[%s2011] sm:$0x3]
    %v2014 = vrot.slane %v2009, 1
    %2015 = vrot.lane.b32.xlu0 %v2014, 32
    %v2016 = vpop.permute.xlu0 %2015
    %v2018 = vsel %vm42, %v2009, %v2016
    %v2020 = vrot.slane %v2010, 1
    %2021 = vrot.lane.b32.xlu0 %v2020, 32
    %v2022 = vpop.permute.xlu0 %2021
    %v2024 = vsel %vm42, %v2010, %v2022
    %v2026 = vrot.slane %v2018, 1
    %v2028 = vrot.slane %v2018, 2
    %v2030 = vrot.slane %v2018, 3
    %v2033 = vrot.slane %v2024, 4
    %v2035 = vrot.slane %v2024, 5
    %v2037 = vrot.slane %v2024, 6
    %v2039 = vrot.slane %v2024, 7
    %vm2041 = vcmask 1040384
    %v2042 = vsel %vm2041, %v2018, %v2026
    %vm2043 = vcmask 1041408
    %v2044 = vsel %vm2043, %v2042, %v2028
    %vm2045 = vcmask 1042432
    %v2046 = vsel %vm2045, %v2044, %v2030
    %vm2047 = vcmask 1043456
    %v2048 = vsel %vm2047, %v2046, %v2033
    %vm2049 = vcmask 1044480
    %v2050 = vsel %vm2049, %v2048, %v2035
    %vm2051 = vcmask 1045504
    %v2052 = vsel %vm2051, %v2050, %v2037
    %vm2053 = vcmask 1046528
    %v2054 = vsel %vm2053, %v2052, %v2039
    %v2055 = vld [vmem:[%s2 + $0x280] sm:$0xff]
    %v2056 = vld [vmem:[%s2 + $0x288] sm:$0xff]
    %v2057 = vld [vmem:[%s2 + $0x290] sm:$0xff]
    %v2058 = vld [vmem:[%s2 + $0x298] sm:$0xff]
    %v2059 = vld [vmem:[%s2 + $0x2a0] sm:$0xff]
    %v2060 = vld [vmem:[%s2 + $0x2a8] sm:$0xff]
    %v2061 = vld [vmem:[%s2 + $0x2b0] sm:$0xff]
    %v2062 = vld [vmem:[%s2 + $0x2b8] sm:$0xff]
    %v2063 = vld [vmem:[%s2 + $0x2c0] sm:$0xff]
    %v2064 = vld [vmem:[%s2 + $0x2c8] sm:$0xff]
    %v2065 = vld [vmem:[%s2 + $0x2d0] sm:$0xff]
    %v2066 = vld [vmem:[%s2 + $0x2d8] sm:$0xff]
    %v2067 = vld [vmem:[%s2 + $0x2e0] sm:$0xff]
    %v2068 = vld [vmem:[%s2 + $0x2e8] sm:$0xff]
    %v2069 = vld [vmem:[%s2 + $0x2f0] sm:$0xff]
    %v2070 = vld [vmem:[%s2 + $0x2f8] sm:$0xff]
    %v2071 = vld [vmem:[%s2 + $0x300] sm:$0xff]
    %v2072 = vld [vmem:[%s2 + $0x310] sm:$0xff]
    %v2073 = vld [vmem:[%s2 + $0x320] sm:$0xff]
    %v2074 = vld [vmem:[%s2 + $0x330] sm:$0xff]
    %v2075 = vld [vmem:[%s2 + $0x340] sm:$0xff]
    %v2076 = vld [vmem:[%s2 + $0x350] sm:$0xff]
    %v2077 = vld [vmem:[%s2 + $0x360] sm:$0xff]
    %v2078 = vld [vmem:[%s2 + $0x370] sm:$0xff]
    %v2079 = vld [vmem:[%s2 + $0x380] sm:$0xff]
    %v2080 = vld [vmem:[%s2 + $0x390] sm:$0xff]
    %v2081 = vld [vmem:[%s2 + $0x3a0] sm:$0xff]
    %v2082 = vld [vmem:[%s2 + $0x3b0] sm:$0xff]
    %v2083 = vld [vmem:[%s2 + $0x3c0] sm:$0xff]
    %v2084 = vld [vmem:[%s2 + $0x3d0] sm:$0xff]
    %v2085 = vld [vmem:[%s2 + $0x3e0] sm:$0xff]
    %v2086 = vld [vmem:[%s2 + $0x3f0] sm:$0xff]
    %s2087 = scalar_lea.vmem %s3, 32
    %v2088 = vld [vmem:[%s2087] ss:$8 sm:$0x3]
    %v2090 = vperm.slane %v2088, 0
    %v2091 = vperm.slane %v2088, 1
    %v2095 = vsel %vm915, %v2054, 0
    %2097 = vmatpush.msra.mxu0 0.0
    %2098 = vmatpush.msra.mxu0 0.0
    %2099 = vmatpush.msra.mxu0 0.0
    %2100 = vmatpush.msra.mxu0 0.0
    %2101 = vmatpush.msra.mxu0 0.0
    %2102 = vmatpush.msra.mxu0 0.0
    %2103 = vmatpush.msra.mxu0 0.0
    %2104 = vmatpush.msra.mxu0 0.0
    %2105 = vmatpush.msra.mxu0 %v2069
    %2106 = vmatpush.msra.mxu0 %v2067
    %2107 = vmatpush.msra.mxu0 %v2065
    %2108 = vmatpush.msra.mxu0 %v2063
    %2109 = vmatpush.msra.mxu0 %v2061
    %2110 = vmatpush.msra.mxu0 %v2059
    %2111 = vmatpush.msra.mxu0 %v2057
    %2112 = vmatpush.msra.mxu0 %v2055
    %2113 = vmatmul.f32.gmra.mxu0 %v2095
    %v2114 = vpop.f32.mrf.mxu0
    %v2115 = vadd.f32 %v2090, %v2114
    %2116 = vdwg.mxu0
    %2117 = vmatpush.msra.mxu0 0.0
    %2118 = vmatpush.msra.mxu0 0.0
    %2119 = vmatpush.msra.mxu0 0.0
    %2120 = vmatpush.msra.mxu0 0.0
    %2121 = vmatpush.msra.mxu0 0.0
    %2122 = vmatpush.msra.mxu0 0.0
    %2123 = vmatpush.msra.mxu0 0.0
    %2124 = vmatpush.msra.mxu0 0.0
    %2125 = vmatpush.msra.mxu0 %v2070
    %2126 = vmatpush.msra.mxu0 %v2068
    %2127 = vmatpush.msra.mxu0 %v2066
    %2128 = vmatpush.msra.mxu0 %v2064
    %2129 = vmatpush.msra.mxu0 %v2062
    %2130 = vmatpush.msra.mxu0 %v2060
    %2131 = vmatpush.msra.mxu0 %v2058
    %2132 = vmatpush.msra.mxu0 %v2056
    %2133 = vmatmul.f32.gmra.mxu0 %v2095
    %v2134 = vpop.f32.mrf.mxu0
    %v2135 = vadd.f32 %v2091, %v2134
    %2136 = vdwg.mxu0
    %2137 = vst [vmem:[#allocation2] sm:$0xff] %v2115
    %2138 = vst.msk [vmem:[#allocation2 + $0x8] sm:$0xff] %vm42, %v2135
    %vm2139 = vcmp.gt.f32.partialorder %v2012, 0.0
    %v2140 = vld [vmem:[#allocation2] sm:$0xf]
    %v2141 = vld [vmem:[#allocation2 + $0x8] sm:$0xf]
    %2143 = vrot.lane.b32.xlu0 %v2140, 64
    %v2144 = vpop.permute.xlu0 %2143
    %v2145 = vsel %vm413, %v2140, 0
    %v2147 = vsel %vm413, %v2144, 0
    %2149 = vmatpush.xpose.msra.mxu0 0.0
    %2150 = vmatpush.xpose.msra.mxu0 0.0
    %2151 = vmatpush.xpose.msra.mxu0 0.0
    %2152 = vmatpush.xpose.msra.mxu0 0.0
    %2153 = vmatpush.xpose.msra.mxu0 0.0
    %2154 = vmatpush.xpose.msra.mxu0 0.0
    %2155 = vmatpush.xpose.msra.mxu0 0.0
    %2156 = vmatpush.xpose.msra.mxu0 0.0
    %2157 = vmatpush.xpose.msra.mxu0 0.0
    %2158 = vmatpush.xpose.msra.mxu0 0.0
    %2159 = vmatpush.xpose.msra.mxu0 0.0
    %2160 = vmatpush.xpose.msra.mxu0 0.0
    %2161 = vmatpush.xpose.msra.mxu0 0.0
    %2162 = vmatpush.xpose.msra.mxu0 0.0
    %2163 = vmatpush.xpose.msra.mxu0 0.0
    %2164 = vmatpush.xpose.msra.mxu0 %v2147
    %2165 = vmatmul.f32.gmra.mxu0 %v2145
    %v2166 = vpop.f32.mrf.mxu0
    %v2167 = vadd.f32 0.0, %v2166
    %2168 = vdwg.mxu0
    %v2169 = vmul.f32 %v2167, 0.25
    %v2170 = vsel %vm2139, 1, 0
    %v2171 = vperm.slane %v2170, 0
    %vm2172 = vcmp.eq.s32.totalorder %v2171, 1
    %v2173 = vsel %vm2172, %v2169, -1e+09
    %vm2174 = vcmask 27648
    %v2175 = vsel %vm2174, %v2173, -inf
    %2176 = vmax.xlane.f32.xlu0 %v2175
    %v2177 = vpop.xlane.xlu0 %2176
    %v2178 = vsub.f32 %v2173, %v2177
    %v2179 = vmul.f32 %v2178, 1.442695
    %v2180 = vpow.pop %v2179
    %v2181 = vsel %vm2174, %v2180, 0.0
    %2182 = vadd.xlane.f32.xlu0 %v2181
    %v2183 = vpop.xlane.xlu0 %2182
    %v2184 = vrcp.pop %v2183
    %v2185 = vmul.f32 %v2183, %v2184
    %v2186 = vsub.f32 1.0, %v2185
    %v2187 = vmul.f32 %v2184, %v2186
    %v2188 = vadd.f32 %v2184, %v2187
    %vm2189 = vweird.f32 %v2183
    %vm2190 = vweird.f32 %v2184
    %vm2191 = vmor %vm2189, %vm2190
    %v2192 = vsel %vm2191, %v2184, %v2188
    %v2193 = vand.u32 2147483647, %v2183
    %vm2194 = vcmp.eq.f32.partialorder %v2193, 8.507059e+37
    %v2195 = vand.u32 %v2183, 2147483648
    %v2196 = vor.u32 1.1754944e-38, %v2195
    %v2197 = vsel %vm2194, %v2196, %v2192
    %v2198 = vmul.f32 %v2180, %v2197
    %vm2199 = vcmask 31744
    %v2201 = vsel %vm2199, %v2198, 0
    %v2204 = vsel %vm2047, %v2141, 0
    %2206 = vmatpush.msra.mxu0 0.0
    %2207 = vmatpush.msra.mxu0 0.0
    %2208 = vmatpush.msra.mxu0 0.0
    %2209 = vmatpush.msra.mxu0 0.0
    %2210 = vmatpush.msra.mxu0 0.0
    %2211 = vmatpush.msra.mxu0 0.0
    %2212 = vmatpush.msra.mxu0 0.0
    %2213 = vmatpush.msra.mxu0 0.0
    %2214 = vmatpush.msra.mxu0 0.0
    %2215 = vmatpush.msra.mxu0 0.0
    %2216 = vmatpush.msra.mxu0 0.0
    %2217 = vmatpush.msra.mxu0 0.0
    %2218 = vmatpush.msra.mxu0 0.0
    %2219 = vmatpush.msra.mxu0 0.0
    %2220 = vmatpush.msra.mxu0 0.0
    %2221 = vmatpush.msra.mxu0 %v2204
    %2222 = vmatmul.f32.gmra.mxu0 %v2201
    %v2223 = vpop.f32.mrf.mxu0
    %v2224 = vadd.f32 0.0, %v2223
    %2225 = vdwg.mxu0
    %2226 = vrot.lane.b32.xlu0 %v2140, 112
    %v2227 = vpop.permute.xlu0 %2226
    %2228 = vrot.lane.b32.xlu0 %v2140, 48
    %v2229 = vpop.permute.xlu0 %2228
    %v2230 = vsel %vm413, %v2227, 0
    %v2232 = vsel %vm413, %v2229, 0
    %2234 = vmatpush.xpose.msra.mxu0 0.0
    %2235 = vmatpush.xpose.msra.mxu0 0.0
    %2236 = vmatpush.xpose.msra.mxu0 0.0
    %2237 = vmatpush.xpose.msra.mxu0 0.0
    %2238 = vmatpush.xpose.msra.mxu0 0.0
    %2239 = vmatpush.xpose.msra.mxu0 0.0
    %2240 = vmatpush.xpose.msra.mxu0 0.0
    %2241 = vmatpush.xpose.msra.mxu0 0.0
    %2242 = vmatpush.xpose.msra.mxu0 0.0
    %2243 = vmatpush.xpose.msra.mxu0 0.0
    %2244 = vmatpush.xpose.msra.mxu0 0.0
    %2245 = vmatpush.xpose.msra.mxu0 0.0
    %2246 = vmatpush.xpose.msra.mxu0 0.0
    %2247 = vmatpush.xpose.msra.mxu0 0.0
    %2248 = vmatpush.xpose.msra.mxu0 0.0
    %2249 = vmatpush.xpose.msra.mxu0 %v2232
    %2250 = vmatmul.f32.gmra.mxu0 %v2230
    %v2251 = vpop.f32.mrf.mxu0
    %v2252 = vadd.f32 0.0, %v2251
    %2253 = vdwg.mxu0
    %v2254 = vmul.f32 %v2252, 0.25
    %v2255 = vsel %vm2172, %v2254, -1e+09
    %v2256 = vsel %vm2174, %v2255, -inf
    %2257 = vmax.xlane.f32.xlu0 %v2256
    %v2258 = vpop.xlane.xlu0 %2257
    %v2259 = vsub.f32 %v2255, %v2258
    %v2260 = vmul.f32 %v2259, 1.442695
    %v2261 = vpow.pop %v2260
    %v2262 = vsel %vm2174, %v2261, 0.0
    %2263 = vadd.xlane.f32.xlu0 %v2262
    %v2264 = vpop.xlane.xlu0 %2263
    %v2265 = vrcp.pop %v2264
    %v2266 = vmul.f32 %v2264, %v2265
    %v2267 = vsub.f32 1.0, %v2266
    %v2268 = vmul.f32 %v2265, %v2267
    %v2269 = vadd.f32 %v2265, %v2268
    %vm2270 = vweird.f32 %v2264
    %vm2271 = vweird.f32 %v2265
    %vm2272 = vmor %vm2270, %vm2271
    %v2273 = vsel %vm2272, %v2265, %v2269
    %v2274 = vand.u32 2147483647, %v2264
    %vm2275 = vcmp.eq.f32.partialorder %v2274, 8.507059e+37
    %v2276 = vand.u32 %v2264, 2147483648
    %v2277 = vor.u32 1.1754944e-38, %v2276
    %v2278 = vsel %vm2275, %v2277, %v2273
    %v2279 = vmul.f32 %v2261, %v2278
    %2280 = vrot.lane.b32.xlu0 %v2141, 120
    %v2281 = vpop.permute.xlu0 %2280
    %v2283 = vsel %vm2199, %v2279, 0
    %v2285 = vsel %vm2047, %v2281, 0
    %2287 = vmatpush.msra.mxu0 0.0
    %2288 = vmatpush.msra.mxu0 0.0
    %2289 = vmatpush.msra.mxu0 0.0
    %2290 = vmatpush.msra.mxu0 0.0
    %2291 = vmatpush.msra.mxu0 0.0
    %2292 = vmatpush.msra.mxu0 0.0
    %2293 = vmatpush.msra.mxu0 0.0
    %2294 = vmatpush.msra.mxu0 0.0
    %2295 = vmatpush.msra.mxu0 0.0
    %2296 = vmatpush.msra.mxu0 0.0
    %2297 = vmatpush.msra.mxu0 0.0
    %2298 = vmatpush.msra.mxu0 0.0
    %2299 = vmatpush.msra.mxu0 0.0
    %2300 = vmatpush.msra.mxu0 0.0
    %2301 = vmatpush.msra.mxu0 0.0
    %2302 = vmatpush.msra.mxu0 %v2285
    %2303 = vmatmul.f32.gmra.mxu0 %v2283
    %v2304 = vpop.f32.mrf.mxu0
    %v2305 = vadd.f32 0.0, %v2304
    %2306 = vdwg.mxu0
    %2307 = vrot.lane.b32.xlu0 %v2140, 96
    %v2308 = vpop.permute.xlu0 %2307
    %2309 = vrot.lane.b32.xlu0 %v2140, 32
    %v2310 = vpop.permute.xlu0 %2309
    %v2311 = vsel %vm413, %v2308, 0
    %v2313 = vsel %vm413, %v2310, 0
    %2315 = vmatpush.xpose.msra.mxu0 0.0
    %2316 = vmatpush.xpose.msra.mxu0 0.0
    %2317 = vmatpush.xpose.msra.mxu0 0.0
    %2318 = vmatpush.xpose.msra.mxu0 0.0
    %2319 = vmatpush.xpose.msra.mxu0 0.0
    %2320 = vmatpush.xpose.msra.mxu0 0.0
    %2321 = vmatpush.xpose.msra.mxu0 0.0
    %2322 = vmatpush.xpose.msra.mxu0 0.0
    %2323 = vmatpush.xpose.msra.mxu0 0.0
    %2324 = vmatpush.xpose.msra.mxu0 0.0
    %2325 = vmatpush.xpose.msra.mxu0 0.0
    %2326 = vmatpush.xpose.msra.mxu0 0.0
    %2327 = vmatpush.xpose.msra.mxu0 0.0
    %2328 = vmatpush.xpose.msra.mxu0 0.0
    %2329 = vmatpush.xpose.msra.mxu0 0.0
    %2330 = vmatpush.xpose.msra.mxu0 %v2313
    %2331 = vmatmul.f32.gmra.mxu0 %v2311
    %v2332 = vpop.f32.mrf.mxu0
    %v2333 = vadd.f32 0.0, %v2332
    %2334 = vdwg.mxu0
    %v2335 = vmul.f32 %v2333, 0.25
    %v2336 = vsel %vm2172, %v2335, -1e+09
    %v2337 = vsel %vm2174, %v2336, -inf
    %2338 = vmax.xlane.f32.xlu0 %v2337
    %v2339 = vpop.xlane.xlu0 %2338
    %v2340 = vsub.f32 %v2336, %v2339
    %v2341 = vmul.f32 %v2340, 1.442695
    %v2342 = vpow.pop %v2341
    %v2343 = vsel %vm2174, %v2342, 0.0
    %2344 = vadd.xlane.f32.xlu0 %v2343
    %v2345 = vpop.xlane.xlu0 %2344
    %v2346 = vrcp.pop %v2345
    %v2347 = vmul.f32 %v2345, %v2346
    %v2348 = vsub.f32 1.0, %v2347
    %v2349 = vmul.f32 %v2346, %v2348
    %v2350 = vadd.f32 %v2346, %v2349
    %vm2351 = vweird.f32 %v2345
    %vm2352 = vweird.f32 %v2346
    %vm2353 = vmor %vm2351, %vm2352
    %v2354 = vsel %vm2353, %v2346, %v2350
    %v2355 = vand.u32 2147483647, %v2345
    %vm2356 = vcmp.eq.f32.partialorder %v2355, 8.507059e+37
    %v2357 = vand.u32 %v2345, 2147483648
    %v2358 = vor.u32 1.1754944e-38, %v2357
    %v2359 = vsel %vm2356, %v2358, %v2354
    %v2360 = vmul.f32 %v2342, %v2359
    %2361 = vrot.lane.b32.xlu0 %v2141, 112
    %v2362 = vpop.permute.xlu0 %2361
    %v2364 = vsel %vm2199, %v2360, 0
    %v2366 = vsel %vm2047, %v2362, 0
    %2368 = vmatpush.msra.mxu0 0.0
    %2369 = vmatpush.msra.mxu0 0.0
    %2370 = vmatpush.msra.mxu0 0.0
    %2371 = vmatpush.msra.mxu0 0.0
    %2372 = vmatpush.msra.mxu0 0.0
    %2373 = vmatpush.msra.mxu0 0.0
    %2374 = vmatpush.msra.mxu0 0.0
    %2375 = vmatpush.msra.mxu0 0.0
    %2376 = vmatpush.msra.mxu0 0.0
    %2377 = vmatpush.msra.mxu0 0.0
    %2378 = vmatpush.msra.mxu0 0.0
    %2379 = vmatpush.msra.mxu0 0.0
    %2380 = vmatpush.msra.mxu0 0.0
    %2381 = vmatpush.msra.mxu0 0.0
    %2382 = vmatpush.msra.mxu0 0.0
    %2383 = vmatpush.msra.mxu0 %v2366
    %2384 = vmatmul.f32.gmra.mxu0 %v2364
    %v2385 = vpop.f32.mrf.mxu0
    %v2386 = vadd.f32 0.0, %v2385
    %2387 = vdwg.mxu0
    %2388 = vrot.lane.b32.xlu0 %v2140, 80
    %v2389 = vpop.permute.xlu0 %2388
    %2390 = vrot.lane.b32.xlu0 %v2140, 16
    %v2391 = vpop.permute.xlu0 %2390
    %v2392 = vsel %vm413, %v2389, 0
    %v2394 = vsel %vm413, %v2391, 0
    %2396 = vmatpush.xpose.msra.mxu0 0.0
    %2397 = vmatpush.xpose.msra.mxu0 0.0
    %2398 = vmatpush.xpose.msra.mxu0 0.0
    %2399 = vmatpush.xpose.msra.mxu0 0.0
    %2400 = vmatpush.xpose.msra.mxu0 0.0
    %2401 = vmatpush.xpose.msra.mxu0 0.0
    %2402 = vmatpush.xpose.msra.mxu0 0.0
    %2403 = vmatpush.xpose.msra.mxu0 0.0
    %2404 = vmatpush.xpose.msra.mxu0 0.0
    %2405 = vmatpush.xpose.msra.mxu0 0.0
    %2406 = vmatpush.xpose.msra.mxu0 0.0
    %2407 = vmatpush.xpose.msra.mxu0 0.0
    %2408 = vmatpush.xpose.msra.mxu0 0.0
    %2409 = vmatpush.xpose.msra.mxu0 0.0
    %2410 = vmatpush.xpose.msra.mxu0 0.0
    %2411 = vmatpush.xpose.msra.mxu0 %v2394
    %2412 = vmatmul.f32.gmra.mxu0 %v2392
    %v2413 = vpop.f32.mrf.mxu0
    %v2414 = vadd.f32 0.0, %v2413
    %2415 = vdwg.mxu0
    %v2416 = vmul.f32 %v2414, 0.25
    %v2417 = vsel %vm2172, %v2416, -1e+09
    %v2418 = vsel %vm2174, %v2417, -inf
    %2419 = vmax.xlane.f32.xlu0 %v2418
    %v2420 = vpop.xlane.xlu0 %2419
    %v2421 = vsub.f32 %v2417, %v2420
    %v2422 = vmul.f32 %v2421, 1.442695
    %v2423 = vpow.pop %v2422
    %v2424 = vsel %vm2174, %v2423, 0.0
    %2425 = vadd.xlane.f32.xlu0 %v2424
    %v2426 = vpop.xlane.xlu0 %2425
    %v2427 = vrcp.pop %v2426
    %v2428 = vmul.f32 %v2426, %v2427
    %v2429 = vsub.f32 1.0, %v2428
    %v2430 = vmul.f32 %v2427, %v2429
    %v2431 = vadd.f32 %v2427, %v2430
    %vm2432 = vweird.f32 %v2426
    %vm2433 = vweird.f32 %v2427
    %vm2434 = vmor %vm2432, %vm2433
    %v2435 = vsel %vm2434, %v2427, %v2431
    %v2436 = vand.u32 2147483647, %v2426
    %vm2437 = vcmp.eq.f32.partialorder %v2436, 8.507059e+37
    %v2438 = vand.u32 %v2426, 2147483648
    %v2439 = vor.u32 1.1754944e-38, %v2438
    %v2440 = vsel %vm2437, %v2439, %v2435
    %v2441 = vmul.f32 %v2423, %v2440
    %2442 = vrot.lane.b32.xlu0 %v2141, 104
    %v2443 = vpop.permute.xlu0 %2442
    %v2445 = vsel %vm2199, %v2441, 0
    %v2447 = vsel %vm2047, %v2443, 0
    %2449 = vmatpush.msra.mxu0 0.0
    %2450 = vmatpush.msra.mxu0 0.0
    %2451 = vmatpush.msra.mxu0 0.0
    %2452 = vmatpush.msra.mxu0 0.0
    %2453 = vmatpush.msra.mxu0 0.0
    %2454 = vmatpush.msra.mxu0 0.0
    %2455 = vmatpush.msra.mxu0 0.0
    %2456 = vmatpush.msra.mxu0 0.0
    %2457 = vmatpush.msra.mxu0 0.0
    %2458 = vmatpush.msra.mxu0 0.0
    %2459 = vmatpush.msra.mxu0 0.0
    %2460 = vmatpush.msra.mxu0 0.0
    %2461 = vmatpush.msra.mxu0 0.0
    %2462 = vmatpush.msra.mxu0 0.0
    %2463 = vmatpush.msra.mxu0 0.0
    %2464 = vmatpush.msra.mxu0 %v2447
    %2465 = vmatmul.f32.gmra.mxu0 %v2445
    %v2466 = vpop.f32.mrf.mxu0
    %v2467 = vadd.f32 0.0, %v2466
    %2468 = vdwg.mxu0
    %2470 = vrot.lane.b32.xlu0 %v2305, 8
    %v2471 = vpop.permute.xlu0 %2470
    %2474 = vrot.lane.b32.xlu0 %v2386, 16
    %v2475 = vpop.permute.xlu0 %2474
    %2478 = vrot.lane.b32.xlu0 %v2467, 24
    %v2479 = vpop.permute.xlu0 %2478
    %v2481 = vsel %vm80, %v2224, %v2471
    %v2482 = vsel %vm413, %v2481, %v2475
    %v2483 = vsel %vm415, %v2482, %v2479
    %v2484 = vld [vmem:[#allocation2] sm:$0xf0]
    %v2485 = vld [vmem:[#allocation2 + $0x8] sm:$0xf0]
    %v2487 = vrot.slane %v2484, 4
    %2488 = vrot.lane.b32.xlu0 %v2487, 64
    %v2489 = vpop.permute.xlu0 %2488
    %v2490 = vsel %vm413, %v2487, 0
    %v2492 = vsel %vm413, %v2489, 0
    %2494 = vmatpush.xpose.msra.mxu0 0.0
    %2495 = vmatpush.xpose.msra.mxu0 0.0
    %2496 = vmatpush.xpose.msra.mxu0 0.0
    %2497 = vmatpush.xpose.msra.mxu0 0.0
    %2498 = vmatpush.xpose.msra.mxu0 0.0
    %2499 = vmatpush.xpose.msra.mxu0 0.0
    %2500 = vmatpush.xpose.msra.mxu0 0.0
    %2501 = vmatpush.xpose.msra.mxu0 0.0
    %2502 = vmatpush.xpose.msra.mxu0 0.0
    %2503 = vmatpush.xpose.msra.mxu0 0.0
    %2504 = vmatpush.xpose.msra.mxu0 0.0
    %2505 = vmatpush.xpose.msra.mxu0 0.0
    %2506 = vmatpush.xpose.msra.mxu0 0.0
    %2507 = vmatpush.xpose.msra.mxu0 0.0
    %2508 = vmatpush.xpose.msra.mxu0 0.0
    %2509 = vmatpush.xpose.msra.mxu0 %v2492
    %2510 = vmatmul.f32.gmra.mxu0 %v2490
    %v2511 = vpop.f32.mrf.mxu0
    %v2512 = vadd.f32 0.0, %v2511
    %2513 = vdwg.mxu0
    %v2514 = vmul.f32 %v2512, 0.25
    %v2515 = vperm.slane %v2170, 1
    %vm2516 = vcmp.eq.s32.totalorder %v2515, 1
    %v2517 = vsel %vm2516, %v2514, -1e+09
    %v2518 = vsel %vm2174, %v2517, -inf
    %2519 = vmax.xlane.f32.xlu0 %v2518
    %v2520 = vpop.xlane.xlu0 %2519
    %v2521 = vsub.f32 %v2517, %v2520
    %v2522 = vmul.f32 %v2521, 1.442695
    %v2523 = vpow.pop %v2522
    %v2524 = vsel %vm2174, %v2523, 0.0
    %2525 = vadd.xlane.f32.xlu0 %v2524
    %v2526 = vpop.xlane.xlu0 %2525
    %v2527 = vrcp.pop %v2526
    %v2528 = vmul.f32 %v2526, %v2527
    %v2529 = vsub.f32 1.0, %v2528
    %v2530 = vmul.f32 %v2527, %v2529
    %v2531 = vadd.f32 %v2527, %v2530
    %vm2532 = vweird.f32 %v2526
    %vm2533 = vweird.f32 %v2527
    %vm2534 = vmor %vm2532, %vm2533
    %v2535 = vsel %vm2534, %v2527, %v2531
    %v2536 = vand.u32 2147483647, %v2526
    %vm2537 = vcmp.eq.f32.partialorder %v2536, 8.507059e+37
    %v2538 = vand.u32 %v2526, 2147483648
    %v2539 = vor.u32 1.1754944e-38, %v2538
    %v2540 = vsel %vm2537, %v2539, %v2535
    %v2541 = vmul.f32 %v2523, %v2540
    %v2543 = vrot.slane %v2485, 4
    %v2545 = vsel %vm2199, %v2541, 0
    %v2547 = vsel %vm2047, %v2543, 0
    %2549 = vmatpush.msra.mxu0 0.0
    %2550 = vmatpush.msra.mxu0 0.0
    %2551 = vmatpush.msra.mxu0 0.0
    %2552 = vmatpush.msra.mxu0 0.0
    %2553 = vmatpush.msra.mxu0 0.0
    %2554 = vmatpush.msra.mxu0 0.0
    %2555 = vmatpush.msra.mxu0 0.0
    %2556 = vmatpush.msra.mxu0 0.0
    %2557 = vmatpush.msra.mxu0 0.0
    %2558 = vmatpush.msra.mxu0 0.0
    %2559 = vmatpush.msra.mxu0 0.0
    %2560 = vmatpush.msra.mxu0 0.0
    %2561 = vmatpush.msra.mxu0 0.0
    %2562 = vmatpush.msra.mxu0 0.0
    %2563 = vmatpush.msra.mxu0 0.0
    %2564 = vmatpush.msra.mxu0 %v2547
    %2565 = vmatmul.f32.gmra.mxu0 %v2545
    %v2566 = vpop.f32.mrf.mxu0
    %v2567 = vadd.f32 0.0, %v2566
    %2568 = vdwg.mxu0
    %2569 = vrot.lane.b32.xlu0 %v2487, 112
    %v2570 = vpop.permute.xlu0 %2569
    %2571 = vrot.lane.b32.xlu0 %v2487, 48
    %v2572 = vpop.permute.xlu0 %2571
    %v2573 = vsel %vm413, %v2570, 0
    %v2575 = vsel %vm413, %v2572, 0
    %2577 = vmatpush.xpose.msra.mxu0 0.0
    %2578 = vmatpush.xpose.msra.mxu0 0.0
    %2579 = vmatpush.xpose.msra.mxu0 0.0
    %2580 = vmatpush.xpose.msra.mxu0 0.0
    %2581 = vmatpush.xpose.msra.mxu0 0.0
    %2582 = vmatpush.xpose.msra.mxu0 0.0
    %2583 = vmatpush.xpose.msra.mxu0 0.0
    %2584 = vmatpush.xpose.msra.mxu0 0.0
    %2585 = vmatpush.xpose.msra.mxu0 0.0
    %2586 = vmatpush.xpose.msra.mxu0 0.0
    %2587 = vmatpush.xpose.msra.mxu0 0.0
    %2588 = vmatpush.xpose.msra.mxu0 0.0
    %2589 = vmatpush.xpose.msra.mxu0 0.0
    %2590 = vmatpush.xpose.msra.mxu0 0.0
    %2591 = vmatpush.xpose.msra.mxu0 0.0
    %2592 = vmatpush.xpose.msra.mxu0 %v2575
    %2593 = vmatmul.f32.gmra.mxu0 %v2573
    %v2594 = vpop.f32.mrf.mxu0
    %v2595 = vadd.f32 0.0, %v2594
    %2596 = vdwg.mxu0
    %v2597 = vmul.f32 %v2595, 0.25
    %v2598 = vsel %vm2516, %v2597, -1e+09
    %v2599 = vsel %vm2174, %v2598, -inf
    %2600 = vmax.xlane.f32.xlu0 %v2599
    %v2601 = vpop.xlane.xlu0 %2600
    %v2602 = vsub.f32 %v2598, %v2601
    %v2603 = vmul.f32 %v2602, 1.442695
    %v2604 = vpow.pop %v2603
    %v2605 = vsel %vm2174, %v2604, 0.0
    %2606 = vadd.xlane.f32.xlu0 %v2605
    %v2607 = vpop.xlane.xlu0 %2606
    %v2608 = vrcp.pop %v2607
    %v2609 = vmul.f32 %v2607, %v2608
    %v2610 = vsub.f32 1.0, %v2609
    %v2611 = vmul.f32 %v2608, %v2610
    %v2612 = vadd.f32 %v2608, %v2611
    %vm2613 = vweird.f32 %v2607
    %vm2614 = vweird.f32 %v2608
    %vm2615 = vmor %vm2613, %vm2614
    %v2616 = vsel %vm2615, %v2608, %v2612
    %v2617 = vand.u32 2147483647, %v2607
    %vm2618 = vcmp.eq.f32.partialorder %v2617, 8.507059e+37
    %v2619 = vand.u32 %v2607, 2147483648
    %v2620 = vor.u32 1.1754944e-38, %v2619
    %v2621 = vsel %vm2618, %v2620, %v2616
    %v2622 = vmul.f32 %v2604, %v2621
    %2623 = vrot.lane.b32.xlu0 %v2543, 120
    %v2624 = vpop.permute.xlu0 %2623
    %v2626 = vsel %vm2199, %v2622, 0
    %v2628 = vsel %vm2047, %v2624, 0
    %2630 = vmatpush.msra.mxu0 0.0
    %2631 = vmatpush.msra.mxu0 0.0
    %2632 = vmatpush.msra.mxu0 0.0
    %2633 = vmatpush.msra.mxu0 0.0
    %2634 = vmatpush.msra.mxu0 0.0
    %2635 = vmatpush.msra.mxu0 0.0
    %2636 = vmatpush.msra.mxu0 0.0
    %2637 = vmatpush.msra.mxu0 0.0
    %2638 = vmatpush.msra.mxu0 0.0
    %2639 = vmatpush.msra.mxu0 0.0
    %2640 = vmatpush.msra.mxu0 0.0
    %2641 = vmatpush.msra.mxu0 0.0
    %2642 = vmatpush.msra.mxu0 0.0
    %2643 = vmatpush.msra.mxu0 0.0
    %2644 = vmatpush.msra.mxu0 0.0
    %2645 = vmatpush.msra.mxu0 %v2628
    %2646 = vmatmul.f32.gmra.mxu0 %v2626
    %v2647 = vpop.f32.mrf.mxu0
    %v2648 = vadd.f32 0.0, %v2647
    %2649 = vdwg.mxu0
    %2650 = vrot.lane.b32.xlu0 %v2487, 96
    %v2651 = vpop.permute.xlu0 %2650
    %2652 = vrot.lane.b32.xlu0 %v2487, 32
    %v2653 = vpop.permute.xlu0 %2652
    %v2654 = vsel %vm413, %v2651, 0
    %v2656 = vsel %vm413, %v2653, 0
    %2658 = vmatpush.xpose.msra.mxu0 0.0
    %2659 = vmatpush.xpose.msra.mxu0 0.0
    %2660 = vmatpush.xpose.msra.mxu0 0.0
    %2661 = vmatpush.xpose.msra.mxu0 0.0
    %2662 = vmatpush.xpose.msra.mxu0 0.0
    %2663 = vmatpush.xpose.msra.mxu0 0.0
    %2664 = vmatpush.xpose.msra.mxu0 0.0
    %2665 = vmatpush.xpose.msra.mxu0 0.0
    %2666 = vmatpush.xpose.msra.mxu0 0.0
    %2667 = vmatpush.xpose.msra.mxu0 0.0
    %2668 = vmatpush.xpose.msra.mxu0 0.0
    %2669 = vmatpush.xpose.msra.mxu0 0.0
    %2670 = vmatpush.xpose.msra.mxu0 0.0
    %2671 = vmatpush.xpose.msra.mxu0 0.0
    %2672 = vmatpush.xpose.msra.mxu0 0.0
    %2673 = vmatpush.xpose.msra.mxu0 %v2656
    %2674 = vmatmul.f32.gmra.mxu0 %v2654
    %v2675 = vpop.f32.mrf.mxu0
    %v2676 = vadd.f32 0.0, %v2675
    %2677 = vdwg.mxu0
    %v2678 = vmul.f32 %v2676, 0.25
    %v2679 = vsel %vm2516, %v2678, -1e+09
    %v2680 = vsel %vm2174, %v2679, -inf
    %2681 = vmax.xlane.f32.xlu0 %v2680
    %v2682 = vpop.xlane.xlu0 %2681
    %v2683 = vsub.f32 %v2679, %v2682
    %v2684 = vmul.f32 %v2683, 1.442695
    %v2685 = vpow.pop %v2684
    %v2686 = vsel %vm2174, %v2685, 0.0
    %2687 = vadd.xlane.f32.xlu0 %v2686
    %v2688 = vpop.xlane.xlu0 %2687
    %v2689 = vrcp.pop %v2688
    %v2690 = vmul.f32 %v2688, %v2689
    %v2691 = vsub.f32 1.0, %v2690
    %v2692 = vmul.f32 %v2689, %v2691
    %v2693 = vadd.f32 %v2689, %v2692
    %vm2694 = vweird.f32 %v2688
    %vm2695 = vweird.f32 %v2689
    %vm2696 = vmor %vm2694, %vm2695
    %v2697 = vsel %vm2696, %v2689, %v2693
    %v2698 = vand.u32 2147483647, %v2688
    %vm2699 = vcmp.eq.f32.partialorder %v2698, 8.507059e+37
    %v2700 = vand.u32 %v2688, 2147483648
    %v2701 = vor.u32 1.1754944e-38, %v2700
    %v2702 = vsel %vm2699, %v2701, %v2697
    %v2703 = vmul.f32 %v2685, %v2702
    %2704 = vrot.lane.b32.xlu0 %v2543, 112
    %v2705 = vpop.permute.xlu0 %2704
    %v2707 = vsel %vm2199, %v2703, 0
    %v2709 = vsel %vm2047, %v2705, 0
    %2711 = vmatpush.msra.mxu0 0.0
    %2712 = vmatpush.msra.mxu0 0.0
    %2713 = vmatpush.msra.mxu0 0.0
    %2714 = vmatpush.msra.mxu0 0.0
    %2715 = vmatpush.msra.mxu0 0.0
    %2716 = vmatpush.msra.mxu0 0.0
    %2717 = vmatpush.msra.mxu0 0.0
    %2718 = vmatpush.msra.mxu0 0.0
    %2719 = vmatpush.msra.mxu0 0.0
    %2720 = vmatpush.msra.mxu0 0.0
    %2721 = vmatpush.msra.mxu0 0.0
    %2722 = vmatpush.msra.mxu0 0.0
    %2723 = vmatpush.msra.mxu0 0.0
    %2724 = vmatpush.msra.mxu0 0.0
    %2725 = vmatpush.msra.mxu0 0.0
    %2726 = vmatpush.msra.mxu0 %v2709
    %2727 = vmatmul.f32.gmra.mxu0 %v2707
    %v2728 = vpop.f32.mrf.mxu0
    %v2729 = vadd.f32 0.0, %v2728
    %2730 = vdwg.mxu0
    %2731 = vrot.lane.b32.xlu0 %v2487, 80
    %v2732 = vpop.permute.xlu0 %2731
    %2733 = vrot.lane.b32.xlu0 %v2487, 16
    %v2734 = vpop.permute.xlu0 %2733
    %v2735 = vsel %vm413, %v2732, 0
    %v2737 = vsel %vm413, %v2734, 0
    %2739 = vmatpush.xpose.msra.mxu0 0.0
    %2740 = vmatpush.xpose.msra.mxu0 0.0
    %2741 = vmatpush.xpose.msra.mxu0 0.0
    %2742 = vmatpush.xpose.msra.mxu0 0.0
    %2743 = vmatpush.xpose.msra.mxu0 0.0
    %2744 = vmatpush.xpose.msra.mxu0 0.0
    %2745 = vmatpush.xpose.msra.mxu0 0.0
    %2746 = vmatpush.xpose.msra.mxu0 0.0
    %2747 = vmatpush.xpose.msra.mxu0 0.0
    %2748 = vmatpush.xpose.msra.mxu0 0.0
    %2749 = vmatpush.xpose.msra.mxu0 0.0
    %2750 = vmatpush.xpose.msra.mxu0 0.0
    %2751 = vmatpush.xpose.msra.mxu0 0.0
    %2752 = vmatpush.xpose.msra.mxu0 0.0
    %2753 = vmatpush.xpose.msra.mxu0 0.0
    %2754 = vmatpush.xpose.msra.mxu0 %v2737
    %2755 = vmatmul.f32.gmra.mxu0 %v2735
    %v2756 = vpop.f32.mrf.mxu0
    %v2757 = vadd.f32 0.0, %v2756
    %2758 = vdwg.mxu0
    %v2759 = vmul.f32 %v2757, 0.25
    %v2760 = vsel %vm2516, %v2759, -1e+09
    %v2761 = vsel %vm2174, %v2760, -inf
    %2762 = vmax.xlane.f32.xlu0 %v2761
    %v2763 = vpop.xlane.xlu0 %2762
    %v2764 = vsub.f32 %v2760, %v2763
    %v2765 = vmul.f32 %v2764, 1.442695
    %v2766 = vpow.pop %v2765
    %v2767 = vsel %vm2174, %v2766, 0.0
    %2768 = vadd.xlane.f32.xlu0 %v2767
    %v2769 = vpop.xlane.xlu0 %2768
    %v2770 = vrcp.pop %v2769
    %v2771 = vmul.f32 %v2769, %v2770
    %v2772 = vsub.f32 1.0, %v2771
    %v2773 = vmul.f32 %v2770, %v2772
    %v2774 = vadd.f32 %v2770, %v2773
    %vm2775 = vweird.f32 %v2769
    %vm2776 = vweird.f32 %v2770
    %vm2777 = vmor %vm2775, %vm2776
    %v2778 = vsel %vm2777, %v2770, %v2774
    %v2779 = vand.u32 2147483647, %v2769
    %vm2780 = vcmp.eq.f32.partialorder %v2779, 8.507059e+37
    %v2781 = vand.u32 %v2769, 2147483648
    %v2782 = vor.u32 1.1754944e-38, %v2781
    %v2783 = vsel %vm2780, %v2782, %v2778
    %v2784 = vmul.f32 %v2766, %v2783
    %2785 = vrot.lane.b32.xlu0 %v2543, 104
    %v2786 = vpop.permute.xlu0 %2785
    %v2788 = vsel %vm2199, %v2784, 0
    %v2790 = vsel %vm2047, %v2786, 0
    %2792 = vmatpush.msra.mxu0 0.0
    %2793 = vmatpush.msra.mxu0 0.0
    %2794 = vmatpush.msra.mxu0 0.0
    %2795 = vmatpush.msra.mxu0 0.0
    %2796 = vmatpush.msra.mxu0 0.0
    %2797 = vmatpush.msra.mxu0 0.0
    %2798 = vmatpush.msra.mxu0 0.0
    %2799 = vmatpush.msra.mxu0 0.0
    %2800 = vmatpush.msra.mxu0 0.0
    %2801 = vmatpush.msra.mxu0 0.0
    %2802 = vmatpush.msra.mxu0 0.0
    %2803 = vmatpush.msra.mxu0 0.0
    %2804 = vmatpush.msra.mxu0 0.0
    %2805 = vmatpush.msra.mxu0 0.0
    %2806 = vmatpush.msra.mxu0 0.0
    %2807 = vmatpush.msra.mxu0 %v2790
    %2808 = vmatmul.f32.gmra.mxu0 %v2788
    %v2809 = vpop.f32.mrf.mxu0
    %v2810 = vadd.f32 0.0, %v2809
    %2811 = vdwg.mxu0
    %2813 = vrot.lane.b32.xlu0 %v2648, 8
    %v2814 = vpop.permute.xlu0 %2813
    %2817 = vrot.lane.b32.xlu0 %v2729, 16
    %v2818 = vpop.permute.xlu0 %2817
    %2821 = vrot.lane.b32.xlu0 %v2810, 24
    %v2822 = vpop.permute.xlu0 %2821
    %v2824 = vsel %vm80, %v2567, %v2814
    %v2825 = vsel %vm413, %v2824, %v2818
    %v2826 = vsel %vm415, %v2825, %v2822
    %v2828 = vrot.slane %v2826, 4
    %v2830 = vsel %vm2047, %v2483, %v2828
    %v2831 = vld [vmem:[%s3 + $0x21] ss:$0 sm:$0xff]
    %v2833 = vsel %vm42, %v2830, 0
    %2835 = vmatpush.msra.mxu0 0.0
    %2836 = vmatpush.msra.mxu0 0.0
    %2837 = vmatpush.msra.mxu0 0.0
    %2838 = vmatpush.msra.mxu0 0.0
    %2839 = vmatpush.msra.mxu0 0.0
    %2840 = vmatpush.msra.mxu0 0.0
    %2841 = vmatpush.msra.mxu0 0.0
    %2842 = vmatpush.msra.mxu0 0.0
    %2843 = vmatpush.msra.mxu0 0.0
    %2844 = vmatpush.msra.mxu0 0.0
    %2845 = vmatpush.msra.mxu0 0.0
    %2846 = vmatpush.msra.mxu0 0.0
    %2847 = vmatpush.msra.mxu0 %v2074
    %2848 = vmatpush.msra.mxu0 %v2073
    %2849 = vmatpush.msra.mxu0 %v2072
    %2850 = vmatpush.msra.mxu0 %v2071
    %2851 = vmatmul.f32.gmra.mxu0 %v2833
    %v2852 = vpop.f32.mrf.mxu0
    %v2853 = vadd.f32 %v2831, %v2852
    %2854 = vdwg.mxu0
    %v2855 = vld [vmem:[%s3 + $0x22] ss:$0 sm:$0xff]
    %v2856 = vld [vmem:[%s3 + $0x23] ss:$0 sm:$0xff]
    %v2857 = vsel %vm42, %v2853, 0.0
    %2858 = vadd.xlane.f32.xlu0 %v2857
    %v2859 = vpop.xlane.xlu0 %2858
    %v2860 = vmul.f32 %v2859, %v800
    %v2861 = vsub.f32 %v2853, %v2860
    %v2862 = vmul.f32 %v2861, %v2861
    %v2863 = vsel %vm42, %v2862, 0.0
    %2864 = vadd.xlane.f32.xlu0 %v2863
    %v2865 = vpop.xlane.xlu0 %2864
    %v2866 = vmul.f32 %v2865, %v819
    %v2867 = vrsqrt.pop %v2866
    %v2868 = vmul.f32 %v2867, %v2866
    %v2869 = vmul.f32 %v2868, %v2867
    %v2870 = vmul.f32 0.5, %v2869
    %v2871 = vsub.f32 1.5, %v2870
    %v2872 = vmul.f32 %v2867, %v2871
    %v2873 = vmul.f32 %v2866, %v2872
    %vm2874 = vcmp.eq.f32.partialorder %v2866, inf
    %v2875 = vsel %vm2874, %v2866, %v2873
    %vm2876 = vcmp.eq.f32.partialorder %v2866, 0.0
    %v2877 = vand.u32 %v2866, 2147483648
    %v2878 = vsel %vm2876, %v2877, %v2875
    %v2879 = vadd.f32 %v2878, 1e-05
    %v2880 = vrcp.pop %v2879
    %v2881 = vmul.f32 %v2879, %v2880
    %v2882 = vsub.f32 1.0, %v2881
    %v2883 = vmul.f32 %v2880, %v2882
    %v2884 = vadd.f32 %v2880, %v2883
    %vm2885 = vweird.f32 %v2879
    %vm2886 = vweird.f32 %v2880
    %vm2887 = vmor %vm2885, %vm2886
    %v2888 = vsel %vm2887, %v2880, %v2884
    %v2889 = vand.u32 2147483647, %v2879
    %vm2890 = vcmp.eq.f32.partialorder %v2889, 8.507059e+37
    %v2891 = vand.u32 %v2879, 2147483648
    %v2892 = vor.u32 1.1754944e-38, %v2891
    %v2893 = vsel %vm2890, %v2892, %v2888
    %v2894 = vmul.f32 %v2861, %v2893
    %v2895 = vmul.f32 %v2855, %v2894
    %v2896 = vadd.f32 %v2895, %v2856
    %v2897 = vld [vmem:[%s3 + $0x24] ss:$0 sm:$0xff]
    %v2899 = vsel %vm42, %v2896, 0
    %2901 = vmatpush.msra.mxu0 0.0
    %2902 = vmatpush.msra.mxu0 0.0
    %2903 = vmatpush.msra.mxu0 0.0
    %2904 = vmatpush.msra.mxu0 0.0
    %2905 = vmatpush.msra.mxu0 0.0
    %2906 = vmatpush.msra.mxu0 0.0
    %2907 = vmatpush.msra.mxu0 0.0
    %2908 = vmatpush.msra.mxu0 0.0
    %2909 = vmatpush.msra.mxu0 0.0
    %2910 = vmatpush.msra.mxu0 0.0
    %2911 = vmatpush.msra.mxu0 0.0
    %2912 = vmatpush.msra.mxu0 0.0
    %2913 = vmatpush.msra.mxu0 %v2078
    %2914 = vmatpush.msra.mxu0 %v2077
    %2915 = vmatpush.msra.mxu0 %v2076
    %2916 = vmatpush.msra.mxu0 %v2075
    %2917 = vmatmul.f32.gmra.mxu0 %v2899
    %v2918 = vpop.f32.mrf.mxu0
    %v2919 = vadd.f32 %v2897, %v2918
    %2920 = vdwg.mxu0
    %v2921 = vmax.f32 %v2919, 0.0
    %v2922 = vld [vmem:[%s3 + $0x25] ss:$0 sm:$0xff]
    %v2924 = vsel %vm915, %v2921, 0
    %2926 = vmatpush.msra.mxu0 0.0
    %2927 = vmatpush.msra.mxu0 0.0
    %2928 = vmatpush.msra.mxu0 0.0
    %2929 = vmatpush.msra.mxu0 0.0
    %2930 = vmatpush.msra.mxu0 0.0
    %2931 = vmatpush.msra.mxu0 0.0
    %2932 = vmatpush.msra.mxu0 0.0
    %2933 = vmatpush.msra.mxu0 0.0
    %2934 = vmatpush.msra.mxu0 %v2086
    %2935 = vmatpush.msra.mxu0 %v2085
    %2936 = vmatpush.msra.mxu0 %v2084
    %2937 = vmatpush.msra.mxu0 %v2083
    %2938 = vmatpush.msra.mxu0 %v2082
    %2939 = vmatpush.msra.mxu0 %v2081
    %2940 = vmatpush.msra.mxu0 %v2080
    %2941 = vmatpush.msra.mxu0 %v2079
    %2942 = vmatmul.f32.gmra.mxu0 %v2924
    %v2943 = vpop.f32.mrf.mxu0
    %v2944 = vadd.f32 %v2922, %v2943
    %2945 = vdwg.mxu0
    %v2946 = vadd.f32 %v2896, %v2944
    %v2947 = vld [vmem:[%s3 + $0x26] ss:$0 sm:$0xff]
    %v2948 = vld [vmem:[%s3 + $0x27] ss:$0 sm:$0xff]
    %v2949 = vsel %vm42, %v2946, 0.0
    %2950 = vadd.xlane.f32.xlu0 %v2949
    %v2951 = vpop.xlane.xlu0 %2950
    %v2952 = vmul.f32 %v2951, %v800
    %v2953 = vsub.f32 %v2946, %v2952
    %v2954 = vmul.f32 %v2953, %v2953
    %v2955 = vsel %vm42, %v2954, 0.0
    %2956 = vadd.xlane.f32.xlu0 %v2955
    %v2957 = vpop.xlane.xlu0 %2956
    %v2958 = vmul.f32 %v2957, %v819
    %v2959 = vrsqrt.pop %v2958
    %v2960 = vmul.f32 %v2959, %v2958
    %v2961 = vmul.f32 %v2960, %v2959
    %v2962 = vmul.f32 0.5, %v2961
    %v2963 = vsub.f32 1.5, %v2962
    %v2964 = vmul.f32 %v2959, %v2963
    %v2965 = vmul.f32 %v2958, %v2964
    %vm2966 = vcmp.eq.f32.partialorder %v2958, inf
    %v2967 = vsel %vm2966, %v2958, %v2965
    %vm2968 = vcmp.eq.f32.partialorder %v2958, 0.0
    %v2969 = vand.u32 %v2958, 2147483648
    %v2970 = vsel %vm2968, %v2969, %v2967
    %v2971 = vadd.f32 %v2970, 1e-05
    %v2972 = vrcp.pop %v2971
    %v2973 = vmul.f32 %v2971, %v2972
    %v2974 = vsub.f32 1.0, %v2973
    %v2975 = vmul.f32 %v2972, %v2974
    %v2976 = vadd.f32 %v2972, %v2975
    %vm2977 = vweird.f32 %v2971
    %vm2978 = vweird.f32 %v2972
    %vm2979 = vmor %vm2977, %vm2978
    %v2980 = vsel %vm2979, %v2972, %v2976
    %v2981 = vand.u32 2147483647, %v2971
    %vm2982 = vcmp.eq.f32.partialorder %v2981, 8.507059e+37
    %v2983 = vand.u32 %v2971, 2147483648
    %v2984 = vor.u32 1.1754944e-38, %v2983
    %v2985 = vsel %vm2982, %v2984, %v2980
    %v2986 = vmul.f32 %v2953, %v2985
    %v2987 = vmul.f32 %v2947, %v2986
    %v2988 = vadd.f32 %v2987, %v2948
    %s2989 = scalar_lea.vmem %s1, 4
    %v2990 = vld [vmem:[%s2989] sm:$0x3]
    %v2992 = vrot.slane %v2988, 1
    %2993 = vrot.lane.b32.xlu0 %v2992, 32
    %v2994 = vpop.permute.xlu0 %2993
    %v2996 = vsel %vm42, %v2988, %v2994
    %v2998 = vrot.slane %v2996, 1
    %v3000 = vrot.slane %v2996, 2
    %v3002 = vrot.slane %v2996, 3
    %v3004 = vsel %vm2041, %v2996, %v2998
    %v3005 = vsel %vm2043, %v3004, %v3000
    %v3006 = vsel %vm2045, %v3005, %v3002
    %v3007 = vld [vmem:[%s2 + $0x400] sm:$0xff]
    %v3008 = vld [vmem:[%s2 + $0x408] sm:$0xff]
    %v3009 = vld [vmem:[%s2 + $0x410] sm:$0xff]
    %v3010 = vld [vmem:[%s2 + $0x418] sm:$0xff]
    %v3011 = vld [vmem:[%s2 + $0x420] sm:$0xff]
    %v3012 = vld [vmem:[%s2 + $0x428] sm:$0xff]
    %v3013 = vld [vmem:[%s2 + $0x430] sm:$0xff]
    %v3014 = vld [vmem:[%s2 + $0x438] sm:$0xff]
    %v3015 = vld [vmem:[%s2 + $0x440] sm:$0xff]
    %v3016 = vld [vmem:[%s2 + $0x448] sm:$0xff]
    %v3017 = vld [vmem:[%s2 + $0x450] sm:$0xff]
    %v3018 = vld [vmem:[%s2 + $0x458] sm:$0xff]
    %v3019 = vld [vmem:[%s2 + $0x460] sm:$0xff]
    %v3020 = vld [vmem:[%s2 + $0x468] sm:$0xff]
    %v3021 = vld [vmem:[%s2 + $0x470] sm:$0xff]
    %v3022 = vld [vmem:[%s2 + $0x478] sm:$0xff]
    %v3023 = vld [vmem:[%s2 + $0x480] sm:$0xff]
    %v3024 = vld [vmem:[%s2 + $0x490] sm:$0xff]
    %v3025 = vld [vmem:[%s2 + $0x4a0] sm:$0xff]
    %v3026 = vld [vmem:[%s2 + $0x4b0] sm:$0xff]
    %v3027 = vld [vmem:[%s2 + $0x4c0] sm:$0xff]
    %v3028 = vld [vmem:[%s2 + $0x4d0] sm:$0xff]
    %v3029 = vld [vmem:[%s2 + $0x4e0] sm:$0xff]
    %v3030 = vld [vmem:[%s2 + $0x4f0] sm:$0xff]
    %v3031 = vld [vmem:[%s2 + $0x500] sm:$0xff]
    %v3032 = vld [vmem:[%s2 + $0x510] sm:$0xff]
    %v3033 = vld [vmem:[%s2 + $0x520] sm:$0xff]
    %v3034 = vld [vmem:[%s2 + $0x530] sm:$0xff]
    %v3035 = vld [vmem:[%s2 + $0x540] sm:$0xff]
    %v3036 = vld [vmem:[%s2 + $0x550] sm:$0xff]
    %v3037 = vld [vmem:[%s2 + $0x560] sm:$0xff]
    %v3038 = vld [vmem:[%s2 + $0x570] sm:$0xff]
    %s3039 = scalar_lea.vmem %s3, 48
    %v3040 = vld [vmem:[%s3039] ss:$8 sm:$0x3]
    %v3042 = vperm.slane %v3040, 0
    %v3043 = vperm.slane %v3040, 1
    %v3047 = vsel %vm915, %v3006, 0
    %3049 = vmatpush.msra.mxu0 0.0
    %3050 = vmatpush.msra.mxu0 0.0
    %3051 = vmatpush.msra.mxu0 0.0
    %3052 = vmatpush.msra.mxu0 0.0
    %3053 = vmatpush.msra.mxu0 0.0
    %3054 = vmatpush.msra.mxu0 0.0
    %3055 = vmatpush.msra.mxu0 0.0
    %3056 = vmatpush.msra.mxu0 0.0
    %3057 = vmatpush.msra.mxu0 %v3021
    %3058 = vmatpush.msra.mxu0 %v3019
    %3059 = vmatpush.msra.mxu0 %v3017
    %3060 = vmatpush.msra.mxu0 %v3015
    %3061 = vmatpush.msra.mxu0 %v3013
    %3062 = vmatpush.msra.mxu0 %v3011
    %3063 = vmatpush.msra.mxu0 %v3009
    %3064 = vmatpush.msra.mxu0 %v3007
    %3065 = vmatmul.f32.gmra.mxu0 %v3047
    %v3066 = vpop.f32.mrf.mxu0
    %v3067 = vadd.f32 %v3042, %v3066
    %3068 = vdwg.mxu0
    %3069 = vmatpush.msra.mxu0 0.0
    %3070 = vmatpush.msra.mxu0 0.0
    %3071 = vmatpush.msra.mxu0 0.0
    %3072 = vmatpush.msra.mxu0 0.0
    %3073 = vmatpush.msra.mxu0 0.0
    %3074 = vmatpush.msra.mxu0 0.0
    %3075 = vmatpush.msra.mxu0 0.0
    %3076 = vmatpush.msra.mxu0 0.0
    %3077 = vmatpush.msra.mxu0 %v3022
    %3078 = vmatpush.msra.mxu0 %v3020
    %3079 = vmatpush.msra.mxu0 %v3018
    %3080 = vmatpush.msra.mxu0 %v3016
    %3081 = vmatpush.msra.mxu0 %v3014
    %3082 = vmatpush.msra.mxu0 %v3012
    %3083 = vmatpush.msra.mxu0 %v3010
    %3084 = vmatpush.msra.mxu0 %v3008
    %3085 = vmatmul.f32.gmra.mxu0 %v3047
    %v3086 = vpop.f32.mrf.mxu0
    %v3087 = vadd.f32 %v3043, %v3086
    %3088 = vdwg.mxu0
    %3089 = vst [vmem:[#allocation2] sm:$0xf] %v3067
    %vm3090 = vcmask 257024
    %3091 = vst.msk [vmem:[#allocation2 + $0x8] sm:$0xf] %vm3090, %v3087
    %vm3092 = vcmp.gt.f32.partialorder %v2990, 0.0
    %v3093 = vld [vmem:[#allocation2] sm:$0x3]
    %v3094 = vld [vmem:[#allocation2 + $0x8] sm:$0x3]
    %3096 = vrot.lane.b32.xlu0 %v3093, 64
    %v3097 = vpop.permute.xlu0 %3096
    %v3098 = vsel %vm413, %v3093, 0
    %v3100 = vsel %vm413, %v3097, 0
    %3102 = vmatpush.xpose.msra.mxu0 0.0
    %3103 = vmatpush.xpose.msra.mxu0 0.0
    %3104 = vmatpush.xpose.msra.mxu0 0.0
    %3105 = vmatpush.xpose.msra.mxu0 0.0
    %3106 = vmatpush.xpose.msra.mxu0 0.0
    %3107 = vmatpush.xpose.msra.mxu0 0.0
    %3108 = vmatpush.xpose.msra.mxu0 0.0
    %3109 = vmatpush.xpose.msra.mxu0 0.0
    %3110 = vmatpush.xpose.msra.mxu0 0.0
    %3111 = vmatpush.xpose.msra.mxu0 0.0
    %3112 = vmatpush.xpose.msra.mxu0 0.0
    %3113 = vmatpush.xpose.msra.mxu0 0.0
    %3114 = vmatpush.xpose.msra.mxu0 0.0
    %3115 = vmatpush.xpose.msra.mxu0 0.0
    %3116 = vmatpush.xpose.msra.mxu0 0.0
    %3117 = vmatpush.xpose.msra.mxu0 %v3100
    %3118 = vmatmul.f32.gmra.mxu0 %v3098
    %v3119 = vpop.f32.mrf.mxu0
    %v3120 = vadd.f32 0.0, %v3119
    %3121 = vdwg.mxu0
    %v3122 = vmul.f32 %v3120, 0.25
    %v3123 = vsel %vm3092, 1, 0
    %v3124 = vperm.slane %v3123, 0
    %vm3125 = vcmp.eq.s32.totalorder %v3124, 1
    %v3126 = vsel %vm3125, %v3122, -1e+09
    %vm3127 = vcmask 9216
    %v3128 = vsel %vm3127, %v3126, -inf
    %3129 = vmax.xlane.f32.xlu0 %v3128
    %v3130 = vpop.xlane.xlu0 %3129
    %v3131 = vsub.f32 %v3126, %v3130
    %v3132 = vmul.f32 %v3131, 1.442695
    %v3133 = vpow.pop %v3132
    %v3134 = vsel %vm3127, %v3133, 0.0
    %3135 = vadd.xlane.f32.xlu0 %v3134
    %v3136 = vpop.xlane.xlu0 %3135
    %v3137 = vrcp.pop %v3136
    %v3138 = vmul.f32 %v3136, %v3137
    %v3139 = vsub.f32 1.0, %v3138
    %v3140 = vmul.f32 %v3137, %v3139
    %v3141 = vadd.f32 %v3137, %v3140
    %vm3142 = vweird.f32 %v3136
    %vm3143 = vweird.f32 %v3137
    %vm3144 = vmor %vm3142, %vm3143
    %v3145 = vsel %vm3144, %v3137, %v3141
    %v3146 = vand.u32 2147483647, %v3136
    %vm3147 = vcmp.eq.f32.partialorder %v3146, 8.507059e+37
    %v3148 = vand.u32 %v3136, 2147483648
    %v3149 = vor.u32 1.1754944e-38, %v3148
    %v3150 = vsel %vm3147, %v3149, %v3145
    %v3151 = vmul.f32 %v3133, %v3150
    %vm3152 = vcmask 15360
    %v3154 = vsel %vm3152, %v3151, 0
    %v3157 = vsel %vm2043, %v3094, 0
    %3159 = vmatpush.msra.mxu0 0.0
    %3160 = vmatpush.msra.mxu0 0.0
    %3161 = vmatpush.msra.mxu0 0.0
    %3162 = vmatpush.msra.mxu0 0.0
    %3163 = vmatpush.msra.mxu0 0.0
    %3164 = vmatpush.msra.mxu0 0.0
    %3165 = vmatpush.msra.mxu0 0.0
    %3166 = vmatpush.msra.mxu0 0.0
    %3167 = vmatpush.msra.mxu0 0.0
    %3168 = vmatpush.msra.mxu0 0.0
    %3169 = vmatpush.msra.mxu0 0.0
    %3170 = vmatpush.msra.mxu0 0.0
    %3171 = vmatpush.msra.mxu0 0.0
    %3172 = vmatpush.msra.mxu0 0.0
    %3173 = vmatpush.msra.mxu0 0.0
    %3174 = vmatpush.msra.mxu0 %v3157
    %3175 = vmatmul.f32.gmra.mxu0 %v3154
    %v3176 = vpop.f32.mrf.mxu0
    %v3177 = vadd.f32 0.0, %v3176
    %3178 = vdwg.mxu0
    %3179 = vrot.lane.b32.xlu0 %v3093, 112
    %v3180 = vpop.permute.xlu0 %3179
    %3181 = vrot.lane.b32.xlu0 %v3093, 48
    %v3182 = vpop.permute.xlu0 %3181
    %v3183 = vsel %vm413, %v3180, 0
    %v3185 = vsel %vm413, %v3182, 0
    %3187 = vmatpush.xpose.msra.mxu0 0.0
    %3188 = vmatpush.xpose.msra.mxu0 0.0
    %3189 = vmatpush.xpose.msra.mxu0 0.0
    %3190 = vmatpush.xpose.msra.mxu0 0.0
    %3191 = vmatpush.xpose.msra.mxu0 0.0
    %3192 = vmatpush.xpose.msra.mxu0 0.0
    %3193 = vmatpush.xpose.msra.mxu0 0.0
    %3194 = vmatpush.xpose.msra.mxu0 0.0
    %3195 = vmatpush.xpose.msra.mxu0 0.0
    %3196 = vmatpush.xpose.msra.mxu0 0.0
    %3197 = vmatpush.xpose.msra.mxu0 0.0
    %3198 = vmatpush.xpose.msra.mxu0 0.0
    %3199 = vmatpush.xpose.msra.mxu0 0.0
    %3200 = vmatpush.xpose.msra.mxu0 0.0
    %3201 = vmatpush.xpose.msra.mxu0 0.0
    %3202 = vmatpush.xpose.msra.mxu0 %v3185
    %3203 = vmatmul.f32.gmra.mxu0 %v3183
    %v3204 = vpop.f32.mrf.mxu0
    %v3205 = vadd.f32 0.0, %v3204
    %3206 = vdwg.mxu0
    %v3207 = vmul.f32 %v3205, 0.25
    %v3208 = vsel %vm3125, %v3207, -1e+09
    %v3209 = vsel %vm3127, %v3208, -inf
    %3210 = vmax.xlane.f32.xlu0 %v3209
    %v3211 = vpop.xlane.xlu0 %3210
    %v3212 = vsub.f32 %v3208, %v3211
    %v3213 = vmul.f32 %v3212, 1.442695
    %v3214 = vpow.pop %v3213
    %v3215 = vsel %vm3127, %v3214, 0.0
    %3216 = vadd.xlane.f32.xlu0 %v3215
    %v3217 = vpop.xlane.xlu0 %3216
    %v3218 = vrcp.pop %v3217
    %v3219 = vmul.f32 %v3217, %v3218
    %v3220 = vsub.f32 1.0, %v3219
    %v3221 = vmul.f32 %v3218, %v3220
    %v3222 = vadd.f32 %v3218, %v3221
    %vm3223 = vweird.f32 %v3217
    %vm3224 = vweird.f32 %v3218
    %vm3225 = vmor %vm3223, %vm3224
    %v3226 = vsel %vm3225, %v3218, %v3222
    %v3227 = vand.u32 2147483647, %v3217
    %vm3228 = vcmp.eq.f32.partialorder %v3227, 8.507059e+37
    %v3229 = vand.u32 %v3217, 2147483648
    %v3230 = vor.u32 1.1754944e-38, %v3229
    %v3231 = vsel %vm3228, %v3230, %v3226
    %v3232 = vmul.f32 %v3214, %v3231
    %3233 = vrot.lane.b32.xlu0 %v3094, 120
    %v3234 = vpop.permute.xlu0 %3233
    %v3236 = vsel %vm3152, %v3232, 0
    %v3238 = vsel %vm2043, %v3234, 0
    %3240 = vmatpush.msra.mxu0 0.0
    %3241 = vmatpush.msra.mxu0 0.0
    %3242 = vmatpush.msra.mxu0 0.0
    %3243 = vmatpush.msra.mxu0 0.0
    %3244 = vmatpush.msra.mxu0 0.0
    %3245 = vmatpush.msra.mxu0 0.0
    %3246 = vmatpush.msra.mxu0 0.0
    %3247 = vmatpush.msra.mxu0 0.0
    %3248 = vmatpush.msra.mxu0 0.0
    %3249 = vmatpush.msra.mxu0 0.0
    %3250 = vmatpush.msra.mxu0 0.0
    %3251 = vmatpush.msra.mxu0 0.0
    %3252 = vmatpush.msra.mxu0 0.0
    %3253 = vmatpush.msra.mxu0 0.0
    %3254 = vmatpush.msra.mxu0 0.0
    %3255 = vmatpush.msra.mxu0 %v3238
    %3256 = vmatmul.f32.gmra.mxu0 %v3236
    %v3257 = vpop.f32.mrf.mxu0
    %v3258 = vadd.f32 0.0, %v3257
    %3259 = vdwg.mxu0
    %3260 = vrot.lane.b32.xlu0 %v3093, 96
    %v3261 = vpop.permute.xlu0 %3260
    %3262 = vrot.lane.b32.xlu0 %v3093, 32
    %v3263 = vpop.permute.xlu0 %3262
    %v3264 = vsel %vm413, %v3261, 0
    %v3266 = vsel %vm413, %v3263, 0
    %3268 = vmatpush.xpose.msra.mxu0 0.0
    %3269 = vmatpush.xpose.msra.mxu0 0.0
    %3270 = vmatpush.xpose.msra.mxu0 0.0
    %3271 = vmatpush.xpose.msra.mxu0 0.0
    %3272 = vmatpush.xpose.msra.mxu0 0.0
    %3273 = vmatpush.xpose.msra.mxu0 0.0
    %3274 = vmatpush.xpose.msra.mxu0 0.0
    %3275 = vmatpush.xpose.msra.mxu0 0.0
    %3276 = vmatpush.xpose.msra.mxu0 0.0
    %3277 = vmatpush.xpose.msra.mxu0 0.0
    %3278 = vmatpush.xpose.msra.mxu0 0.0
    %3279 = vmatpush.xpose.msra.mxu0 0.0
    %3280 = vmatpush.xpose.msra.mxu0 0.0
    %3281 = vmatpush.xpose.msra.mxu0 0.0
    %3282 = vmatpush.xpose.msra.mxu0 0.0
    %3283 = vmatpush.xpose.msra.mxu0 %v3266
    %3284 = vmatmul.f32.gmra.mxu0 %v3264
    %v3285 = vpop.f32.mrf.mxu0
    %v3286 = vadd.f32 0.0, %v3285
    %3287 = vdwg.mxu0
    %v3288 = vmul.f32 %v3286, 0.25
    %v3289 = vsel %vm3125, %v3288, -1e+09
    %v3290 = vsel %vm3127, %v3289, -inf
    %3291 = vmax.xlane.f32.xlu0 %v3290
    %v3292 = vpop.xlane.xlu0 %3291
    %v3293 = vsub.f32 %v3289, %v3292
    %v3294 = vmul.f32 %v3293, 1.442695
    %v3295 = vpow.pop %v3294
    %v3296 = vsel %vm3127, %v3295, 0.0
    %3297 = vadd.xlane.f32.xlu0 %v3296
    %v3298 = vpop.xlane.xlu0 %3297
    %v3299 = vrcp.pop %v3298
    %v3300 = vmul.f32 %v3298, %v3299
    %v3301 = vsub.f32 1.0, %v3300
    %v3302 = vmul.f32 %v3299, %v3301
    %v3303 = vadd.f32 %v3299, %v3302
    %vm3304 = vweird.f32 %v3298
    %vm3305 = vweird.f32 %v3299
    %vm3306 = vmor %vm3304, %vm3305
    %v3307 = vsel %vm3306, %v3299, %v3303
    %v3308 = vand.u32 2147483647, %v3298
    %vm3309 = vcmp.eq.f32.partialorder %v3308, 8.507059e+37
    %v3310 = vand.u32 %v3298, 2147483648
    %v3311 = vor.u32 1.1754944e-38, %v3310
    %v3312 = vsel %vm3309, %v3311, %v3307
    %v3313 = vmul.f32 %v3295, %v3312
    %3314 = vrot.lane.b32.xlu0 %v3094, 112
    %v3315 = vpop.permute.xlu0 %3314
    %v3317 = vsel %vm3152, %v3313, 0
    %v3319 = vsel %vm2043, %v3315, 0
    %3321 = vmatpush.msra.mxu0 0.0
    %3322 = vmatpush.msra.mxu0 0.0
    %3323 = vmatpush.msra.mxu0 0.0
    %3324 = vmatpush.msra.mxu0 0.0
    %3325 = vmatpush.msra.mxu0 0.0
    %3326 = vmatpush.msra.mxu0 0.0
    %3327 = vmatpush.msra.mxu0 0.0
    %3328 = vmatpush.msra.mxu0 0.0
    %3329 = vmatpush.msra.mxu0 0.0
    %3330 = vmatpush.msra.mxu0 0.0
    %3331 = vmatpush.msra.mxu0 0.0
    %3332 = vmatpush.msra.mxu0 0.0
    %3333 = vmatpush.msra.mxu0 0.0
    %3334 = vmatpush.msra.mxu0 0.0
    %3335 = vmatpush.msra.mxu0 0.0
    %3336 = vmatpush.msra.mxu0 %v3319
    %3337 = vmatmul.f32.gmra.mxu0 %v3317
    %v3338 = vpop.f32.mrf.mxu0
    %v3339 = vadd.f32 0.0, %v3338
    %3340 = vdwg.mxu0
    %3341 = vrot.lane.b32.xlu0 %v3093, 80
    %v3342 = vpop.permute.xlu0 %3341
    %3343 = vrot.lane.b32.xlu0 %v3093, 16
    %v3344 = vpop.permute.xlu0 %3343
    %v3345 = vsel %vm413, %v3342, 0
    %v3347 = vsel %vm413, %v3344, 0
    %3349 = vmatpush.xpose.msra.mxu0 0.0
    %3350 = vmatpush.xpose.msra.mxu0 0.0
    %3351 = vmatpush.xpose.msra.mxu0 0.0
    %3352 = vmatpush.xpose.msra.mxu0 0.0
    %3353 = vmatpush.xpose.msra.mxu0 0.0
    %3354 = vmatpush.xpose.msra.mxu0 0.0
    %3355 = vmatpush.xpose.msra.mxu0 0.0
    %3356 = vmatpush.xpose.msra.mxu0 0.0
    %3357 = vmatpush.xpose.msra.mxu0 0.0
    %3358 = vmatpush.xpose.msra.mxu0 0.0
    %3359 = vmatpush.xpose.msra.mxu0 0.0
    %3360 = vmatpush.xpose.msra.mxu0 0.0
    %3361 = vmatpush.xpose.msra.mxu0 0.0
    %3362 = vmatpush.xpose.msra.mxu0 0.0
    %3363 = vmatpush.xpose.msra.mxu0 0.0
    %3364 = vmatpush.xpose.msra.mxu0 %v3347
    %3365 = vmatmul.f32.gmra.mxu0 %v3345
    %v3366 = vpop.f32.mrf.mxu0
    %v3367 = vadd.f32 0.0, %v3366
    %3368 = vdwg.mxu0
    %v3369 = vmul.f32 %v3367, 0.25
    %v3370 = vsel %vm3125, %v3369, -1e+09
    %v3371 = vsel %vm3127, %v3370, -inf
    %3372 = vmax.xlane.f32.xlu0 %v3371
    %v3373 = vpop.xlane.xlu0 %3372
    %v3374 = vsub.f32 %v3370, %v3373
    %v3375 = vmul.f32 %v3374, 1.442695
    %v3376 = vpow.pop %v3375
    %v3377 = vsel %vm3127, %v3376, 0.0
    %3378 = vadd.xlane.f32.xlu0 %v3377
    %v3379 = vpop.xlane.xlu0 %3378
    %v3380 = vrcp.pop %v3379
    %v3381 = vmul.f32 %v3379, %v3380
    %v3382 = vsub.f32 1.0, %v3381
    %v3383 = vmul.f32 %v3380, %v3382
    %v3384 = vadd.f32 %v3380, %v3383
    %vm3385 = vweird.f32 %v3379
    %vm3386 = vweird.f32 %v3380
    %vm3387 = vmor %vm3385, %vm3386
    %v3388 = vsel %vm3387, %v3380, %v3384
    %v3389 = vand.u32 2147483647, %v3379
    %vm3390 = vcmp.eq.f32.partialorder %v3389, 8.507059e+37
    %v3391 = vand.u32 %v3379, 2147483648
    %v3392 = vor.u32 1.1754944e-38, %v3391
    %v3393 = vsel %vm3390, %v3392, %v3388
    %v3394 = vmul.f32 %v3376, %v3393
    %3395 = vrot.lane.b32.xlu0 %v3094, 104
    %v3396 = vpop.permute.xlu0 %3395
    %v3398 = vsel %vm3152, %v3394, 0
    %v3400 = vsel %vm2043, %v3396, 0
    %3402 = vmatpush.msra.mxu0 0.0
    %3403 = vmatpush.msra.mxu0 0.0
    %3404 = vmatpush.msra.mxu0 0.0
    %3405 = vmatpush.msra.mxu0 0.0
    %3406 = vmatpush.msra.mxu0 0.0
    %3407 = vmatpush.msra.mxu0 0.0
    %3408 = vmatpush.msra.mxu0 0.0
    %3409 = vmatpush.msra.mxu0 0.0
    %3410 = vmatpush.msra.mxu0 0.0
    %3411 = vmatpush.msra.mxu0 0.0
    %3412 = vmatpush.msra.mxu0 0.0
    %3413 = vmatpush.msra.mxu0 0.0
    %3414 = vmatpush.msra.mxu0 0.0
    %3415 = vmatpush.msra.mxu0 0.0
    %3416 = vmatpush.msra.mxu0 0.0
    %3417 = vmatpush.msra.mxu0 %v3400
    %3418 = vmatmul.f32.gmra.mxu0 %v3398
    %v3419 = vpop.f32.mrf.mxu0
    %v3420 = vadd.f32 0.0, %v3419
    %3421 = vdwg.mxu0
    %3423 = vrot.lane.b32.xlu0 %v3258, 8
    %v3424 = vpop.permute.xlu0 %3423
    %3427 = vrot.lane.b32.xlu0 %v3339, 16
    %v3428 = vpop.permute.xlu0 %3427
    %3431 = vrot.lane.b32.xlu0 %v3420, 24
    %v3432 = vpop.permute.xlu0 %3431
    %v3434 = vsel %vm80, %v3177, %v3424
    %v3435 = vsel %vm413, %v3434, %v3428
    %v3436 = vsel %vm415, %v3435, %v3432
    %v3437 = vld [vmem:[#allocation2] sm:$0xc]
    %v3438 = vld [vmem:[#allocation2 + $0x8] sm:$0xc]
    %v3440 = vrot.slane %v3437, 2
    %3441 = vrot.lane.b32.xlu0 %v3440, 64
    %v3442 = vpop.permute.xlu0 %3441
    %v3443 = vsel %vm413, %v3440, 0
    %v3445 = vsel %vm413, %v3442, 0
    %3447 = vmatpush.xpose.msra.mxu0 0.0
    %3448 = vmatpush.xpose.msra.mxu0 0.0
    %3449 = vmatpush.xpose.msra.mxu0 0.0
    %3450 = vmatpush.xpose.msra.mxu0 0.0
    %3451 = vmatpush.xpose.msra.mxu0 0.0
    %3452 = vmatpush.xpose.msra.mxu0 0.0
    %3453 = vmatpush.xpose.msra.mxu0 0.0
    %3454 = vmatpush.xpose.msra.mxu0 0.0
    %3455 = vmatpush.xpose.msra.mxu0 0.0
    %3456 = vmatpush.xpose.msra.mxu0 0.0
    %3457 = vmatpush.xpose.msra.mxu0 0.0
    %3458 = vmatpush.xpose.msra.mxu0 0.0
    %3459 = vmatpush.xpose.msra.mxu0 0.0
    %3460 = vmatpush.xpose.msra.mxu0 0.0
    %3461 = vmatpush.xpose.msra.mxu0 0.0
    %3462 = vmatpush.xpose.msra.mxu0 %v3445
    %3463 = vmatmul.f32.gmra.mxu0 %v3443
    %v3464 = vpop.f32.mrf.mxu0
    %v3465 = vadd.f32 0.0, %v3464
    %3466 = vdwg.mxu0
    %v3467 = vmul.f32 %v3465, 0.25
    %v3468 = vperm.slane %v3123, 1
    %vm3469 = vcmp.eq.s32.totalorder %v3468, 1
    %v3470 = vsel %vm3469, %v3467, -1e+09
    %v3471 = vsel %vm3127, %v3470, -inf
    %3472 = vmax.xlane.f32.xlu0 %v3471
    %v3473 = vpop.xlane.xlu0 %3472
    %v3474 = vsub.f32 %v3470, %v3473
    %v3475 = vmul.f32 %v3474, 1.442695
    %v3476 = vpow.pop %v3475
    %v3477 = vsel %vm3127, %v3476, 0.0
    %3478 = vadd.xlane.f32.xlu0 %v3477
    %v3479 = vpop.xlane.xlu0 %3478
    %v3480 = vrcp.pop %v3479
    %v3481 = vmul.f32 %v3479, %v3480
    %v3482 = vsub.f32 1.0, %v3481
    %v3483 = vmul.f32 %v3480, %v3482
    %v3484 = vadd.f32 %v3480, %v3483
    %vm3485 = vweird.f32 %v3479
    %vm3486 = vweird.f32 %v3480
    %vm3487 = vmor %vm3485, %vm3486
    %v3488 = vsel %vm3487, %v3480, %v3484
    %v3489 = vand.u32 2147483647, %v3479
    %vm3490 = vcmp.eq.f32.partialorder %v3489, 8.507059e+37
    %v3491 = vand.u32 %v3479, 2147483648
    %v3492 = vor.u32 1.1754944e-38, %v3491
    %v3493 = vsel %vm3490, %v3492, %v3488
    %v3494 = vmul.f32 %v3476, %v3493
    %v3496 = vrot.slane %v3438, 2
    %v3498 = vsel %vm3152, %v3494, 0
    %v3500 = vsel %vm2043, %v3496, 0
    %3502 = vmatpush.msra.mxu0 0.0
    %3503 = vmatpush.msra.mxu0 0.0
    %3504 = vmatpush.msra.mxu0 0.0
    %3505 = vmatpush.msra.mxu0 0.0
    %3506 = vmatpush.msra.mxu0 0.0
    %3507 = vmatpush.msra.mxu0 0.0
    %3508 = vmatpush.msra.mxu0 0.0
    %3509 = vmatpush.msra.mxu0 0.0
    %3510 = vmatpush.msra.mxu0 0.0
    %3511 = vmatpush.msra.mxu0 0.0
    %3512 = vmatpush.msra.mxu0 0.0
    %3513 = vmatpush.msra.mxu0 0.0
    %3514 = vmatpush.msra.mxu0 0.0
    %3515 = vmatpush.msra.mxu0 0.0
    %3516 = vmatpush.msra.mxu0 0.0
    %3517 = vmatpush.msra.mxu0 %v3500
    %3518 = vmatmul.f32.gmra.mxu0 %v3498
    %v3519 = vpop.f32.mrf.mxu0
    %v3520 = vadd.f32 0.0, %v3519
    %3521 = vdwg.mxu0
    %3522 = vrot.lane.b32.xlu0 %v3440, 112
    %v3523 = vpop.permute.xlu0 %3522
    %3524 = vrot.lane.b32.xlu0 %v3440, 48
    %v3525 = vpop.permute.xlu0 %3524
    %v3526 = vsel %vm413, %v3523, 0
    %v3528 = vsel %vm413, %v3525, 0
    %3530 = vmatpush.xpose.msra.mxu0 0.0
    %3531 = vmatpush.xpose.msra.mxu0 0.0
    %3532 = vmatpush.xpose.msra.mxu0 0.0
    %3533 = vmatpush.xpose.msra.mxu0 0.0
    %3534 = vmatpush.xpose.msra.mxu0 0.0
    %3535 = vmatpush.xpose.msra.mxu0 0.0
    %3536 = vmatpush.xpose.msra.mxu0 0.0
    %3537 = vmatpush.xpose.msra.mxu0 0.0
    %3538 = vmatpush.xpose.msra.mxu0 0.0
    %3539 = vmatpush.xpose.msra.mxu0 0.0
    %3540 = vmatpush.xpose.msra.mxu0 0.0
    %3541 = vmatpush.xpose.msra.mxu0 0.0
    %3542 = vmatpush.xpose.msra.mxu0 0.0
    %3543 = vmatpush.xpose.msra.mxu0 0.0
    %3544 = vmatpush.xpose.msra.mxu0 0.0
    %3545 = vmatpush.xpose.msra.mxu0 %v3528
    %3546 = vmatmul.f32.gmra.mxu0 %v3526
    %v3547 = vpop.f32.mrf.mxu0
    %v3548 = vadd.f32 0.0, %v3547
    %3549 = vdwg.mxu0
    %v3550 = vmul.f32 %v3548, 0.25
    %v3551 = vsel %vm3469, %v3550, -1e+09
    %v3552 = vsel %vm3127, %v3551, -inf
    %3553 = vmax.xlane.f32.xlu0 %v3552
    %v3554 = vpop.xlane.xlu0 %3553
    %v3555 = vsub.f32 %v3551, %v3554
    %v3556 = vmul.f32 %v3555, 1.442695
    %v3557 = vpow.pop %v3556
    %v3558 = vsel %vm3127, %v3557, 0.0
    %3559 = vadd.xlane.f32.xlu0 %v3558
    %v3560 = vpop.xlane.xlu0 %3559
    %v3561 = vrcp.pop %v3560
    %v3562 = vmul.f32 %v3560, %v3561
    %v3563 = vsub.f32 1.0, %v3562
    %v3564 = vmul.f32 %v3561, %v3563
    %v3565 = vadd.f32 %v3561, %v3564
    %vm3566 = vweird.f32 %v3560
    %vm3567 = vweird.f32 %v3561
    %vm3568 = vmor %vm3566, %vm3567
    %v3569 = vsel %vm3568, %v3561, %v3565
    %v3570 = vand.u32 2147483647, %v3560
    %vm3571 = vcmp.eq.f32.partialorder %v3570, 8.507059e+37
    %v3572 = vand.u32 %v3560, 2147483648
    %v3573 = vor.u32 1.1754944e-38, %v3572
    %v3574 = vsel %vm3571, %v3573, %v3569
    %v3575 = vmul.f32 %v3557, %v3574
    %3576 = vrot.lane.b32.xlu0 %v3496, 120
    %v3577 = vpop.permute.xlu0 %3576
    %v3579 = vsel %vm3152, %v3575, 0
    %v3581 = vsel %vm2043, %v3577, 0
    %3583 = vmatpush.msra.mxu0 0.0
    %3584 = vmatpush.msra.mxu0 0.0
    %3585 = vmatpush.msra.mxu0 0.0
    %3586 = vmatpush.msra.mxu0 0.0
    %3587 = vmatpush.msra.mxu0 0.0
    %3588 = vmatpush.msra.mxu0 0.0
    %3589 = vmatpush.msra.mxu0 0.0
    %3590 = vmatpush.msra.mxu0 0.0
    %3591 = vmatpush.msra.mxu0 0.0
    %3592 = vmatpush.msra.mxu0 0.0
    %3593 = vmatpush.msra.mxu0 0.0
    %3594 = vmatpush.msra.mxu0 0.0
    %3595 = vmatpush.msra.mxu0 0.0
    %3596 = vmatpush.msra.mxu0 0.0
    %3597 = vmatpush.msra.mxu0 0.0
    %3598 = vmatpush.msra.mxu0 %v3581
    %3599 = vmatmul.f32.gmra.mxu0 %v3579
    %v3600 = vpop.f32.mrf.mxu0
    %v3601 = vadd.f32 0.0, %v3600
    %3602 = vdwg.mxu0
    %3603 = vrot.lane.b32.xlu0 %v3440, 96
    %v3604 = vpop.permute.xlu0 %3603
    %3605 = vrot.lane.b32.xlu0 %v3440, 32
    %v3606 = vpop.permute.xlu0 %3605
    %v3607 = vsel %vm413, %v3604, 0
    %v3609 = vsel %vm413, %v3606, 0
    %3611 = vmatpush.xpose.msra.mxu0 0.0
    %3612 = vmatpush.xpose.msra.mxu0 0.0
    %3613 = vmatpush.xpose.msra.mxu0 0.0
    %3614 = vmatpush.xpose.msra.mxu0 0.0
    %3615 = vmatpush.xpose.msra.mxu0 0.0
    %3616 = vmatpush.xpose.msra.mxu0 0.0
    %3617 = vmatpush.xpose.msra.mxu0 0.0
    %3618 = vmatpush.xpose.msra.mxu0 0.0
    %3619 = vmatpush.xpose.msra.mxu0 0.0
    %3620 = vmatpush.xpose.msra.mxu0 0.0
    %3621 = vmatpush.xpose.msra.mxu0 0.0
    %3622 = vmatpush.xpose.msra.mxu0 0.0
    %3623 = vmatpush.xpose.msra.mxu0 0.0
    %3624 = vmatpush.xpose.msra.mxu0 0.0
    %3625 = vmatpush.xpose.msra.mxu0 0.0
    %3626 = vmatpush.xpose.msra.mxu0 %v3609
    %3627 = vmatmul.f32.gmra.mxu0 %v3607
    %v3628 = vpop.f32.mrf.mxu0
    %v3629 = vadd.f32 0.0, %v3628
    %3630 = vdwg.mxu0
    %v3631 = vmul.f32 %v3629, 0.25
    %v3632 = vsel %vm3469, %v3631, -1e+09
    %v3633 = vsel %vm3127, %v3632, -inf
    %3634 = vmax.xlane.f32.xlu0 %v3633
    %v3635 = vpop.xlane.xlu0 %3634
    %v3636 = vsub.f32 %v3632, %v3635
    %v3637 = vmul.f32 %v3636, 1.442695
    %v3638 = vpow.pop %v3637
    %v3639 = vsel %vm3127, %v3638, 0.0
    %3640 = vadd.xlane.f32.xlu0 %v3639
    %v3641 = vpop.xlane.xlu0 %3640
    %v3642 = vrcp.pop %v3641
    %v3643 = vmul.f32 %v3641, %v3642
    %v3644 = vsub.f32 1.0, %v3643
    %v3645 = vmul.f32 %v3642, %v3644
    %v3646 = vadd.f32 %v3642, %v3645
    %vm3647 = vweird.f32 %v3641
    %vm3648 = vweird.f32 %v3642
    %vm3649 = vmor %vm3647, %vm3648
    %v3650 = vsel %vm3649, %v3642, %v3646
    %v3651 = vand.u32 2147483647, %v3641
    %vm3652 = vcmp.eq.f32.partialorder %v3651, 8.507059e+37
    %v3653 = vand.u32 %v3641, 2147483648
    %v3654 = vor.u32 1.1754944e-38, %v3653
    %v3655 = vsel %vm3652, %v3654, %v3650
    %v3656 = vmul.f32 %v3638, %v3655
    %3657 = vrot.lane.b32.xlu0 %v3496, 112
    %v3658 = vpop.permute.xlu0 %3657
    %v3660 = vsel %vm3152, %v3656, 0
    %v3662 = vsel %vm2043, %v3658, 0
    %3664 = vmatpush.msra.mxu0 0.0
    %3665 = vmatpush.msra.mxu0 0.0
    %3666 = vmatpush.msra.mxu0 0.0
    %3667 = vmatpush.msra.mxu0 0.0
    %3668 = vmatpush.msra.mxu0 0.0
    %3669 = vmatpush.msra.mxu0 0.0
    %3670 = vmatpush.msra.mxu0 0.0
    %3671 = vmatpush.msra.mxu0 0.0
    %3672 = vmatpush.msra.mxu0 0.0
    %3673 = vmatpush.msra.mxu0 0.0
    %3674 = vmatpush.msra.mxu0 0.0
    %3675 = vmatpush.msra.mxu0 0.0
    %3676 = vmatpush.msra.mxu0 0.0
    %3677 = vmatpush.msra.mxu0 0.0
    %3678 = vmatpush.msra.mxu0 0.0
    %3679 = vmatpush.msra.mxu0 %v3662
    %3680 = vmatmul.f32.gmra.mxu0 %v3660
    %v3681 = vpop.f32.mrf.mxu0
    %v3682 = vadd.f32 0.0, %v3681
    %3683 = vdwg.mxu0
    %3684 = vrot.lane.b32.xlu0 %v3440, 80
    %v3685 = vpop.permute.xlu0 %3684
    %3686 = vrot.lane.b32.xlu0 %v3440, 16
    %v3687 = vpop.permute.xlu0 %3686
    %v3688 = vsel %vm413, %v3685, 0
    %v3690 = vsel %vm413, %v3687, 0
    %3692 = vmatpush.xpose.msra.mxu0 0.0
    %3693 = vmatpush.xpose.msra.mxu0 0.0
    %3694 = vmatpush.xpose.msra.mxu0 0.0
    %3695 = vmatpush.xpose.msra.mxu0 0.0
    %3696 = vmatpush.xpose.msra.mxu0 0.0
    %3697 = vmatpush.xpose.msra.mxu0 0.0
    %3698 = vmatpush.xpose.msra.mxu0 0.0
    %3699 = vmatpush.xpose.msra.mxu0 0.0
    %3700 = vmatpush.xpose.msra.mxu0 0.0
    %3701 = vmatpush.xpose.msra.mxu0 0.0
    %3702 = vmatpush.xpose.msra.mxu0 0.0
    %3703 = vmatpush.xpose.msra.mxu0 0.0
    %3704 = vmatpush.xpose.msra.mxu0 0.0
    %3705 = vmatpush.xpose.msra.mxu0 0.0
    %3706 = vmatpush.xpose.msra.mxu0 0.0
    %3707 = vmatpush.xpose.msra.mxu0 %v3690
    %3708 = vmatmul.f32.gmra.mxu0 %v3688
    %v3709 = vpop.f32.mrf.mxu0
    %v3710 = vadd.f32 0.0, %v3709
    %3711 = vdwg.mxu0
    %v3712 = vmul.f32 %v3710, 0.25
    %v3713 = vsel %vm3469, %v3712, -1e+09
    %v3714 = vsel %vm3127, %v3713, -inf
    %3715 = vmax.xlane.f32.xlu0 %v3714
    %v3716 = vpop.xlane.xlu0 %3715
    %v3717 = vsub.f32 %v3713, %v3716
    %v3718 = vmul.f32 %v3717, 1.442695
    %v3719 = vpow.pop %v3718
    %v3720 = vsel %vm3127, %v3719, 0.0
    %3721 = vadd.xlane.f32.xlu0 %v3720
    %v3722 = vpop.xlane.xlu0 %3721
    %v3723 = vrcp.pop %v3722
    %v3724 = vmul.f32 %v3722, %v3723
    %v3725 = vsub.f32 1.0, %v3724
    %v3726 = vmul.f32 %v3723, %v3725
    %v3727 = vadd.f32 %v3723, %v3726
    %vm3728 = vweird.f32 %v3722
    %vm3729 = vweird.f32 %v3723
    %vm3730 = vmor %vm3728, %vm3729
    %v3731 = vsel %vm3730, %v3723, %v3727
    %v3732 = vand.u32 2147483647, %v3722
    %vm3733 = vcmp.eq.f32.partialorder %v3732, 8.507059e+37
    %v3734 = vand.u32 %v3722, 2147483648
    %v3735 = vor.u32 1.1754944e-38, %v3734
    %v3736 = vsel %vm3733, %v3735, %v3731
    %v3737 = vmul.f32 %v3719, %v3736
    %3738 = vrot.lane.b32.xlu0 %v3496, 104
    %v3739 = vpop.permute.xlu0 %3738
    %v3741 = vsel %vm3152, %v3737, 0
    %v3743 = vsel %vm2043, %v3739, 0
    %3745 = vmatpush.msra.mxu0 0.0
    %3746 = vmatpush.msra.mxu0 0.0
    %3747 = vmatpush.msra.mxu0 0.0
    %3748 = vmatpush.msra.mxu0 0.0
    %3749 = vmatpush.msra.mxu0 0.0
    %3750 = vmatpush.msra.mxu0 0.0
    %3751 = vmatpush.msra.mxu0 0.0
    %3752 = vmatpush.msra.mxu0 0.0
    %3753 = vmatpush.msra.mxu0 0.0
    %3754 = vmatpush.msra.mxu0 0.0
    %3755 = vmatpush.msra.mxu0 0.0
    %3756 = vmatpush.msra.mxu0 0.0
    %3757 = vmatpush.msra.mxu0 0.0
    %3758 = vmatpush.msra.mxu0 0.0
    %3759 = vmatpush.msra.mxu0 0.0
    %3760 = vmatpush.msra.mxu0 %v3743
    %3761 = vmatmul.f32.gmra.mxu0 %v3741
    %v3762 = vpop.f32.mrf.mxu0
    %v3763 = vadd.f32 0.0, %v3762
    %3764 = vdwg.mxu0
    %3766 = vrot.lane.b32.xlu0 %v3601, 8
    %v3767 = vpop.permute.xlu0 %3766
    %3770 = vrot.lane.b32.xlu0 %v3682, 16
    %v3771 = vpop.permute.xlu0 %3770
    %3774 = vrot.lane.b32.xlu0 %v3763, 24
    %v3775 = vpop.permute.xlu0 %3774
    %v3777 = vsel %vm80, %v3520, %v3767
    %v3778 = vsel %vm413, %v3777, %v3771
    %v3779 = vsel %vm415, %v3778, %v3775
    %v3781 = vrot.slane %v3779, 6
    %v3783 = vsel %vm2043, %v3436, %v3781
    %v3784 = vld [vmem:[%s3 + $0x31] ss:$0 sm:$0xff]
    %v3786 = vsel %vm42, %v3783, 0
    %3788 = vmatpush.msra.mxu0 0.0
    %3789 = vmatpush.msra.mxu0 0.0
    %3790 = vmatpush.msra.mxu0 0.0
    %3791 = vmatpush.msra.mxu0 0.0
    %3792 = vmatpush.msra.mxu0 0.0
    %3793 = vmatpush.msra.mxu0 0.0
    %3794 = vmatpush.msra.mxu0 0.0
    %3795 = vmatpush.msra.mxu0 0.0
    %3796 = vmatpush.msra.mxu0 0.0
    %3797 = vmatpush.msra.mxu0 0.0
    %3798 = vmatpush.msra.mxu0 0.0
    %3799 = vmatpush.msra.mxu0 0.0
    %3800 = vmatpush.msra.mxu0 %v3026
    %3801 = vmatpush.msra.mxu0 %v3025
    %3802 = vmatpush.msra.mxu0 %v3024
    %3803 = vmatpush.msra.mxu0 %v3023
    %3804 = vmatmul.f32.gmra.mxu0 %v3786
    %v3805 = vpop.f32.mrf.mxu0
    %v3806 = vadd.f32 %v3784, %v3805
    %3807 = vdwg.mxu0
    %v3808 = vld [vmem:[%s3 + $0x32] ss:$0 sm:$0xff]
    %v3809 = vld [vmem:[%s3 + $0x33] ss:$0 sm:$0xff]
    %v3810 = vsel %vm3090, %v3806, 0.0
    %3811 = vadd.xlane.f32.xlu0 %v3810
    %v3812 = vpop.xlane.xlu0 %3811
    %v3813 = vmul.f32 %v3812, %v800
    %v3814 = vsub.f32 %v3806, %v3813
    %v3815 = vmul.f32 %v3814, %v3814
    %v3816 = vsel %vm3090, %v3815, 0.0
    %3817 = vadd.xlane.f32.xlu0 %v3816
    %v3818 = vpop.xlane.xlu0 %3817
    %v3819 = vmul.f32 %v3818, %v819
    %v3820 = vrsqrt.pop %v3819
    %v3821 = vmul.f32 %v3820, %v3819
    %v3822 = vmul.f32 %v3821, %v3820
    %v3823 = vmul.f32 0.5, %v3822
    %v3824 = vsub.f32 1.5, %v3823
    %v3825 = vmul.f32 %v3820, %v3824
    %v3826 = vmul.f32 %v3819, %v3825
    %vm3827 = vcmp.eq.f32.partialorder %v3819, inf
    %v3828 = vsel %vm3827, %v3819, %v3826
    %vm3829 = vcmp.eq.f32.partialorder %v3819, 0.0
    %v3830 = vand.u32 %v3819, 2147483648
    %v3831 = vsel %vm3829, %v3830, %v3828
    %v3832 = vadd.f32 %v3831, 1e-05
    %v3833 = vrcp.pop %v3832
    %v3834 = vmul.f32 %v3832, %v3833
    %v3835 = vsub.f32 1.0, %v3834
    %v3836 = vmul.f32 %v3833, %v3835
    %v3837 = vadd.f32 %v3833, %v3836
    %vm3838 = vweird.f32 %v3832
    %vm3839 = vweird.f32 %v3833
    %vm3840 = vmor %vm3838, %vm3839
    %v3841 = vsel %vm3840, %v3833, %v3837
    %v3842 = vand.u32 2147483647, %v3832
    %vm3843 = vcmp.eq.f32.partialorder %v3842, 8.507059e+37
    %v3844 = vand.u32 %v3832, 2147483648
    %v3845 = vor.u32 1.1754944e-38, %v3844
    %v3846 = vsel %vm3843, %v3845, %v3841
    %v3847 = vmul.f32 %v3814, %v3846
    %v3848 = vmul.f32 %v3808, %v3847
    %v3849 = vadd.f32 %v3848, %v3809
    %v3850 = vld [vmem:[%s3 + $0x34] ss:$0 sm:$0xff]
    %v3852 = vsel %vm42, %v3849, 0
    %3854 = vmatpush.msra.mxu0 0.0
    %3855 = vmatpush.msra.mxu0 0.0
    %3856 = vmatpush.msra.mxu0 0.0
    %3857 = vmatpush.msra.mxu0 0.0
    %3858 = vmatpush.msra.mxu0 0.0
    %3859 = vmatpush.msra.mxu0 0.0
    %3860 = vmatpush.msra.mxu0 0.0
    %3861 = vmatpush.msra.mxu0 0.0
    %3862 = vmatpush.msra.mxu0 0.0
    %3863 = vmatpush.msra.mxu0 0.0
    %3864 = vmatpush.msra.mxu0 0.0
    %3865 = vmatpush.msra.mxu0 0.0
    %3866 = vmatpush.msra.mxu0 %v3030
    %3867 = vmatpush.msra.mxu0 %v3029
    %3868 = vmatpush.msra.mxu0 %v3028
    %3869 = vmatpush.msra.mxu0 %v3027
    %3870 = vmatmul.f32.gmra.mxu0 %v3852
    %v3871 = vpop.f32.mrf.mxu0
    %v3872 = vadd.f32 %v3850, %v3871
    %3873 = vdwg.mxu0
    %v3874 = vmax.f32 %v3872, 0.0
    %v3875 = vld [vmem:[%s3 + $0x35] ss:$0 sm:$0xff]
    %v3877 = vsel %vm915, %v3874, 0
    %3879 = vmatpush.msra.mxu0 0.0
    %3880 = vmatpush.msra.mxu0 0.0
    %3881 = vmatpush.msra.mxu0 0.0
    %3882 = vmatpush.msra.mxu0 0.0
    %3883 = vmatpush.msra.mxu0 0.0
    %3884 = vmatpush.msra.mxu0 0.0
    %3885 = vmatpush.msra.mxu0 0.0
    %3886 = vmatpush.msra.mxu0 0.0
    %3887 = vmatpush.msra.mxu0 %v3038
    %3888 = vmatpush.msra.mxu0 %v3037
    %3889 = vmatpush.msra.mxu0 %v3036
    %3890 = vmatpush.msra.mxu0 %v3035
    %3891 = vmatpush.msra.mxu0 %v3034
    %3892 = vmatpush.msra.mxu0 %v3033
    %3893 = vmatpush.msra.mxu0 %v3032
    %3894 = vmatpush.msra.mxu0 %v3031
    %3895 = vmatmul.f32.gmra.mxu0 %v3877
    %v3896 = vpop.f32.mrf.mxu0
    %v3897 = vadd.f32 %v3875, %v3896
    %3898 = vdwg.mxu0
    %v3899 = vadd.f32 %v3849, %v3897
    %v3900 = vld [vmem:[%s3 + $0x36] ss:$0 sm:$0xff]
    %v3901 = vld [vmem:[%s3 + $0x37] ss:$0 sm:$0xff]
    %v3902 = vsel %vm3090, %v3899, 0.0
    %3903 = vadd.xlane.f32.xlu0 %v3902
    %v3904 = vpop.xlane.xlu0 %3903
    %v3905 = vmul.f32 %v3904, %v800
    %v3906 = vsub.f32 %v3899, %v3905
    %v3907 = vmul.f32 %v3906, %v3906
    %v3908 = vsel %vm3090, %v3907, 0.0
    %3909 = vadd.xlane.f32.xlu0 %v3908
    %v3910 = vpop.xlane.xlu0 %3909
    %v3911 = vmul.f32 %v3910, %v819
    %v3912 = vrsqrt.pop %v3911
    %v3913 = vmul.f32 %v3912, %v3911
    %v3914 = vmul.f32 %v3913, %v3912
    %v3915 = vmul.f32 0.5, %v3914
    %v3916 = vsub.f32 1.5, %v3915
    %v3917 = vmul.f32 %v3912, %v3916
    %v3918 = vmul.f32 %v3911, %v3917
    %vm3919 = vcmp.eq.f32.partialorder %v3911, inf
    %v3920 = vsel %vm3919, %v3911, %v3918
    %vm3921 = vcmp.eq.f32.partialorder %v3911, 0.0
    %v3922 = vand.u32 %v3911, 2147483648
    %v3923 = vsel %vm3921, %v3922, %v3920
    %v3924 = vadd.f32 %v3923, 1e-05
    %v3925 = vrcp.pop %v3924
    %v3926 = vmul.f32 %v3924, %v3925
    %v3927 = vsub.f32 1.0, %v3926
    %v3928 = vmul.f32 %v3925, %v3927
    %v3929 = vadd.f32 %v3925, %v3928
    %vm3930 = vweird.f32 %v3924
    %vm3931 = vweird.f32 %v3925
    %vm3932 = vmor %vm3930, %vm3931
    %v3933 = vsel %vm3932, %v3925, %v3929
    %v3934 = vand.u32 2147483647, %v3924
    %vm3935 = vcmp.eq.f32.partialorder %v3934, 8.507059e+37
    %v3936 = vand.u32 %v3924, 2147483648
    %v3937 = vor.u32 1.1754944e-38, %v3936
    %v3938 = vsel %vm3935, %v3937, %v3933
    %v3939 = vmul.f32 %v3906, %v3938
    %v3940 = vmul.f32 %v3900, %v3939
    %v3941 = vadd.f32 %v3940, %v3901
    %v3942 = vld [vmem:[%s3 + $0x40] ss:$0 sm:$0xff]
    %v3943 = vld [vmem:[%s3 + $0x41] ss:$0 sm:$0xff]
    %v3944 = vsel %vm3090, %v3941, 0.0
    %3945 = vadd.xlane.f32.xlu0 %v3944
    %v3946 = vpop.xlane.xlu0 %3945
    %v3947 = vmul.f32 %v3946, %v800
    %v3948 = vsub.f32 %v3941, %v3947
    %v3949 = vmul.f32 %v3948, %v3948
    %v3950 = vsel %vm3090, %v3949, 0.0
    %3951 = vadd.xlane.f32.xlu0 %v3950
    %v3952 = vpop.xlane.xlu0 %3951
    %v3953 = vmul.f32 %v3952, %v819
    %v3954 = vrsqrt.pop %v3953
    %v3955 = vmul.f32 %v3954, %v3953
    %v3956 = vmul.f32 %v3955, %v3954
    %v3957 = vmul.f32 0.5, %v3956
    %v3958 = vsub.f32 1.5, %v3957
    %v3959 = vmul.f32 %v3954, %v3958
    %v3960 = vmul.f32 %v3953, %v3959
    %vm3961 = vcmp.eq.f32.partialorder %v3953, inf
    %v3962 = vsel %vm3961, %v3953, %v3960
    %vm3963 = vcmp.eq.f32.partialorder %v3953, 0.0
    %v3964 = vand.u32 %v3953, 2147483648
    %v3965 = vsel %vm3963, %v3964, %v3962
    %v3966 = vadd.f32 %v3965, 1e-05
    %v3967 = vrcp.pop %v3966
    %v3968 = vmul.f32 %v3966, %v3967
    %v3969 = vsub.f32 1.0, %v3968
    %v3970 = vmul.f32 %v3967, %v3969
    %v3971 = vadd.f32 %v3967, %v3970
    %vm3972 = vweird.f32 %v3966
    %vm3973 = vweird.f32 %v3967
    %vm3974 = vmor %vm3972, %vm3973
    %v3975 = vsel %vm3974, %v3967, %v3971
    %v3976 = vand.u32 2147483647, %v3966
    %vm3977 = vcmp.eq.f32.partialorder %v3976, 8.507059e+37
    %v3978 = vand.u32 %v3966, 2147483648
    %v3979 = vor.u32 1.1754944e-38, %v3978
    %v3980 = vsel %vm3977, %v3979, %v3975
    %v3981 = vmul.f32 %v3948, %v3980
    %v3982 = vmul.f32 %v3942, %v3981
    %v3983 = vadd.f32 %v3982, %v3943
    %3984 = vst.msk [vmem:[#allocation3] sm:$0xf] %vm3090, %v3983
    // Predicated region
    $region18: #{tpu_custom_call.1} parent=1 // pred_check
      _
    $region19: #{tpu_custom_call.1} parent=1 // pred_check_branch
      %3986 = sbr.rel (0) target = $region21
    $region20: #{tpu_custom_call.1} parent=1 // pred_region
      %3988 = vsyncadd [#allocation4], 0
      %s3990 = sshll.u32 [#allocation3], 4
      %s3991 = int_to_ptr.vmem [resolvable:$true] %s3990
      %s3992 = sshll.u32 %s4, 4
      %s3993 = int_to_ptr.hbm [resolvable:$true] %s3992
      %3995 = dma.vmem_to_hbm [thread:$0]  %s3991, 64, %s3993, [#allocation4]
    $region21: #{tpu_custom_call.1} parent=1 // pred_fallthru
      _
    // Predicated region
    $region22: #{tpu_custom_call.1} parent=1 // pred_check
      _
    $region23: #{tpu_custom_call.1} parent=1 // pred_check_branch
      %3997 = sbr.rel (0) target = $region25
    $region24: #{tpu_custom_call.1} parent=1 // pred_region
      %3999 = dma.done [#allocation4], 64
    $region25: #{tpu_custom_call.1} parent=1 // pred_fallthru
      _
    %4000 = vsyncpa [#allocation4], 1

</llo_original>
